<compile_context>
chip_gen: v6e
topology: v6e:2x2x1
jax: 0.10.0
libtpu: 0.0.40
codegen_flags: <defaults>
</compile_context>

<pallas_src>
import math
from functools import partial

import jax
import jax.numpy as jnp
from jax import lax
from jax.experimental import pallas as pl
from jax.experimental.pallas import tpu as pltpu

# ----------------------------------------------------------------------------
# Config (small shapes, consistent with the module's __init__)
# ----------------------------------------------------------------------------
CFG = dict(
    dec_in=16,          # conv-FFN hidden size passed to FFTBlock
    d_model=32,
    n_heads=4,
    d_state=8,
    d_conv=3,
    d_layers=2,
    c_out=4,
    max_len=64,
)
CFG["d_k"] = CFG["d_v"] = CFG["d_model"] // CFG["n_heads"]
CFG["d_inner"] = 2 * CFG["d_model"]                 # Mamba expand = 2
CFG["dt_rank"] = math.ceil(CFG["d_model"] / 16)


# ----------------------------------------------------------------------------
# In-kernel helpers
# ----------------------------------------------------------------------------
def _mm(a, b):
    """bf16 MXU matmul with f32 accumulation."""
    return jnp.dot(a.astype(jnp.bfloat16), b.astype(jnp.bfloat16),
                   preferred_element_type=jnp.float32)


def _mm_tb(a, b):
    """a @ b.T with bf16 inputs and f32 accumulation."""
    return lax.dot_general(a.astype(jnp.bfloat16), b.astype(jnp.bfloat16),
                           (((1,), (1,)), ((), ())),
                           preferred_element_type=jnp.float32)


def _ln(x, g, b):
    mu = jnp.mean(x, axis=-1, keepdims=True)
    xc = x - mu
    var = jnp.mean(xc * xc, axis=-1, keepdims=True)
    return xc * lax.rsqrt(var + 1e-5) * g + b


def _silu(x):
    return x * jax.nn.sigmoid(x)


def _shift_rows(x, sh):
    """y[t] = x[t + sh] for in-range t, zero otherwise (sh is a static int).

    Implemented with static slices + zero-row concatenation: exact, no masks,
    no pltpu.roll (whose shift must be non-negative)."""
    if sh == 0:
        return x
    L = x.shape[0]
    z = jnp.zeros((abs(sh), x.shape[1]), x.dtype)
    if sh > 0:
        return jnp.concatenate([x[sh:, :], z], axis=0)
    return jnp.concatenate([z, x[:L + sh, :]], axis=0)


# ----------------------------------------------------------------------------
# Fused kernel: embedding + SS1D/Mamba + all FFT layers + final projection
# (one grid step per batch element, grid axis marked "parallel")
# ----------------------------------------------------------------------------
def _mambaformer_kernel(
        # inputs
        src_ref, bias_ref, keep_ref,
        emb_w_ref, emb_b_ref, pe_ref,
        w_in_ref, b_in_ref, conv_w_ref, conv_b_ref,
        w_x_ref, b_x_ref, w_dt_ref, b_dt_ref,
        A_ref, D_ref, w_out_ref, b_out_ref, mln_g_ref, mln_b_ref,
        wqkv_ref, bqkv_ref, wo_ref, bo_ref, ln1g_ref, ln1b_ref,
        cw1_ref, cb1_ref, cw2_ref, cb2_ref, ln2g_ref, ln2b_ref,
        pw_ref, pb_ref,
        # outputs
        o_ref,
        # scratch
        dA_sc, bu_sc, h_sc,
        *, L, K, d_inner, d_state, dt_rank, H, dk, dv, n_layers):
    f32 = jnp.float32
    src = src_ref[0]                                            # (L, D)
    bias = bias_ref[0]                                          # (1, L) additive
    keep = keep_ref[0]                                          # (L, 1) 1.0 = keep

    # ---- DataEmbedding_value_pos: value Linear + sinusoidal pos-emb (dropout=id)
    x = _mm(src, emb_w_ref[...]) + emb_b_ref[...] + pe_ref[...]

    # ---- SS1D in-projection (single lane-dense matmul, split in VMEM)
    xz = _mm(x, w_in_ref[...]) + b_in_ref[...]                  # (L, 2*d_inner)
    xi = xz[:, :d_inner]
    z = xz[:, d_inner:]

    # ---- causal depthwise conv (kernel K) + SiLU  (shifts: slice + zero concat)
    acc = conv_b_ref[...]
    for kk in range(K):
        acc = acc + _shift_rows(xi, kk - (K - 1)) * conv_w_ref[kk:kk + 1, :]
    xc = _silu(acc)                                             # (L, d_inner)

    # ---- x-projection (packed dt_low | B | C), dt projection, gates
    xdbl = _mm(xc, w_x_ref[...]) + b_x_ref[...]                 # (L, r+2*d_state)
    dt = jax.nn.softplus(_mm(xdbl[:, :dt_rank], w_dt_ref[...]) + b_dt_ref[...])
    Bm = xdbl[:, dt_rank:dt_rank + d_state]                     # (L, d_state)
    Cm = xdbl[:, dt_rank + d_state:dt_rank + 2 * d_state]       # (L, d_state)
    dtx = dt * xc                                               # (L, d_inner)

    # ---- selective scan: bulk-precompute all non-recurrent terms, lane-flattened
    #      as j = s*d_inner + d so everything stays 2D and lane-dense.
    dt_rep = jnp.concatenate([dt] * d_state, axis=1)            # (L, S*Di)
    dA_sc[...] = jnp.exp(dt_rep * A_ref[...])                   # one bulk EUP call
    bu_sc[...] = jnp.concatenate(
        [Bm[:, s:s + 1] * dtx for s in range(d_state)], axis=1)  # (L, S*Di)

    def scan_body(t, h):
        h = dA_sc[pl.ds(t, 1), :] * h + bu_sc[pl.ds(t, 1), :]    # pure 2-op recurrence
        h_sc[pl.ds(t, 1), :] = h
        return h

    lax.fori_loop(0, L, scan_body,
                  jnp.zeros((1, d_state * d_inner), f32), unroll=(L <= 16))

    # C contraction (over d_state) done in bulk after the loop.
    hs = h_sc[...]                                              # (L, S*Di)
    y = xc * D_ref[...]
    for s in range(d_state):
        y = y + Cm[:, s:s + 1] * hs[:, s * d_inner:(s + 1) * d_inner]
    y = y * _silu(z)                                            # SiLU gate
    ss_out = _mm(y, w_out_ref[...]) + b_out_ref[...]            # (L, D)

    # ---- Mamba_Layer: LayerNorm(x + SS1D(x))
    x = _ln(x + ss_out, mln_g_ref[...], mln_b_ref[...])

    # ---- FFT transformer layers (all in-VMEM, static layer loop)
    scale = 1.0 / math.sqrt(dk)
    Hdk = H * dk
    half = (K - 1) // 2
    for l in range(n_layers):
        qkv = _mm(x, wqkv_ref[l]) + bqkv_ref[l]                 # (L, 3*H*dk)
        ctxs = []
        for hd in range(H):
            qh = qkv[:, hd * dk:(hd + 1) * dk]
            kh = qkv[:, Hdk + hd * dk:Hdk + (hd + 1) * dk]
            vh = qkv[:, 2 * Hdk + hd * dv:2 * Hdk + (hd + 1) * dv]
            sc_ = _mm_tb(qh, kh) * scale + bias                 # additive mask bias
            sc_ = sc_ - jnp.max(sc_, axis=-1, keepdims=True)
            e = jnp.exp(sc_)
            # approx reciprocal: small relative error vs exact division
            # (acceptable for inference; documented per review).
            p = e * pl.reciprocal(jnp.sum(e, axis=-1, keepdims=True), approx=True)
            ctxs.append(_mm(p, vh))                             # (L, dv)
        ctx = jnp.concatenate(ctxs, axis=1)                     # (L, H*dv)
        attn = _mm(ctx, wo_ref[l]) + bo_ref[l]                  # single K=32 matmul
        x1 = _ln(attn + x, ln1g_ref[l], ln1b_ref[l]) * keep     # add&norm + pad mask

        # position-wise FFN: Conv1d(k=K,'same') -> ReLU -> Conv1d(k=K,'same')
        h1 = cb1_ref[l]
        for kk in range(K):
            h1 = h1 + _mm(_shift_rows(x1, kk - half), cw1_ref[l * K + kk])
        h1 = jnp.maximum(h1, 0.0)
        h2 = cb2_ref[l]
        for kk in range(K):
            h2 = h2 + _mm(_shift_rows(h1, kk - half), cw2_ref[l * K + kk])
        x = _ln(h2 + x1, ln2g_ref[l], ln2b_ref[l]) * keep       # add&norm + pad mask

    # ---- final output projection (folded into the same kernel)
    o_ref[0] = _mm(x, pw_ref[...]) + pb_ref[...]


# ----------------------------------------------------------------------------
# pallas_call wrapper
# ----------------------------------------------------------------------------
def _rep(arr):
    """Full-array block, replicated across the batch grid axis."""
    n = arr.ndim
    return pl.BlockSpec(arr.shape, lambda b, _n=n: (0,) * _n)


def mambaformer_forward(params, src_seq, mask, cfg):
    B, L, D = src_seq.shape
    nl, K = cfg["d_layers"], cfg["d_conv"]
    d_inner, d_state, dt_rank = cfg["d_inner"], cfg["d_state"], cfg["dt_rank"]
    dec_in, c_out = cfg["dec_in"], cfg["c_out"]

    maskf = mask.astype(jnp.float32)
    bias = (maskf * -1e30).reshape(B, 1, L)       # additive attention bias
    keep = (1.0 - maskf).reshape(B, L, 1)         # row keep-mask for masked_fill

    ss = params["ss1d"]
    # A = -exp(A_log), flattened to lanes (j = s*d_inner + d); done once in XLA.
    A_flat = (-jnp.exp(ss["A_log"])).reshape(1, d_state * d_inner)
    pe = params["pos_enc"][:L]

    lp = params["layers"]
    stack = lambda name: jnp.stack([layer[name] for layer in lp], axis=0)
    wqkv, bqkv = stack("wqkv"), stack("bqkv")
    wo, bo = stack("wo"), stack("bo")
    ln1g, ln1b = stack("ln1_g"), stack("ln1_b")
    cw1 = stack("cw1").reshape(nl * K, D, dec_in)
    cb1 = stack("cb1")
    cw2 = stack("cw2").reshape(nl * K, dec_in, D)
    cb2 = stack("cb2")
    ln2g, ln2b = stack("ln2_g"), stack("ln2_b")

    weights = [
        params["emb_w"], params["emb_b"], pe,
        ss["w_in"], ss["b_in"], ss["conv_w"], ss["conv_b"],
        ss["w_x"], ss["b_x"], ss["w_dt"], ss["b_dt"],
        A_flat, ss["D"], ss["w_out"], ss["b_out"],
        params["mamba_ln_g"], params["mamba_ln_b"],
        wqkv, bqkv, wo, bo, ln1g, ln1b, cw1, cb1, cw2, cb2, ln2g, ln2b,
        params["proj_w"], params["proj_b"],
    ]

    kern = partial(_mambaformer_kernel, L=L, K=K, d_inner=d_inner,
                   d_state=d_state, dt_rank=dt_rank, H=cfg["n_heads"],
                   dk=cfg["d_k"], dv=cfg["d_v"], n_layers=nl)

    return pl.pallas_call(
        kern,
        grid=(B,),
        in_specs=[pl.BlockSpec((1, L, D), lambda b: (b, 0, 0)),
                  pl.BlockSpec((1, 1, L), lambda b: (b, 0, 0)),
                  pl.BlockSpec((1, L, 1), lambda b: (b, 0, 0))]
                 + [_rep(w) for w in weights],
        out_specs=pl.BlockSpec((1, L, c_out), lambda b: (b, 0, 0)),
        out_shape=jax.ShapeDtypeStruct((B, L, c_out), jnp.float32),
        scratch_shapes=[pltpu.VMEM((L, d_state * d_inner), jnp.float32),
                        pltpu.VMEM((L, d_state * d_inner), jnp.float32),
                        pltpu.VMEM((L, d_state * d_inner), jnp.float32)],
        compiler_params=pltpu.CompilerParams(dimension_semantics=("parallel",)),
    )(src_seq, bias, keep, *weights)


# ----------------------------------------------------------------------------
# Deterministic parameter init
# ----------------------------------------------------------------------------
def init_params(key, cfg):
    D, H = cfg["d_model"], cfg["n_heads"]
    dk, dv = cfg["d_k"], cfg["d_v"]
    d_inner, d_state, dt_rank = cfg["d_inner"], cfg["d_state"], cfg["dt_rank"]
    K, dec_in, c_out = cfg["d_conv"], cfg["dec_in"], cfg["c_out"]
    keys = iter(jax.random.split(key, 64))
    bf16 = jnp.bfloat16

    def w(shape, scale=0.02, dtype=jnp.float32):
        return (scale * jax.random.normal(next(keys), shape, jnp.float32)).astype(dtype)

    p = {}
    p["emb_w"] = w((D, D), dtype=bf16)
    p["emb_b"] = jnp.zeros((1, D), jnp.float32)
    pos = jnp.arange(cfg["max_len"], dtype=jnp.float32)[:, None]
    i2 = jnp.arange(0, D, 2, dtype=jnp.float32)
    div = jnp.exp(-jnp.log(10000.0) * i2 / D)
    pe = jnp.zeros((cfg["max_len"], D), jnp.float32)
    pe = pe.at[:, 0::2].set(jnp.sin(pos * div)).at[:, 1::2].set(jnp.cos(pos * div))
    p["pos_enc"] = pe

    p["ss1d"] = dict(
        w_in=w((D, 2 * d_inner), dtype=bf16),
        b_in=jnp.zeros((1, 2 * d_inner), jnp.float32),
        conv_w=w((K, d_inner), 0.1),
        conv_b=jnp.zeros((1, d_inner), jnp.float32),
        w_x=w((d_inner, dt_rank + 2 * d_state), dtype=bf16),
        b_x=jnp.zeros((1, dt_rank + 2 * d_state), jnp.float32),
        w_dt=w((dt_rank, d_inner), 0.5, dtype=bf16),
        b_dt=jnp.full((1, d_inner), -3.0, jnp.float32),
        A_log=jnp.log(jnp.broadcast_to(
            jnp.arange(1, d_state + 1, dtype=jnp.float32)[:, None],
            (d_state, d_inner))),
        D=jnp.ones((1, d_inner), jnp.float32),
        w_out=w((d_inner, D), dtype=bf16),
        b_out=jnp.zeros((1, D), jnp.float32),
    )
    p["mamba_ln_g"] = jnp.ones((1, D), jnp.float32)
    p["mamba_ln_b"] = jnp.zeros((1, D), jnp.float32)

    layers = []
    for _ in range(cfg["d_layers"]):
        layers.append(dict(
            wqkv=w((D, 3 * H * dk), dtype=bf16),        # fused q|k|v, lane-packed
            bqkv=jnp.zeros((1, 3 * H * dk), jnp.float32),
            wo=w((H * dv, D), dtype=bf16),
            bo=jnp.zeros((1, D), jnp.float32),
            ln1_g=jnp.ones((1, D), jnp.float32), ln1_b=jnp.zeros((1, D), jnp.float32),
            cw1=w((K, D, dec_in), 0.05, dtype=bf16),
            cb1=jnp.zeros((1, dec_in), jnp.float32),
            cw2=w((K, dec_in, D), 0.05, dtype=bf16),
            cb2=jnp.zeros((1, D), jnp.float32),
            ln2_g=jnp.ones((1, D), jnp.float32), ln2_b=jnp.zeros((1, D), jnp.float32),
        ))
    p["layers"] = layers
    p["proj_w"] = w((D, c_out), dtype=bf16)
    p["proj_b"] = jnp.zeros((1, c_out), jnp.float32)
    return p


# ----------------------------------------------------------------------------
# Main
# ----------------------------------------------------------------------------
if __name__ == "__main__":
    key = jax.random.PRNGKey(0)
    k_param, k_src = jax.random.split(key)
    B, L = 2, 8
    params = init_params(k_param, CFG)
    src_seq = jax.random.normal(k_src, (B, L, CFG["d_model"]), jnp.float32)
    mask = jnp.zeros((B, L), jnp.bool_).at[1, 6:].set(True)   # True = padding

    fwd = jax.jit(lambda p, s, m: mambaformer_forward(p, s, m, CFG))
    out = fwd(params, src_seq, mask)
    jax.block_until_ready(out)

    assert out.shape == (B, L, CFG["c_out"]), out.shape
    assert bool(jnp.all(jnp.isfinite(out)))
    print("KERNEL_OK")
</pallas_src>

<mosaic_0001>
module attributes {stable_mosaic.version = 11 : i64} {
  func.func @_mambaformer_kernel(%arg0: i32, %arg1: memref<1x8x32xf32, #tpu.memory_space<vmem>>, %arg2: memref<1x1x8xf32, #tpu.memory_space<vmem>>, %arg3: memref<1x8x1xf32, #tpu.memory_space<vmem>>, %arg4: memref<32x32xbf16, #tpu.memory_space<vmem>>, %arg5: memref<1x32xf32, #tpu.memory_space<vmem>>, %arg6: memref<8x32xf32, #tpu.memory_space<vmem>>, %arg7: memref<32x128xbf16, #tpu.memory_space<vmem>>, %arg8: memref<1x128xf32, #tpu.memory_space<vmem>>, %arg9: memref<3x64xf32, #tpu.memory_space<vmem>>, %arg10: memref<1x64xf32, #tpu.memory_space<vmem>>, %arg11: memref<64x18xbf16, #tpu.memory_space<vmem>>, %arg12: memref<1x18xf32, #tpu.memory_space<vmem>>, %arg13: memref<2x64xbf16, #tpu.memory_space<vmem>>, %arg14: memref<1x64xf32, #tpu.memory_space<vmem>>, %arg15: memref<1x512xf32, #tpu.memory_space<vmem>>, %arg16: memref<1x64xf32, #tpu.memory_space<vmem>>, %arg17: memref<64x32xbf16, #tpu.memory_space<vmem>>, %arg18: memref<1x32xf32, #tpu.memory_space<vmem>>, %arg19: memref<1x32xf32, #tpu.memory_space<vmem>>, %arg20: memref<1x32xf32, #tpu.memory_space<vmem>>, %arg21: memref<2x32x96xbf16, #tpu.memory_space<vmem>>, %arg22: memref<2x1x96xf32, #tpu.memory_space<vmem>>, %arg23: memref<2x32x32xbf16, #tpu.memory_space<vmem>>, %arg24: memref<2x1x32xf32, #tpu.memory_space<vmem>>, %arg25: memref<2x1x32xf32, #tpu.memory_space<vmem>>, %arg26: memref<2x1x32xf32, #tpu.memory_space<vmem>>, %arg27: memref<6x32x16xbf16, #tpu.memory_space<vmem>>, %arg28: memref<2x1x16xf32, #tpu.memory_space<vmem>>, %arg29: memref<6x16x32xbf16, #tpu.memory_space<vmem>>, %arg30: memref<2x1x32xf32, #tpu.memory_space<vmem>>, %arg31: memref<2x1x32xf32, #tpu.memory_space<vmem>>, %arg32: memref<2x1x32xf32, #tpu.memory_space<vmem>>, %arg33: memref<32x4xbf16, #tpu.memory_space<vmem>>, %arg34: memref<1x4xf32, #tpu.memory_space<vmem>>, %arg35: memref<1x8x4xf32, #tpu.memory_space<vmem>>, %arg36: memref<8x512xf32, #tpu.memory_space<vmem>>, %arg37: memref<8x512xf32, #tpu.memory_space<vmem>>, %arg38: memref<8x512xf32, #tpu.memory_space<vmem>>) attributes {dimension_semantics = [#tpu.dimension_semantics<parallel>], iteration_bounds = array<i64: 2>, scalar_prefetch = 0 : i64, scratch_operands = 3 : i64, tpu.core_type = #tpu.core_type<tc>, window_params = [{transform_indices = @transform_0, window_bounds = array<i64: 1, 8, 32>}, {transform_indices = @transform_1, window_bounds = array<i64: 1, 1, 8>}, {transform_indices = @transform_2, window_bounds = array<i64: 1, 8, 1>}, {pipeline_mode = #tpu.pipeline_mode<synchronous>, transform_indices = @transform_3, window_bounds = array<i64: 32, 32>}, {pipeline_mode = #tpu.pipeline_mode<synchronous>, transform_indices = @transform_4, window_bounds = array<i64: 1, 32>}, {pipeline_mode = #tpu.pipeline_mode<synchronous>, transform_indices = @transform_5, window_bounds = array<i64: 8, 32>}, {pipeline_mode = #tpu.pipeline_mode<synchronous>, transform_indices = @transform_6, window_bounds = array<i64: 32, 128>}, {pipeline_mode = #tpu.pipeline_mode<synchronous>, transform_indices = @transform_7, window_bounds = array<i64: 1, 128>}, {pipeline_mode = #tpu.pipeline_mode<synchronous>, transform_indices = @transform_8, window_bounds = array<i64: 3, 64>}, {pipeline_mode = #tpu.pipeline_mode<synchronous>, transform_indices = @transform_9, window_bounds = array<i64: 1, 64>}, {pipeline_mode = #tpu.pipeline_mode<synchronous>, transform_indices = @transform_10, window_bounds = array<i64: 64, 18>}, {pipeline_mode = #tpu.pipeline_mode<synchronous>, transform_indices = @transform_11, window_bounds = array<i64: 1, 18>}, {pipeline_mode = #tpu.pipeline_mode<synchronous>, transform_indices = @transform_12, window_bounds = array<i64: 2, 64>}, {pipeline_mode = #tpu.pipeline_mode<synchronous>, transform_indices = @transform_13, window_bounds = array<i64: 1, 64>}, {pipeline_mode = #tpu.pipeline_mode<synchronous>, transform_indices = @transform_14, window_bounds = array<i64: 1, 512>}, {pipeline_mode = #tpu.pipeline_mode<synchronous>, transform_indices = @transform_15, window_bounds = array<i64: 1, 64>}, {pipeline_mode = #tpu.pipeline_mode<synchronous>, transform_indices = @transform_16, window_bounds = array<i64: 64, 32>}, {pipeline_mode = #tpu.pipeline_mode<synchronous>, transform_indices = @transform_17, window_bounds = array<i64: 1, 32>}, {pipeline_mode = #tpu.pipeline_mode<synchronous>, transform_indices = @transform_18, window_bounds = array<i64: 1, 32>}, {pipeline_mode = #tpu.pipeline_mode<synchronous>, transform_indices = @transform_19, window_bounds = array<i64: 1, 32>}, {pipeline_mode = #tpu.pipeline_mode<synchronous>, transform_indices = @transform_20, window_bounds = array<i64: 2, 32, 96>}, {pipeline_mode = #tpu.pipeline_mode<synchronous>, transform_indices = @transform_21, window_bounds = array<i64: 2, 1, 96>}, {pipeline_mode = #tpu.pipeline_mode<synchronous>, transform_indices = @transform_22, window_bounds = array<i64: 2, 32, 32>}, {pipeline_mode = #tpu.pipeline_mode<synchronous>, transform_indices = @transform_23, window_bounds = array<i64: 2, 1, 32>}, {pipeline_mode = #tpu.pipeline_mode<synchronous>, transform_indices = @transform_24, window_bounds = array<i64: 2, 1, 32>}, {pipeline_mode = #tpu.pipeline_mode<synchronous>, transform_indices = @transform_25, window_bounds = array<i64: 2, 1, 32>}, {pipeline_mode = #tpu.pipeline_mode<synchronous>, transform_indices = @transform_26, window_bounds = array<i64: 6, 32, 16>}, {pipeline_mode = #tpu.pipeline_mode<synchronous>, transform_indices = @transform_27, window_bounds = array<i64: 2, 1, 16>}, {pipeline_mode = #tpu.pipeline_mode<synchronous>, transform_indices = @transform_28, window_bounds = array<i64: 6, 16, 32>}, {pipeline_mode = #tpu.pipeline_mode<synchronous>, transform_indices = @transform_29, window_bounds = array<i64: 2, 1, 32>}, {pipeline_mode = #tpu.pipeline_mode<synchronous>, transform_indices = @transform_30, window_bounds = array<i64: 2, 1, 32>}, {pipeline_mode = #tpu.pipeline_mode<synchronous>, transform_indices = @transform_31, window_bounds = array<i64: 2, 1, 32>}, {pipeline_mode = #tpu.pipeline_mode<synchronous>, transform_indices = @transform_32, window_bounds = array<i64: 32, 4>}, {pipeline_mode = #tpu.pipeline_mode<synchronous>, transform_indices = @transform_33, window_bounds = array<i64: 1, 4>}, {transform_indices = @transform_34, window_bounds = array<i64: 1, 8, 4>}]} {
    %c0 = arith.constant 0 : index
    %c0_0 = arith.constant 0 : index
    %c0_1 = arith.constant 0 : index
    %0 = vector.load %arg1[%c0, %c0_0, %c0_1] : memref<1x8x32xf32, #tpu.memory_space<vmem>>, vector<1x8x32xf32>
    %1 = vector.shape_cast %0 : vector<1x8x32xf32> to vector<8x32xf32>
    %c0_2 = arith.constant 0 : index
    %c0_3 = arith.constant 0 : index
    %c0_4 = arith.constant 0 : index
    %2 = vector.load %arg2[%c0_2, %c0_3, %c0_4] : memref<1x1x8xf32, #tpu.memory_space<vmem>>, vector<1x1x8xf32>
    %3 = vector.shape_cast %2 : vector<1x1x8xf32> to vector<1x8xf32>
    %c0_5 = arith.constant 0 : index
    %c0_6 = arith.constant 0 : index
    %c0_7 = arith.constant 0 : index
    %4 = vector.load %arg3[%c0_5, %c0_6, %c0_7] : memref<1x8x1xf32, #tpu.memory_space<vmem>>, vector<1x8x1xf32>
    %5 = vector.shape_cast %4 : vector<1x8x1xf32> to vector<8x1xf32>
    %c0_8 = arith.constant 0 : index
    %c0_9 = arith.constant 0 : index
    %6 = vector.load %arg4[%c0_8, %c0_9] : memref<32x32xbf16, #tpu.memory_space<vmem>>, vector<32x32xbf16>
    %7 = arith.truncf %1 : vector<8x32xf32> to vector<8x32xbf16>
    %cst = arith.constant dense<0.000000e+00> : vector<8x32xf32>
    %8 = tpu.matmul %7, %6, %cst {dimension_numbers = #tpu.dot_dimension_numbers<[1], [0], [0], [1], [0, 0, 1, 1], [], []>} : vector<8x32xbf16>, vector<32x32xbf16>, vector<8x32xf32> -> vector<8x32xf32>
    %c0_10 = arith.constant 0 : index
    %c0_11 = arith.constant 0 : index
    %9 = vector.load %arg5[%c0_10, %c0_11] : memref<1x32xf32, #tpu.memory_space<vmem>>, vector<1x32xf32>
    %10 = vector.broadcast %9 : vector<1x32xf32> to vector<8x32xf32>
    %11 = arith.addf %8, %10 : vector<8x32xf32>
    %c0_12 = arith.constant 0 : index
    %c0_13 = arith.constant 0 : index
    %12 = vector.load %arg6[%c0_12, %c0_13] : memref<8x32xf32, #tpu.memory_space<vmem>>, vector<8x32xf32>
    %13 = arith.addf %11, %12 : vector<8x32xf32>
    %c0_14 = arith.constant 0 : index
    %c0_15 = arith.constant 0 : index
    %14 = vector.load %arg7[%c0_14, %c0_15] : memref<32x128xbf16, #tpu.memory_space<vmem>>, vector<32x128xbf16>
    %15 = arith.truncf %13 : vector<8x32xf32> to vector<8x32xbf16>
    %cst_16 = arith.constant dense<0.000000e+00> : vector<8x128xf32>
    %16 = tpu.matmul %15, %14, %cst_16 {dimension_numbers = #tpu.dot_dimension_numbers<[1], [0], [0], [1], [0, 0, 1, 1], [], []>} : vector<8x32xbf16>, vector<32x128xbf16>, vector<8x128xf32> -> vector<8x128xf32>
    %c0_17 = arith.constant 0 : index
    %c0_18 = arith.constant 0 : index
    %17 = vector.load %arg8[%c0_17, %c0_18] : memref<1x128xf32, #tpu.memory_space<vmem>>, vector<1x128xf32>
    %18 = vector.broadcast %17 : vector<1x128xf32> to vector<8x128xf32>
    %19 = arith.addf %16, %18 : vector<8x128xf32>
    %20 = vector.extract_strided_slice %19 {offsets = [0, 0], sizes = [8, 64], strides = [1, 1]} : vector<8x128xf32> to vector<8x64xf32>
    %21 = vector.extract_strided_slice %19 {offsets = [0, 64], sizes = [8, 64], strides = [1, 1]} : vector<8x128xf32> to vector<8x64xf32>
    %c0_19 = arith.constant 0 : index
    %c0_20 = arith.constant 0 : index
    %22 = vector.load %arg10[%c0_19, %c0_20] : memref<1x64xf32, #tpu.memory_space<vmem>>, vector<1x64xf32>
    %cst_21 = arith.constant 0.000000e+00 : f32
    %23 = vector.broadcast %cst_21 : f32 to vector<2x64xf32>
    %24 = vector.extract_strided_slice %20 {offsets = [0, 0], sizes = [6, 64], strides = [1, 1]} : vector<8x64xf32> to vector<6x64xf32>
    %25 = tpu.concatenate %23, %24 in 0 : vector<2x64xf32>, vector<6x64xf32> -> vector<8x64xf32>
    %c0_22 = arith.constant 0 : index
    %c0_23 = arith.constant 0 : index
    %26 = vector.load %arg9[%c0_22, %c0_23] : memref<3x64xf32, #tpu.memory_space<vmem>>, vector<1x64xf32>
    %27 = vector.broadcast %26 : vector<1x64xf32> to vector<8x64xf32>
    %28 = arith.mulf %25, %27 : vector<8x64xf32>
    %29 = vector.broadcast %22 : vector<1x64xf32> to vector<8x64xf32>
    %30 = arith.addf %29, %28 : vector<8x64xf32>
    %cst_24 = arith.constant 0.000000e+00 : f32
    %31 = vector.broadcast %cst_24 : f32 to vector<1x64xf32>
    %32 = vector.extract_strided_slice %20 {offsets = [0, 0], sizes = [7, 64], strides = [1, 1]} : vector<8x64xf32> to vector<7x64xf32>
    %33 = tpu.concatenate %31, %32 in 0 : vector<1x64xf32>, vector<7x64xf32> -> vector<8x64xf32>
    %c1 = arith.constant 1 : index
    %c0_25 = arith.constant 0 : index
    %34 = vector.load %arg9[%c1, %c0_25] : memref<3x64xf32, #tpu.memory_space<vmem>>, vector<1x64xf32>
    %35 = vector.broadcast %34 : vector<1x64xf32> to vector<8x64xf32>
    %36 = arith.mulf %33, %35 : vector<8x64xf32>
    %37 = arith.addf %30, %36 : vector<8x64xf32>
    %c2 = arith.constant 2 : index
    %c0_26 = arith.constant 0 : index
    %38 = vector.load %arg9[%c2, %c0_26] : memref<3x64xf32, #tpu.memory_space<vmem>>, vector<1x64xf32>
    %39 = vector.broadcast %38 : vector<1x64xf32> to vector<8x64xf32>
    %40 = arith.mulf %20, %39 : vector<8x64xf32>
    %41 = arith.addf %37, %40 : vector<8x64xf32>
    %42 = arith.negf %41 : vector<8x64xf32>
    %43 = math.exp %42 : vector<8x64xf32>
    %cst_27 = arith.constant 1.000000e+00 : f32
    %44 = vector.broadcast %cst_27 : f32 to vector<8x64xf32>
    %45 = arith.addf %44, %43 : vector<8x64xf32>
    %46 = arith.divf %44, %45 : vector<8x64xf32>
    %47 = arith.mulf %41, %46 : vector<8x64xf32>
    %c0_28 = arith.constant 0 : index
    %c0_29 = arith.constant 0 : index
    %48 = vector.load %arg11[%c0_28, %c0_29] : memref<64x18xbf16, #tpu.memory_space<vmem>>, vector<64x18xbf16>
    %49 = arith.truncf %47 : vector<8x64xf32> to vector<8x64xbf16>
    %cst_30 = arith.constant dense<0.000000e+00> : vector<8x18xf32>
    %50 = tpu.matmul %49, %48, %cst_30 {dimension_numbers = #tpu.dot_dimension_numbers<[1], [0], [0], [1], [0, 0, 1, 1], [], []>} : vector<8x64xbf16>, vector<64x18xbf16>, vector<8x18xf32> -> vector<8x18xf32>
    %c0_31 = arith.constant 0 : index
    %c0_32 = arith.constant 0 : index
    %51 = vector.load %arg12[%c0_31, %c0_32] : memref<1x18xf32, #tpu.memory_space<vmem>>, vector<1x18xf32>
    %52 = vector.broadcast %51 : vector<1x18xf32> to vector<8x18xf32>
    %53 = arith.addf %50, %52 : vector<8x18xf32>
    %54 = vector.extract_strided_slice %53 {offsets = [0, 0], sizes = [8, 2], strides = [1, 1]} : vector<8x18xf32> to vector<8x2xf32>
    %c0_33 = arith.constant 0 : index
    %c0_34 = arith.constant 0 : index
    %55 = vector.load %arg13[%c0_33, %c0_34] : memref<2x64xbf16, #tpu.memory_space<vmem>>, vector<2x64xbf16>
    %56 = arith.truncf %54 : vector<8x2xf32> to vector<8x2xbf16>
    %cst_35 = arith.constant dense<0.000000e+00> : vector<8x64xf32>
    %57 = tpu.matmul %56, %55, %cst_35 {dimension_numbers = #tpu.dot_dimension_numbers<[1], [0], [0], [1], [0, 0, 1, 1], [], []>} : vector<8x2xbf16>, vector<2x64xbf16>, vector<8x64xf32> -> vector<8x64xf32>
    %c0_36 = arith.constant 0 : index
    %c0_37 = arith.constant 0 : index
    %58 = vector.load %arg14[%c0_36, %c0_37] : memref<1x64xf32, #tpu.memory_space<vmem>>, vector<1x64xf32>
    %59 = vector.broadcast %58 : vector<1x64xf32> to vector<8x64xf32>
    %60 = arith.addf %57, %59 : vector<8x64xf32>
    %cst_38 = arith.constant 0.000000e+00 : f32
    %61 = vector.broadcast %cst_38 : f32 to vector<8x64xf32>
    %62 = arith.maximumf %60, %61 : vector<8x64xf32>
    %63 = vector.broadcast %cst_38 : f32 to vector<8x64xf32>
    %64 = arith.subf %60, %63 : vector<8x64xf32>
    %65 = arith.cmpf one, %64, %64 : vector<8x64xf32>
    %66 = vector.broadcast %cst_38 : f32 to vector<8x64xf32>
    %67 = arith.addf %60, %66 : vector<8x64xf32>
    %68 = math.absf %64 : vector<8x64xf32>
    %cst_39 = arith.constant 0.000000e+00 : f32
    %69 = vector.broadcast %cst_39 : f32 to vector<8x64xf32>
    %70 = arith.subf %69, %68 : vector<8x64xf32>
    %71 = math.exp %70 : vector<8x64xf32>
    %72 = math.log1p %71 : vector<8x64xf32>
    %73 = arith.addf %62, %72 : vector<8x64xf32>
    %74 = arith.select %65, %67, %73 : vector<8x64xi1>, vector<8x64xf32>
    %75 = vector.extract_strided_slice %53 {offsets = [0, 2], sizes = [8, 8], strides = [1, 1]} : vector<8x18xf32> to vector<8x8xf32>
    %76 = vector.extract_strided_slice %53 {offsets = [0, 10], sizes = [8, 8], strides = [1, 1]} : vector<8x18xf32> to vector<8x8xf32>
    %77 = arith.mulf %74, %47 : vector<8x64xf32>
    %78 = tpu.concatenate %74, %74, %74, %74, %74, %74, %74, %74 in 1 : vector<8x64xf32>, vector<8x64xf32>, vector<8x64xf32>, vector<8x64xf32>, vector<8x64xf32>, vector<8x64xf32>, vector<8x64xf32>, vector<8x64xf32> -> vector<8x512xf32>
    %c0_40 = arith.constant 0 : index
    %c0_41 = arith.constant 0 : index
    %79 = vector.load %arg15[%c0_40, %c0_41] : memref<1x512xf32, #tpu.memory_space<vmem>>, vector<1x512xf32>
    %80 = vector.broadcast %79 : vector<1x512xf32> to vector<8x512xf32>
    %81 = arith.mulf %78, %80 : vector<8x512xf32>
    %82 = math.exp %81 : vector<8x512xf32>
    %c0_42 = arith.constant 0 : index
    %c0_43 = arith.constant 0 : index
    %83 = vector.load %arg36[%c0_42, %c0_43] : memref<8x512xf32, #tpu.memory_space<vmem>>, vector<8x512xf32>
    tpu.vector_store %arg36[%c0_42, %c0_43], %82 {strides = array<i32>} : memref<8x512xf32, #tpu.memory_space<vmem>>, vector<8x512xf32>,
    %84 = vector.extract_strided_slice %75 {offsets = [0, 0], sizes = [8, 1], strides = [1, 1]} : vector<8x8xf32> to vector<8x1xf32>
    %85 = vector.broadcast %84 : vector<8x1xf32> to vector<8x64xf32>
    %86 = arith.mulf %85, %77 : vector<8x64xf32>
    %87 = vector.extract_strided_slice %75 {offsets = [0, 1], sizes = [8, 1], strides = [1, 1]} : vector<8x8xf32> to vector<8x1xf32>
    %88 = vector.broadcast %87 : vector<8x1xf32> to vector<8x64xf32>
    %89 = arith.mulf %88, %77 : vector<8x64xf32>
    %90 = vector.extract_strided_slice %75 {offsets = [0, 2], sizes = [8, 1], strides = [1, 1]} : vector<8x8xf32> to vector<8x1xf32>
    %91 = vector.broadcast %90 : vector<8x1xf32> to vector<8x64xf32>
    %92 = arith.mulf %91, %77 : vector<8x64xf32>
    %93 = vector.extract_strided_slice %75 {offsets = [0, 3], sizes = [8, 1], strides = [1, 1]} : vector<8x8xf32> to vector<8x1xf32>
    %94 = vector.broadcast %93 : vector<8x1xf32> to vector<8x64xf32>
    %95 = arith.mulf %94, %77 : vector<8x64xf32>
    %96 = vector.extract_strided_slice %75 {offsets = [0, 4], sizes = [8, 1], strides = [1, 1]} : vector<8x8xf32> to vector<8x1xf32>
    %97 = vector.broadcast %96 : vector<8x1xf32> to vector<8x64xf32>
    %98 = arith.mulf %97, %77 : vector<8x64xf32>
    %99 = vector.extract_strided_slice %75 {offsets = [0, 5], sizes = [8, 1], strides = [1, 1]} : vector<8x8xf32> to vector<8x1xf32>
    %100 = vector.broadcast %99 : vector<8x1xf32> to vector<8x64xf32>
    %101 = arith.mulf %100, %77 : vector<8x64xf32>
    %102 = vector.extract_strided_slice %75 {offsets = [0, 6], sizes = [8, 1], strides = [1, 1]} : vector<8x8xf32> to vector<8x1xf32>
    %103 = vector.broadcast %102 : vector<8x1xf32> to vector<8x64xf32>
    %104 = arith.mulf %103, %77 : vector<8x64xf32>
    %105 = vector.extract_strided_slice %75 {offsets = [0, 7], sizes = [8, 1], strides = [1, 1]} : vector<8x8xf32> to vector<8x1xf32>
    %106 = vector.broadcast %105 : vector<8x1xf32> to vector<8x64xf32>
    %107 = arith.mulf %106, %77 : vector<8x64xf32>
    %108 = tpu.concatenate %86, %89, %92, %95, %98, %101, %104, %107 in 1 : vector<8x64xf32>, vector<8x64xf32>, vector<8x64xf32>, vector<8x64xf32>, vector<8x64xf32>, vector<8x64xf32>, vector<8x64xf32>, vector<8x64xf32> -> vector<8x512xf32>
    %c0_44 = arith.constant 0 : index
    %c0_45 = arith.constant 0 : index
    %109 = vector.load %arg37[%c0_44, %c0_45] : memref<8x512xf32, #tpu.memory_space<vmem>>, vector<8x512xf32>
    tpu.vector_store %arg37[%c0_44, %c0_45], %108 {strides = array<i32>} : memref<8x512xf32, #tpu.memory_space<vmem>>, vector<8x512xf32>,
    %cst_46 = arith.constant 0.000000e+00 : f32
    %110 = vector.broadcast %cst_46 : f32 to vector<1x512xf32>
    %c0_i32 = arith.constant 0 : i32
    %111 = arith.index_cast %c0_i32 : i32 to index
    %c0_47 = arith.constant 0 : index
    %112 = vector.load %arg36[%111, %c0_47] : memref<8x512xf32, #tpu.memory_space<vmem>>, vector<1x512xf32>
    %113 = arith.mulf %112, %110 : vector<1x512xf32>
    %114 = arith.index_cast %c0_i32 : i32 to index
    %c0_48 = arith.constant 0 : index
    %115 = vector.load %arg37[%114, %c0_48] : memref<8x512xf32, #tpu.memory_space<vmem>>, vector<1x512xf32>
    %116 = arith.addf %113, %115 : vector<1x512xf32>
    %117 = arith.index_cast %c0_i32 : i32 to index
    %c0_49 = arith.constant 0 : index
    %118 = vector.load %arg38[%117, %c0_49] : memref<8x512xf32, #tpu.memory_space<vmem>>, vector<1x512xf32>
    tpu.vector_store %arg38[%117, %c0_49], %116 {strides = array<i32>} : memref<8x512xf32, #tpu.memory_space<vmem>>, vector<1x512xf32>,
    %c1_i32 = arith.constant 1 : i32
    %119 = arith.index_cast %c1_i32 : i32 to index
    %c0_50 = arith.constant 0 : index
    %120 = vector.load %arg36[%119, %c0_50] : memref<8x512xf32, #tpu.memory_space<vmem>>, vector<1x512xf32>
    %121 = arith.mulf %120, %116 : vector<1x512xf32>
    %122 = arith.index_cast %c1_i32 : i32 to index
    %c0_51 = arith.constant 0 : index
    %123 = vector.load %arg37[%122, %c0_51] : memref<8x512xf32, #tpu.memory_space<vmem>>, vector<1x512xf32>
    %124 = arith.addf %121, %123 : vector<1x512xf32>
    %125 = arith.index_cast %c1_i32 : i32 to index
    %c0_52 = arith.constant 0 : index
    %126 = vector.load %arg38[%125, %c0_52] : memref<8x512xf32, #tpu.memory_space<vmem>>, vector<1x512xf32>
    tpu.vector_store %arg38[%125, %c0_52], %124 {strides = array<i32>} : memref<8x512xf32, #tpu.memory_space<vmem>>, vector<1x512xf32>,
    %c2_i32 = arith.constant 2 : i32
    %127 = arith.index_cast %c2_i32 : i32 to index
    %c0_53 = arith.constant 0 : index
    %128 = vector.load %arg36[%127, %c0_53] : memref<8x512xf32, #tpu.memory_space<vmem>>, vector<1x512xf32>
    %129 = arith.mulf %128, %124 : vector<1x512xf32>
    %130 = arith.index_cast %c2_i32 : i32 to index
    %c0_54 = arith.constant 0 : index
    %131 = vector.load %arg37[%130, %c0_54] : memref<8x512xf32, #tpu.memory_space<vmem>>, vector<1x512xf32>
    %132 = arith.addf %129, %131 : vector<1x512xf32>
    %133 = arith.index_cast %c2_i32 : i32 to index
    %c0_55 = arith.constant 0 : index
    %134 = vector.load %arg38[%133, %c0_55] : memref<8x512xf32, #tpu.memory_space<vmem>>, vector<1x512xf32>
    tpu.vector_store %arg38[%133, %c0_55], %132 {strides = array<i32>} : memref<8x512xf32, #tpu.memory_space<vmem>>, vector<1x512xf32>,
    %c3_i32 = arith.constant 3 : i32
    %135 = arith.index_cast %c3_i32 : i32 to index
    %c0_56 = arith.constant 0 : index
    %136 = vector.load %arg36[%135, %c0_56] : memref<8x512xf32, #tpu.memory_space<vmem>>, vector<1x512xf32>
    %137 = arith.mulf %136, %132 : vector<1x512xf32>
    %138 = arith.index_cast %c3_i32 : i32 to index
    %c0_57 = arith.constant 0 : index
    %139 = vector.load %arg37[%138, %c0_57] : memref<8x512xf32, #tpu.memory_space<vmem>>, vector<1x512xf32>
    %140 = arith.addf %137, %139 : vector<1x512xf32>
    %141 = arith.index_cast %c3_i32 : i32 to index
    %c0_58 = arith.constant 0 : index
    %142 = vector.load %arg38[%141, %c0_58] : memref<8x512xf32, #tpu.memory_space<vmem>>, vector<1x512xf32>
    tpu.vector_store %arg38[%141, %c0_58], %140 {strides = array<i32>} : memref<8x512xf32, #tpu.memory_space<vmem>>, vector<1x512xf32>,
    %c4_i32 = arith.constant 4 : i32
    %143 = arith.index_cast %c4_i32 : i32 to index
    %c0_59 = arith.constant 0 : index
    %144 = vector.load %arg36[%143, %c0_59] : memref<8x512xf32, #tpu.memory_space<vmem>>, vector<1x512xf32>
    %145 = arith.mulf %144, %140 : vector<1x512xf32>
    %146 = arith.index_cast %c4_i32 : i32 to index
    %c0_60 = arith.constant 0 : index
    %147 = vector.load %arg37[%146, %c0_60] : memref<8x512xf32, #tpu.memory_space<vmem>>, vector<1x512xf32>
    %148 = arith.addf %145, %147 : vector<1x512xf32>
    %149 = arith.index_cast %c4_i32 : i32 to index
    %c0_61 = arith.constant 0 : index
    %150 = vector.load %arg38[%149, %c0_61] : memref<8x512xf32, #tpu.memory_space<vmem>>, vector<1x512xf32>
    tpu.vector_store %arg38[%149, %c0_61], %148 {strides = array<i32>} : memref<8x512xf32, #tpu.memory_space<vmem>>, vector<1x512xf32>,
    %c5_i32 = arith.constant 5 : i32
    %151 = arith.index_cast %c5_i32 : i32 to index
    %c0_62 = arith.constant 0 : index
    %152 = vector.load %arg36[%151, %c0_62] : memref<8x512xf32, #tpu.memory_space<vmem>>, vector<1x512xf32>
    %153 = arith.mulf %152, %148 : vector<1x512xf32>
    %154 = arith.index_cast %c5_i32 : i32 to index
    %c0_63 = arith.constant 0 : index
    %155 = vector.load %arg37[%154, %c0_63] : memref<8x512xf32, #tpu.memory_space<vmem>>, vector<1x512xf32>
    %156 = arith.addf %153, %155 : vector<1x512xf32>
    %157 = arith.index_cast %c5_i32 : i32 to index
    %c0_64 = arith.constant 0 : index
    %158 = vector.load %arg38[%157, %c0_64] : memref<8x512xf32, #tpu.memory_space<vmem>>, vector<1x512xf32>
    tpu.vector_store %arg38[%157, %c0_64], %156 {strides = array<i32>} : memref<8x512xf32, #tpu.memory_space<vmem>>, vector<1x512xf32>,
    %c6_i32 = arith.constant 6 : i32
    %159 = arith.index_cast %c6_i32 : i32 to index
    %c0_65 = arith.constant 0 : index
    %160 = vector.load %arg36[%159, %c0_65] : memref<8x512xf32, #tpu.memory_space<vmem>>, vector<1x512xf32>
    %161 = arith.mulf %160, %156 : vector<1x512xf32>
    %162 = arith.index_cast %c6_i32 : i32 to index
    %c0_66 = arith.constant 0 : index
    %163 = vector.load %arg37[%162, %c0_66] : memref<8x512xf32, #tpu.memory_space<vmem>>, vector<1x512xf32>
    %164 = arith.addf %161, %163 : vector<1x512xf32>
    %165 = arith.index_cast %c6_i32 : i32 to index
    %c0_67 = arith.constant 0 : index
    %166 = vector.load %arg38[%165, %c0_67] : memref<8x512xf32, #tpu.memory_space<vmem>>, vector<1x512xf32>
    tpu.vector_store %arg38[%165, %c0_67], %164 {strides = array<i32>} : memref<8x512xf32, #tpu.memory_space<vmem>>, vector<1x512xf32>,
    %c7_i32 = arith.constant 7 : i32
    %167 = arith.index_cast %c7_i32 : i32 to index
    %c0_68 = arith.constant 0 : index
    %168 = vector.load %arg36[%167, %c0_68] : memref<8x512xf32, #tpu.memory_space<vmem>>, vector<1x512xf32>
    %169 = arith.mulf %168, %164 : vector<1x512xf32>
    %170 = arith.index_cast %c7_i32 : i32 to index
    %c0_69 = arith.constant 0 : index
    %171 = vector.load %arg37[%170, %c0_69] : memref<8x512xf32, #tpu.memory_space<vmem>>, vector<1x512xf32>
    %172 = arith.addf %169, %171 : vector<1x512xf32>
    %173 = arith.index_cast %c7_i32 : i32 to index
    %c0_70 = arith.constant 0 : index
    %174 = vector.load %arg38[%173, %c0_70] : memref<8x512xf32, #tpu.memory_space<vmem>>, vector<1x512xf32>
    tpu.vector_store %arg38[%173, %c0_70], %172 {strides = array<i32>} : memref<8x512xf32, #tpu.memory_space<vmem>>, vector<1x512xf32>,
    %c8_i32 = arith.constant 8 : i32
    %c0_71 = arith.constant 0 : index
    %c0_72 = arith.constant 0 : index
    %175 = vector.load %arg38[%c0_71, %c0_72] : memref<8x512xf32, #tpu.memory_space<vmem>>, vector<8x512xf32>
    %c0_73 = arith.constant 0 : index
    %c0_74 = arith.constant 0 : index
    %176 = vector.load %arg16[%c0_73, %c0_74] : memref<1x64xf32, #tpu.memory_space<vmem>>, vector<1x64xf32>
    %177 = vector.broadcast %176 : vector<1x64xf32> to vector<8x64xf32>
    %178 = arith.mulf %47, %177 : vector<8x64xf32>
    %179 = vector.extract_strided_slice %76 {offsets = [0, 0], sizes = [8, 1], strides = [1, 1]} : vector<8x8xf32> to vector<8x1xf32>
    %180 = vector.extract_strided_slice %175 {offsets = [0, 0], sizes = [8, 64], strides = [1, 1]} : vector<8x512xf32> to vector<8x64xf32>
    %181 = vector.broadcast %179 : vector<8x1xf32> to vector<8x64xf32>
    %182 = arith.mulf %181, %180 : vector<8x64xf32>
    %183 = arith.addf %178, %182 : vector<8x64xf32>
    %184 = vector.extract_strided_slice %76 {offsets = [0, 1], sizes = [8, 1], strides = [1, 1]} : vector<8x8xf32> to vector<8x1xf32>
    %185 = vector.extract_strided_slice %175 {offsets = [0, 64], sizes = [8, 64], strides = [1, 1]} : vector<8x512xf32> to vector<8x64xf32>
    %186 = vector.broadcast %184 : vector<8x1xf32> to vector<8x64xf32>
    %187 = arith.mulf %186, %185 : vector<8x64xf32>
    %188 = arith.addf %183, %187 : vector<8x64xf32>
    %189 = vector.extract_strided_slice %76 {offsets = [0, 2], sizes = [8, 1], strides = [1, 1]} : vector<8x8xf32> to vector<8x1xf32>
    %190 = vector.extract_strided_slice %175 {offsets = [0, 128], sizes = [8, 64], strides = [1, 1]} : vector<8x512xf32> to vector<8x64xf32>
    %191 = vector.broadcast %189 : vector<8x1xf32> to vector<8x64xf32>
    %192 = arith.mulf %191, %190 : vector<8x64xf32>
    %193 = arith.addf %188, %192 : vector<8x64xf32>
    %194 = vector.extract_strided_slice %76 {offsets = [0, 3], sizes = [8, 1], strides = [1, 1]} : vector<8x8xf32> to vector<8x1xf32>
    %195 = vector.extract_strided_slice %175 {offsets = [0, 192], sizes = [8, 64], strides = [1, 1]} : vector<8x512xf32> to vector<8x64xf32>
    %196 = vector.broadcast %194 : vector<8x1xf32> to vector<8x64xf32>
    %197 = arith.mulf %196, %195 : vector<8x64xf32>
    %198 = arith.addf %193, %197 : vector<8x64xf32>
    %199 = vector.extract_strided_slice %76 {offsets = [0, 4], sizes = [8, 1], strides = [1, 1]} : vector<8x8xf32> to vector<8x1xf32>
    %200 = vector.extract_strided_slice %175 {offsets = [0, 256], sizes = [8, 64], strides = [1, 1]} : vector<8x512xf32> to vector<8x64xf32>
    %201 = vector.broadcast %199 : vector<8x1xf32> to vector<8x64xf32>
    %202 = arith.mulf %201, %200 : vector<8x64xf32>
    %203 = arith.addf %198, %202 : vector<8x64xf32>
    %204 = vector.extract_strided_slice %76 {offsets = [0, 5], sizes = [8, 1], strides = [1, 1]} : vector<8x8xf32> to vector<8x1xf32>
    %205 = vector.extract_strided_slice %175 {offsets = [0, 320], sizes = [8, 64], strides = [1, 1]} : vector<8x512xf32> to vector<8x64xf32>
    %206 = vector.broadcast %204 : vector<8x1xf32> to vector<8x64xf32>
    %207 = arith.mulf %206, %205 : vector<8x64xf32>
    %208 = arith.addf %203, %207 : vector<8x64xf32>
    %209 = vector.extract_strided_slice %76 {offsets = [0, 6], sizes = [8, 1], strides = [1, 1]} : vector<8x8xf32> to vector<8x1xf32>
    %210 = vector.extract_strided_slice %175 {offsets = [0, 384], sizes = [8, 64], strides = [1, 1]} : vector<8x512xf32> to vector<8x64xf32>
    %211 = vector.broadcast %209 : vector<8x1xf32> to vector<8x64xf32>
    %212 = arith.mulf %211, %210 : vector<8x64xf32>
    %213 = arith.addf %208, %212 : vector<8x64xf32>
    %214 = vector.extract_strided_slice %76 {offsets = [0, 7], sizes = [8, 1], strides = [1, 1]} : vector<8x8xf32> to vector<8x1xf32>
    %215 = vector.extract_strided_slice %175 {offsets = [0, 448], sizes = [8, 64], strides = [1, 1]} : vector<8x512xf32> to vector<8x64xf32>
    %216 = vector.broadcast %214 : vector<8x1xf32> to vector<8x64xf32>
    %217 = arith.mulf %216, %215 : vector<8x64xf32>
    %218 = arith.addf %213, %217 : vector<8x64xf32>
    %219 = arith.negf %21 : vector<8x64xf32>
    %220 = math.exp %219 : vector<8x64xf32>
    %cst_75 = arith.constant 1.000000e+00 : f32
    %221 = vector.broadcast %cst_75 : f32 to vector<8x64xf32>
    %222 = arith.addf %221, %220 : vector<8x64xf32>
    %223 = arith.divf %221, %222 : vector<8x64xf32>
    %224 = arith.mulf %21, %223 : vector<8x64xf32>
    %225 = arith.mulf %218, %224 : vector<8x64xf32>
    %c0_76 = arith.constant 0 : index
    %c0_77 = arith.constant 0 : index
    %226 = vector.load %arg17[%c0_76, %c0_77] : memref<64x32xbf16, #tpu.memory_space<vmem>>, vector<64x32xbf16>
    %227 = arith.truncf %225 : vector<8x64xf32> to vector<8x64xbf16>
    %cst_78 = arith.constant dense<0.000000e+00> : vector<8x32xf32>
    %228 = tpu.matmul %227, %226, %cst_78 {dimension_numbers = #tpu.dot_dimension_numbers<[1], [0], [0], [1], [0, 0, 1, 1], [], []>} : vector<8x64xbf16>, vector<64x32xbf16>, vector<8x32xf32> -> vector<8x32xf32>
    %c0_79 = arith.constant 0 : index
    %c0_80 = arith.constant 0 : index
    %229 = vector.load %arg18[%c0_79, %c0_80] : memref<1x32xf32, #tpu.memory_space<vmem>>, vector<1x32xf32>
    %230 = vector.broadcast %229 : vector<1x32xf32> to vector<8x32xf32>
    %231 = arith.addf %228, %230 : vector<8x32xf32>
    %232 = arith.addf %13, %231 : vector<8x32xf32>
    %c0_81 = arith.constant 0 : index
    %c0_82 = arith.constant 0 : index
    %233 = vector.load %arg19[%c0_81, %c0_82] : memref<1x32xf32, #tpu.memory_space<vmem>>, vector<1x32xf32>
    %c0_83 = arith.constant 0 : index
    %c0_84 = arith.constant 0 : index
    %234 = vector.load %arg20[%c0_83, %c0_84] : memref<1x32xf32, #tpu.memory_space<vmem>>, vector<1x32xf32>
    %cst_85 = arith.constant dense<0.000000e+00> : vector<8xf32>
    %235 = vector.multi_reduction <add>, %232, %cst_85 [1] : vector<8x32xf32> to vector<8xf32>
    %236 = vector.shape_cast %235 : vector<8xf32> to vector<8x1xf32>
    %cst_86 = arith.constant 3.200000e+01 : f32
    %237 = vector.broadcast %cst_86 : f32 to vector<8x1xf32>
    %238 = arith.divf %236, %237 : vector<8x1xf32>
    %239 = vector.broadcast %238 : vector<8x1xf32> to vector<8x32xf32>
    %240 = arith.subf %232, %239 : vector<8x32xf32>
    %241 = arith.mulf %240, %240 : vector<8x32xf32>
    %cst_87 = arith.constant dense<0.000000e+00> : vector<8xf32>
    %242 = vector.multi_reduction <add>, %241, %cst_87 [1] : vector<8x32xf32> to vector<8xf32>
    %243 = vector.shape_cast %242 : vector<8xf32> to vector<8x1xf32>
    %cst_88 = arith.constant 3.200000e+01 : f32
    %244 = vector.broadcast %cst_88 : f32 to vector<8x1xf32>
    %245 = arith.divf %243, %244 : vector<8x1xf32>
    %cst_89 = arith.constant 9.99999974E-6 : f32
    %246 = vector.broadcast %cst_89 : f32 to vector<8x1xf32>
    %247 = arith.addf %245, %246 : vector<8x1xf32>
    %248 = math.rsqrt %247 : vector<8x1xf32>
    %249 = vector.broadcast %248 : vector<8x1xf32> to vector<8x32xf32>
    %250 = arith.mulf %240, %249 : vector<8x32xf32>
    %251 = vector.broadcast %233 : vector<1x32xf32> to vector<8x32xf32>
    %252 = arith.mulf %250, %251 : vector<8x32xf32>
    %253 = vector.broadcast %234 : vector<1x32xf32> to vector<8x32xf32>
    %254 = arith.addf %252, %253 : vector<8x32xf32>
    %c0_90 = arith.constant 0 : index
    %c0_91 = arith.constant 0 : index
    %c0_92 = arith.constant 0 : index
    %255 = vector.load %arg21[%c0_90, %c0_91, %c0_92] : memref<2x32x96xbf16, #tpu.memory_space<vmem>>, vector<1x32x96xbf16>
    %256 = vector.shape_cast %255 : vector<1x32x96xbf16> to vector<32x96xbf16>
    %257 = arith.truncf %254 : vector<8x32xf32> to vector<8x32xbf16>
    %cst_93 = arith.constant dense<0.000000e+00> : vector<8x96xf32>
    %258 = tpu.matmul %257, %256, %cst_93 {dimension_numbers = #tpu.dot_dimension_numbers<[1], [0], [0], [1], [0, 0, 1, 1], [], []>} : vector<8x32xbf16>, vector<32x96xbf16>, vector<8x96xf32> -> vector<8x96xf32>
    %c0_94 = arith.constant 0 : index
    %c0_95 = arith.constant 0 : index
    %c0_96 = arith.constant 0 : index
    %259 = vector.load %arg22[%c0_94, %c0_95, %c0_96] : memref<2x1x96xf32, #tpu.memory_space<vmem>>, vector<1x1x96xf32>
    %260 = vector.shape_cast %259 : vector<1x1x96xf32> to vector<1x96xf32>
    %261 = vector.broadcast %260 : vector<1x96xf32> to vector<8x96xf32>
    %262 = arith.addf %258, %261 : vector<8x96xf32>
    %263 = vector.extract_strided_slice %262 {offsets = [0, 0], sizes = [8, 8], strides = [1, 1]} : vector<8x96xf32> to vector<8x8xf32>
    %264 = vector.extract_strided_slice %262 {offsets = [0, 32], sizes = [8, 8], strides = [1, 1]} : vector<8x96xf32> to vector<8x8xf32>
    %265 = vector.extract_strided_slice %262 {offsets = [0, 64], sizes = [8, 8], strides = [1, 1]} : vector<8x96xf32> to vector<8x8xf32>
    %266 = arith.truncf %263 : vector<8x8xf32> to vector<8x8xbf16>
    %267 = arith.truncf %264 : vector<8x8xf32> to vector<8x8xbf16>
    %cst_97 = arith.constant dense<0.000000e+00> : vector<8x8xf32>
    %268 = tpu.matmul %266, %267, %cst_97 {dimension_numbers = #tpu.dot_dimension_numbers<[1], [1], [0], [0], [0, 0, 1, 0], [], []>} : vector<8x8xbf16>, vector<8x8xbf16>, vector<8x8xf32> -> vector<8x8xf32>
    %cst_98 = arith.constant 0.353553385 : f32
    %269 = vector.broadcast %cst_98 : f32 to vector<8x8xf32>
    %270 = arith.mulf %268, %269 : vector<8x8xf32>
    %271 = vector.broadcast %3 : vector<1x8xf32> to vector<8x8xf32>
    %272 = arith.addf %270, %271 : vector<8x8xf32>
    %cst_99 = arith.constant dense<0xFF800000> : vector<8xf32>
    %273 = vector.multi_reduction <maximumf>, %272, %cst_99 [1] : vector<8x8xf32> to vector<8xf32>
    %274 = vector.shape_cast %273 : vector<8xf32> to vector<8x1xf32>
    %275 = vector.broadcast %274 : vector<8x1xf32> to vector<8x8xf32>
    %276 = arith.subf %272, %275 : vector<8x8xf32>
    %277 = math.exp %276 : vector<8x8xf32>
    %cst_100 = arith.constant dense<0.000000e+00> : vector<8xf32>
    %278 = vector.multi_reduction <add>, %277, %cst_100 [1] : vector<8x8xf32> to vector<8xf32>
    %279 = vector.shape_cast %278 : vector<8xf32> to vector<8x1xf32>
    %280 = tpu.reciprocal %279 {approx = true} : vector<8x1xf32> -> vector<8x1xf32>
    %281 = vector.broadcast %280 : vector<8x1xf32> to vector<8x8xf32>
    %282 = arith.mulf %277, %281 : vector<8x8xf32>
    %283 = arith.truncf %282 : vector<8x8xf32> to vector<8x8xbf16>
    %284 = arith.truncf %265 : vector<8x8xf32> to vector<8x8xbf16>
    %cst_101 = arith.constant dense<0.000000e+00> : vector<8x8xf32>
    %285 = tpu.matmul %283, %284, %cst_101 {dimension_numbers = #tpu.dot_dimension_numbers<[1], [0], [0], [1], [0, 0, 1, 1], [], []>} : vector<8x8xbf16>, vector<8x8xbf16>, vector<8x8xf32> -> vector<8x8xf32>
    %286 = vector.extract_strided_slice %262 {offsets = [0, 8], sizes = [8, 8], strides = [1, 1]} : vector<8x96xf32> to vector<8x8xf32>
    %287 = vector.extract_strided_slice %262 {offsets = [0, 40], sizes = [8, 8], strides = [1, 1]} : vector<8x96xf32> to vector<8x8xf32>
    %288 = vector.extract_strided_slice %262 {offsets = [0, 72], sizes = [8, 8], strides = [1, 1]} : vector<8x96xf32> to vector<8x8xf32>
    %289 = arith.truncf %286 : vector<8x8xf32> to vector<8x8xbf16>
    %290 = arith.truncf %287 : vector<8x8xf32> to vector<8x8xbf16>
    %cst_102 = arith.constant dense<0.000000e+00> : vector<8x8xf32>
    %291 = tpu.matmul %289, %290, %cst_102 {dimension_numbers = #tpu.dot_dimension_numbers<[1], [1], [0], [0], [0, 0, 1, 0], [], []>} : vector<8x8xbf16>, vector<8x8xbf16>, vector<8x8xf32> -> vector<8x8xf32>
    %cst_103 = arith.constant 0.353553385 : f32
    %292 = vector.broadcast %cst_103 : f32 to vector<8x8xf32>
    %293 = arith.mulf %291, %292 : vector<8x8xf32>
    %294 = vector.broadcast %3 : vector<1x8xf32> to vector<8x8xf32>
    %295 = arith.addf %293, %294 : vector<8x8xf32>
    %cst_104 = arith.constant dense<0xFF800000> : vector<8xf32>
    %296 = vector.multi_reduction <maximumf>, %295, %cst_104 [1] : vector<8x8xf32> to vector<8xf32>
    %297 = vector.shape_cast %296 : vector<8xf32> to vector<8x1xf32>
    %298 = vector.broadcast %297 : vector<8x1xf32> to vector<8x8xf32>
    %299 = arith.subf %295, %298 : vector<8x8xf32>
    %300 = math.exp %299 : vector<8x8xf32>
    %cst_105 = arith.constant dense<0.000000e+00> : vector<8xf32>
    %301 = vector.multi_reduction <add>, %300, %cst_105 [1] : vector<8x8xf32> to vector<8xf32>
    %302 = vector.shape_cast %301 : vector<8xf32> to vector<8x1xf32>
    %303 = tpu.reciprocal %302 {approx = true} : vector<8x1xf32> -> vector<8x1xf32>
    %304 = vector.broadcast %303 : vector<8x1xf32> to vector<8x8xf32>
    %305 = arith.mulf %300, %304 : vector<8x8xf32>
    %306 = arith.truncf %305 : vector<8x8xf32> to vector<8x8xbf16>
    %307 = arith.truncf %288 : vector<8x8xf32> to vector<8x8xbf16>
    %cst_106 = arith.constant dense<0.000000e+00> : vector<8x8xf32>
    %308 = tpu.matmul %306, %307, %cst_106 {dimension_numbers = #tpu.dot_dimension_numbers<[1], [0], [0], [1], [0, 0, 1, 1], [], []>} : vector<8x8xbf16>, vector<8x8xbf16>, vector<8x8xf32> -> vector<8x8xf32>
    %309 = vector.extract_strided_slice %262 {offsets = [0, 16], sizes = [8, 8], strides = [1, 1]} : vector<8x96xf32> to vector<8x8xf32>
    %310 = vector.extract_strided_slice %262 {offsets = [0, 48], sizes = [8, 8], strides = [1, 1]} : vector<8x96xf32> to vector<8x8xf32>
    %311 = vector.extract_strided_slice %262 {offsets = [0, 80], sizes = [8, 8], strides = [1, 1]} : vector<8x96xf32> to vector<8x8xf32>
    %312 = arith.truncf %309 : vector<8x8xf32> to vector<8x8xbf16>
    %313 = arith.truncf %310 : vector<8x8xf32> to vector<8x8xbf16>
    %cst_107 = arith.constant dense<0.000000e+00> : vector<8x8xf32>
    %314 = tpu.matmul %312, %313, %cst_107 {dimension_numbers = #tpu.dot_dimension_numbers<[1], [1], [0], [0], [0, 0, 1, 0], [], []>} : vector<8x8xbf16>, vector<8x8xbf16>, vector<8x8xf32> -> vector<8x8xf32>
    %cst_108 = arith.constant 0.353553385 : f32
    %315 = vector.broadcast %cst_108 : f32 to vector<8x8xf32>
    %316 = arith.mulf %314, %315 : vector<8x8xf32>
    %317 = vector.broadcast %3 : vector<1x8xf32> to vector<8x8xf32>
    %318 = arith.addf %316, %317 : vector<8x8xf32>
    %cst_109 = arith.constant dense<0xFF800000> : vector<8xf32>
    %319 = vector.multi_reduction <maximumf>, %318, %cst_109 [1] : vector<8x8xf32> to vector<8xf32>
    %320 = vector.shape_cast %319 : vector<8xf32> to vector<8x1xf32>
    %321 = vector.broadcast %320 : vector<8x1xf32> to vector<8x8xf32>
    %322 = arith.subf %318, %321 : vector<8x8xf32>
    %323 = math.exp %322 : vector<8x8xf32>
    %cst_110 = arith.constant dense<0.000000e+00> : vector<8xf32>
    %324 = vector.multi_reduction <add>, %323, %cst_110 [1] : vector<8x8xf32> to vector<8xf32>
    %325 = vector.shape_cast %324 : vector<8xf32> to vector<8x1xf32>
    %326 = tpu.reciprocal %325 {approx = true} : vector<8x1xf32> -> vector<8x1xf32>
    %327 = vector.broadcast %326 : vector<8x1xf32> to vector<8x8xf32>
    %328 = arith.mulf %323, %327 : vector<8x8xf32>
    %329 = arith.truncf %328 : vector<8x8xf32> to vector<8x8xbf16>
    %330 = arith.truncf %311 : vector<8x8xf32> to vector<8x8xbf16>
    %cst_111 = arith.constant dense<0.000000e+00> : vector<8x8xf32>
    %331 = tpu.matmul %329, %330, %cst_111 {dimension_numbers = #tpu.dot_dimension_numbers<[1], [0], [0], [1], [0, 0, 1, 1], [], []>} : vector<8x8xbf16>, vector<8x8xbf16>, vector<8x8xf32> -> vector<8x8xf32>
    %332 = vector.extract_strided_slice %262 {offsets = [0, 24], sizes = [8, 8], strides = [1, 1]} : vector<8x96xf32> to vector<8x8xf32>
    %333 = vector.extract_strided_slice %262 {offsets = [0, 56], sizes = [8, 8], strides = [1, 1]} : vector<8x96xf32> to vector<8x8xf32>
    %334 = vector.extract_strided_slice %262 {offsets = [0, 88], sizes = [8, 8], strides = [1, 1]} : vector<8x96xf32> to vector<8x8xf32>
    %335 = arith.truncf %332 : vector<8x8xf32> to vector<8x8xbf16>
    %336 = arith.truncf %333 : vector<8x8xf32> to vector<8x8xbf16>
    %cst_112 = arith.constant dense<0.000000e+00> : vector<8x8xf32>
    %337 = tpu.matmul %335, %336, %cst_112 {dimension_numbers = #tpu.dot_dimension_numbers<[1], [1], [0], [0], [0, 0, 1, 0], [], []>} : vector<8x8xbf16>, vector<8x8xbf16>, vector<8x8xf32> -> vector<8x8xf32>
    %cst_113 = arith.constant 0.353553385 : f32
    %338 = vector.broadcast %cst_113 : f32 to vector<8x8xf32>
    %339 = arith.mulf %337, %338 : vector<8x8xf32>
    %340 = vector.broadcast %3 : vector<1x8xf32> to vector<8x8xf32>
    %341 = arith.addf %339, %340 : vector<8x8xf32>
    %cst_114 = arith.constant dense<0xFF800000> : vector<8xf32>
    %342 = vector.multi_reduction <maximumf>, %341, %cst_114 [1] : vector<8x8xf32> to vector<8xf32>
    %343 = vector.shape_cast %342 : vector<8xf32> to vector<8x1xf32>
    %344 = vector.broadcast %343 : vector<8x1xf32> to vector<8x8xf32>
    %345 = arith.subf %341, %344 : vector<8x8xf32>
    %346 = math.exp %345 : vector<8x8xf32>
    %cst_115 = arith.constant dense<0.000000e+00> : vector<8xf32>
    %347 = vector.multi_reduction <add>, %346, %cst_115 [1] : vector<8x8xf32> to vector<8xf32>
    %348 = vector.shape_cast %347 : vector<8xf32> to vector<8x1xf32>
    %349 = tpu.reciprocal %348 {approx = true} : vector<8x1xf32> -> vector<8x1xf32>
    %350 = vector.broadcast %349 : vector<8x1xf32> to vector<8x8xf32>
    %351 = arith.mulf %346, %350 : vector<8x8xf32>
    %352 = arith.truncf %351 : vector<8x8xf32> to vector<8x8xbf16>
    %353 = arith.truncf %334 : vector<8x8xf32> to vector<8x8xbf16>
    %cst_116 = arith.constant dense<0.000000e+00> : vector<8x8xf32>
    %354 = tpu.matmul %352, %353, %cst_116 {dimension_numbers = #tpu.dot_dimension_numbers<[1], [0], [0], [1], [0, 0, 1, 1], [], []>} : vector<8x8xbf16>, vector<8x8xbf16>, vector<8x8xf32> -> vector<8x8xf32>
    %355 = tpu.concatenate %285, %308, %331, %354 in 1 : vector<8x8xf32>, vector<8x8xf32>, vector<8x8xf32>, vector<8x8xf32> -> vector<8x32xf32>
    %c0_117 = arith.constant 0 : index
    %c0_118 = arith.constant 0 : index
    %c0_119 = arith.constant 0 : index
    %356 = vector.load %arg23[%c0_117, %c0_118, %c0_119] : memref<2x32x32xbf16, #tpu.memory_space<vmem>>, vector<1x32x32xbf16>
    %357 = vector.shape_cast %356 : vector<1x32x32xbf16> to vector<32x32xbf16>
    %358 = arith.truncf %355 : vector<8x32xf32> to vector<8x32xbf16>
    %cst_120 = arith.constant dense<0.000000e+00> : vector<8x32xf32>
    %359 = tpu.matmul %358, %357, %cst_120 {dimension_numbers = #tpu.dot_dimension_numbers<[1], [0], [0], [1], [0, 0, 1, 1], [], []>} : vector<8x32xbf16>, vector<32x32xbf16>, vector<8x32xf32> -> vector<8x32xf32>
    %c0_121 = arith.constant 0 : index
    %c0_122 = arith.constant 0 : index
    %c0_123 = arith.constant 0 : index
    %360 = vector.load %arg24[%c0_121, %c0_122, %c0_123] : memref<2x1x32xf32, #tpu.memory_space<vmem>>, vector<1x1x32xf32>
    %361 = vector.shape_cast %360 : vector<1x1x32xf32> to vector<1x32xf32>
    %362 = vector.broadcast %361 : vector<1x32xf32> to vector<8x32xf32>
    %363 = arith.addf %359, %362 : vector<8x32xf32>
    %364 = arith.addf %363, %254 : vector<8x32xf32>
    %c0_124 = arith.constant 0 : index
    %c0_125 = arith.constant 0 : index
    %c0_126 = arith.constant 0 : index
    %365 = vector.load %arg25[%c0_124, %c0_125, %c0_126] : memref<2x1x32xf32, #tpu.memory_space<vmem>>, vector<1x1x32xf32>
    %366 = vector.shape_cast %365 : vector<1x1x32xf32> to vector<1x32xf32>
    %c0_127 = arith.constant 0 : index
    %c0_128 = arith.constant 0 : index
    %c0_129 = arith.constant 0 : index
    %367 = vector.load %arg26[%c0_127, %c0_128, %c0_129] : memref<2x1x32xf32, #tpu.memory_space<vmem>>, vector<1x1x32xf32>
    %368 = vector.shape_cast %367 : vector<1x1x32xf32> to vector<1x32xf32>
    %cst_130 = arith.constant dense<0.000000e+00> : vector<8xf32>
    %369 = vector.multi_reduction <add>, %364, %cst_130 [1] : vector<8x32xf32> to vector<8xf32>
    %370 = vector.shape_cast %369 : vector<8xf32> to vector<8x1xf32>
    %cst_131 = arith.constant 3.200000e+01 : f32
    %371 = vector.broadcast %cst_131 : f32 to vector<8x1xf32>
    %372 = arith.divf %370, %371 : vector<8x1xf32>
    %373 = vector.broadcast %372 : vector<8x1xf32> to vector<8x32xf32>
    %374 = arith.subf %364, %373 : vector<8x32xf32>
    %375 = arith.mulf %374, %374 : vector<8x32xf32>
    %cst_132 = arith.constant dense<0.000000e+00> : vector<8xf32>
    %376 = vector.multi_reduction <add>, %375, %cst_132 [1] : vector<8x32xf32> to vector<8xf32>
    %377 = vector.shape_cast %376 : vector<8xf32> to vector<8x1xf32>
    %cst_133 = arith.constant 3.200000e+01 : f32
    %378 = vector.broadcast %cst_133 : f32 to vector<8x1xf32>
    %379 = arith.divf %377, %378 : vector<8x1xf32>
    %cst_134 = arith.constant 9.99999974E-6 : f32
    %380 = vector.broadcast %cst_134 : f32 to vector<8x1xf32>
    %381 = arith.addf %379, %380 : vector<8x1xf32>
    %382 = math.rsqrt %381 : vector<8x1xf32>
    %383 = vector.broadcast %382 : vector<8x1xf32> to vector<8x32xf32>
    %384 = arith.mulf %374, %383 : vector<8x32xf32>
    %385 = vector.broadcast %366 : vector<1x32xf32> to vector<8x32xf32>
    %386 = arith.mulf %384, %385 : vector<8x32xf32>
    %387 = vector.broadcast %368 : vector<1x32xf32> to vector<8x32xf32>
    %388 = arith.addf %386, %387 : vector<8x32xf32>
    %389 = vector.broadcast %5 : vector<8x1xf32> to vector<8x32xf32>
    %390 = arith.mulf %388, %389 : vector<8x32xf32>
    %c0_135 = arith.constant 0 : index
    %c0_136 = arith.constant 0 : index
    %c0_137 = arith.constant 0 : index
    %391 = vector.load %arg28[%c0_135, %c0_136, %c0_137] : memref<2x1x16xf32, #tpu.memory_space<vmem>>, vector<1x1x16xf32>
    %392 = vector.shape_cast %391 : vector<1x1x16xf32> to vector<1x16xf32>
    %cst_138 = arith.constant 0.000000e+00 : f32
    %393 = vector.broadcast %cst_138 : f32 to vector<1x32xf32>
    %394 = vector.extract_strided_slice %390 {offsets = [0, 0], sizes = [7, 32], strides = [1, 1]} : vector<8x32xf32> to vector<7x32xf32>
    %395 = tpu.concatenate %393, %394 in 0 : vector<1x32xf32>, vector<7x32xf32> -> vector<8x32xf32>
    %c0_139 = arith.constant 0 : index
    %c0_140 = arith.constant 0 : index
    %c0_141 = arith.constant 0 : index
    %396 = vector.load %arg27[%c0_139, %c0_140, %c0_141] : memref<6x32x16xbf16, #tpu.memory_space<vmem>>, vector<1x32x16xbf16>
    %397 = vector.shape_cast %396 : vector<1x32x16xbf16> to vector<32x16xbf16>
    %398 = arith.truncf %395 : vector<8x32xf32> to vector<8x32xbf16>
    %cst_142 = arith.constant dense<0.000000e+00> : vector<8x16xf32>
    %399 = tpu.matmul %398, %397, %cst_142 {dimension_numbers = #tpu.dot_dimension_numbers<[1], [0], [0], [1], [0, 0, 1, 1], [], []>} : vector<8x32xbf16>, vector<32x16xbf16>, vector<8x16xf32> -> vector<8x16xf32>
    %400 = vector.broadcast %392 : vector<1x16xf32> to vector<8x16xf32>
    %401 = arith.addf %400, %399 : vector<8x16xf32>
    %c1_143 = arith.constant 1 : index
    %c0_144 = arith.constant 0 : index
    %c0_145 = arith.constant 0 : index
    %402 = vector.load %arg27[%c1_143, %c0_144, %c0_145] : memref<6x32x16xbf16, #tpu.memory_space<vmem>>, vector<1x32x16xbf16>
    %403 = vector.shape_cast %402 : vector<1x32x16xbf16> to vector<32x16xbf16>
    %404 = arith.truncf %390 : vector<8x32xf32> to vector<8x32xbf16>
    %cst_146 = arith.constant dense<0.000000e+00> : vector<8x16xf32>
    %405 = tpu.matmul %404, %403, %cst_146 {dimension_numbers = #tpu.dot_dimension_numbers<[1], [0], [0], [1], [0, 0, 1, 1], [], []>} : vector<8x32xbf16>, vector<32x16xbf16>, vector<8x16xf32> -> vector<8x16xf32>
    %406 = arith.addf %401, %405 : vector<8x16xf32>
    %cst_147 = arith.constant 0.000000e+00 : f32
    %407 = vector.broadcast %cst_147 : f32 to vector<1x32xf32>
    %408 = vector.extract_strided_slice %390 {offsets = [1, 0], sizes = [7, 32], strides = [1, 1]} : vector<8x32xf32> to vector<7x32xf32>
    %409 = tpu.concatenate %408, %407 in 0 : vector<7x32xf32>, vector<1x32xf32> -> vector<8x32xf32>
    %c2_148 = arith.constant 2 : index
    %c0_149 = arith.constant 0 : index
    %c0_150 = arith.constant 0 : index
    %410 = vector.load %arg27[%c2_148, %c0_149, %c0_150] : memref<6x32x16xbf16, #tpu.memory_space<vmem>>, vector<1x32x16xbf16>
    %411 = vector.shape_cast %410 : vector<1x32x16xbf16> to vector<32x16xbf16>
    %412 = arith.truncf %409 : vector<8x32xf32> to vector<8x32xbf16>
    %cst_151 = arith.constant dense<0.000000e+00> : vector<8x16xf32>
    %413 = tpu.matmul %412, %411, %cst_151 {dimension_numbers = #tpu.dot_dimension_numbers<[1], [0], [0], [1], [0, 0, 1, 1], [], []>} : vector<8x32xbf16>, vector<32x16xbf16>, vector<8x16xf32> -> vector<8x16xf32>
    %414 = arith.addf %406, %413 : vector<8x16xf32>
    %cst_152 = arith.constant 0.000000e+00 : f32
    %415 = vector.broadcast %cst_152 : f32 to vector<8x16xf32>
    %416 = arith.maximumf %414, %415 : vector<8x16xf32>
    %c0_153 = arith.constant 0 : index
    %c0_154 = arith.constant 0 : index
    %c0_155 = arith.constant 0 : index
    %417 = vector.load %arg30[%c0_153, %c0_154, %c0_155] : memref<2x1x32xf32, #tpu.memory_space<vmem>>, vector<1x1x32xf32>
    %418 = vector.shape_cast %417 : vector<1x1x32xf32> to vector<1x32xf32>
    %cst_156 = arith.constant 0.000000e+00 : f32
    %419 = vector.broadcast %cst_156 : f32 to vector<1x16xf32>
    %420 = vector.extract_strided_slice %416 {offsets = [0, 0], sizes = [7, 16], strides = [1, 1]} : vector<8x16xf32> to vector<7x16xf32>
    %421 = tpu.concatenate %419, %420 in 0 : vector<1x16xf32>, vector<7x16xf32> -> vector<8x16xf32>
    %c0_157 = arith.constant 0 : index
    %c0_158 = arith.constant 0 : index
    %c0_159 = arith.constant 0 : index
    %422 = vector.load %arg29[%c0_157, %c0_158, %c0_159] : memref<6x16x32xbf16, #tpu.memory_space<vmem>>, vector<1x16x32xbf16>
    %423 = vector.shape_cast %422 : vector<1x16x32xbf16> to vector<16x32xbf16>
    %424 = arith.truncf %421 : vector<8x16xf32> to vector<8x16xbf16>
    %cst_160 = arith.constant dense<0.000000e+00> : vector<8x32xf32>
    %425 = tpu.matmul %424, %423, %cst_160 {dimension_numbers = #tpu.dot_dimension_numbers<[1], [0], [0], [1], [0, 0, 1, 1], [], []>} : vector<8x16xbf16>, vector<16x32xbf16>, vector<8x32xf32> -> vector<8x32xf32>
    %426 = vector.broadcast %418 : vector<1x32xf32> to vector<8x32xf32>
    %427 = arith.addf %426, %425 : vector<8x32xf32>
    %c1_161 = arith.constant 1 : index
    %c0_162 = arith.constant 0 : index
    %c0_163 = arith.constant 0 : index
    %428 = vector.load %arg29[%c1_161, %c0_162, %c0_163] : memref<6x16x32xbf16, #tpu.memory_space<vmem>>, vector<1x16x32xbf16>
    %429 = vector.shape_cast %428 : vector<1x16x32xbf16> to vector<16x32xbf16>
    %430 = arith.truncf %416 : vector<8x16xf32> to vector<8x16xbf16>
    %cst_164 = arith.constant dense<0.000000e+00> : vector<8x32xf32>
    %431 = tpu.matmul %430, %429, %cst_164 {dimension_numbers = #tpu.dot_dimension_numbers<[1], [0], [0], [1], [0, 0, 1, 1], [], []>} : vector<8x16xbf16>, vector<16x32xbf16>, vector<8x32xf32> -> vector<8x32xf32>
    %432 = arith.addf %427, %431 : vector<8x32xf32>
    %cst_165 = arith.constant 0.000000e+00 : f32
    %433 = vector.broadcast %cst_165 : f32 to vector<1x16xf32>
    %434 = vector.extract_strided_slice %416 {offsets = [1, 0], sizes = [7, 16], strides = [1, 1]} : vector<8x16xf32> to vector<7x16xf32>
    %435 = tpu.concatenate %434, %433 in 0 : vector<7x16xf32>, vector<1x16xf32> -> vector<8x16xf32>
    %c2_166 = arith.constant 2 : index
    %c0_167 = arith.constant 0 : index
    %c0_168 = arith.constant 0 : index
    %436 = vector.load %arg29[%c2_166, %c0_167, %c0_168] : memref<6x16x32xbf16, #tpu.memory_space<vmem>>, vector<1x16x32xbf16>
    %437 = vector.shape_cast %436 : vector<1x16x32xbf16> to vector<16x32xbf16>
    %438 = arith.truncf %435 : vector<8x16xf32> to vector<8x16xbf16>
    %cst_169 = arith.constant dense<0.000000e+00> : vector<8x32xf32>
    %439 = tpu.matmul %438, %437, %cst_169 {dimension_numbers = #tpu.dot_dimension_numbers<[1], [0], [0], [1], [0, 0, 1, 1], [], []>} : vector<8x16xbf16>, vector<16x32xbf16>, vector<8x32xf32> -> vector<8x32xf32>
    %440 = arith.addf %432, %439 : vector<8x32xf32>
    %441 = arith.addf %440, %390 : vector<8x32xf32>
    %c0_170 = arith.constant 0 : index
    %c0_171 = arith.constant 0 : index
    %c0_172 = arith.constant 0 : index
    %442 = vector.load %arg31[%c0_170, %c0_171, %c0_172] : memref<2x1x32xf32, #tpu.memory_space<vmem>>, vector<1x1x32xf32>
    %443 = vector.shape_cast %442 : vector<1x1x32xf32> to vector<1x32xf32>
    %c0_173 = arith.constant 0 : index
    %c0_174 = arith.constant 0 : index
    %c0_175 = arith.constant 0 : index
    %444 = vector.load %arg32[%c0_173, %c0_174, %c0_175] : memref<2x1x32xf32, #tpu.memory_space<vmem>>, vector<1x1x32xf32>
    %445 = vector.shape_cast %444 : vector<1x1x32xf32> to vector<1x32xf32>
    %cst_176 = arith.constant dense<0.000000e+00> : vector<8xf32>
    %446 = vector.multi_reduction <add>, %441, %cst_176 [1] : vector<8x32xf32> to vector<8xf32>
    %447 = vector.shape_cast %446 : vector<8xf32> to vector<8x1xf32>
    %cst_177 = arith.constant 3.200000e+01 : f32
    %448 = vector.broadcast %cst_177 : f32 to vector<8x1xf32>
    %449 = arith.divf %447, %448 : vector<8x1xf32>
    %450 = vector.broadcast %449 : vector<8x1xf32> to vector<8x32xf32>
    %451 = arith.subf %441, %450 : vector<8x32xf32>
    %452 = arith.mulf %451, %451 : vector<8x32xf32>
    %cst_178 = arith.constant dense<0.000000e+00> : vector<8xf32>
    %453 = vector.multi_reduction <add>, %452, %cst_178 [1] : vector<8x32xf32> to vector<8xf32>
    %454 = vector.shape_cast %453 : vector<8xf32> to vector<8x1xf32>
    %cst_179 = arith.constant 3.200000e+01 : f32
    %455 = vector.broadcast %cst_179 : f32 to vector<8x1xf32>
    %456 = arith.divf %454, %455 : vector<8x1xf32>
    %cst_180 = arith.constant 9.99999974E-6 : f32
    %457 = vector.broadcast %cst_180 : f32 to vector<8x1xf32>
    %458 = arith.addf %456, %457 : vector<8x1xf32>
    %459 = math.rsqrt %458 : vector<8x1xf32>
    %460 = vector.broadcast %459 : vector<8x1xf32> to vector<8x32xf32>
    %461 = arith.mulf %451, %460 : vector<8x32xf32>
    %462 = vector.broadcast %443 : vector<1x32xf32> to vector<8x32xf32>
    %463 = arith.mulf %461, %462 : vector<8x32xf32>
    %464 = vector.broadcast %445 : vector<1x32xf32> to vector<8x32xf32>
    %465 = arith.addf %463, %464 : vector<8x32xf32>
    %466 = vector.broadcast %5 : vector<8x1xf32> to vector<8x32xf32>
    %467 = arith.mulf %465, %466 : vector<8x32xf32>
    %c1_181 = arith.constant 1 : index
    %c0_182 = arith.constant 0 : index
    %c0_183 = arith.constant 0 : index
    %468 = vector.load %arg21[%c1_181, %c0_182, %c0_183] : memref<2x32x96xbf16, #tpu.memory_space<vmem>>, vector<1x32x96xbf16>
    %469 = vector.shape_cast %468 : vector<1x32x96xbf16> to vector<32x96xbf16>
    %470 = arith.truncf %467 : vector<8x32xf32> to vector<8x32xbf16>
    %cst_184 = arith.constant dense<0.000000e+00> : vector<8x96xf32>
    %471 = tpu.matmul %470, %469, %cst_184 {dimension_numbers = #tpu.dot_dimension_numbers<[1], [0], [0], [1], [0, 0, 1, 1], [], []>} : vector<8x32xbf16>, vector<32x96xbf16>, vector<8x96xf32> -> vector<8x96xf32>
    %c1_185 = arith.constant 1 : index
    %c0_186 = arith.constant 0 : index
    %c0_187 = arith.constant 0 : index
    %472 = vector.load %arg22[%c1_185, %c0_186, %c0_187] : memref<2x1x96xf32, #tpu.memory_space<vmem>>, vector<1x1x96xf32>
    %473 = vector.shape_cast %472 : vector<1x1x96xf32> to vector<1x96xf32>
    %474 = vector.broadcast %473 : vector<1x96xf32> to vector<8x96xf32>
    %475 = arith.addf %471, %474 : vector<8x96xf32>
    %476 = vector.extract_strided_slice %475 {offsets = [0, 0], sizes = [8, 8], strides = [1, 1]} : vector<8x96xf32> to vector<8x8xf32>
    %477 = vector.extract_strided_slice %475 {offsets = [0, 32], sizes = [8, 8], strides = [1, 1]} : vector<8x96xf32> to vector<8x8xf32>
    %478 = vector.extract_strided_slice %475 {offsets = [0, 64], sizes = [8, 8], strides = [1, 1]} : vector<8x96xf32> to vector<8x8xf32>
    %479 = arith.truncf %476 : vector<8x8xf32> to vector<8x8xbf16>
    %480 = arith.truncf %477 : vector<8x8xf32> to vector<8x8xbf16>
    %cst_188 = arith.constant dense<0.000000e+00> : vector<8x8xf32>
    %481 = tpu.matmul %479, %480, %cst_188 {dimension_numbers = #tpu.dot_dimension_numbers<[1], [1], [0], [0], [0, 0, 1, 0], [], []>} : vector<8x8xbf16>, vector<8x8xbf16>, vector<8x8xf32> -> vector<8x8xf32>
    %cst_189 = arith.constant 0.353553385 : f32
    %482 = vector.broadcast %cst_189 : f32 to vector<8x8xf32>
    %483 = arith.mulf %481, %482 : vector<8x8xf32>
    %484 = vector.broadcast %3 : vector<1x8xf32> to vector<8x8xf32>
    %485 = arith.addf %483, %484 : vector<8x8xf32>
    %cst_190 = arith.constant dense<0xFF800000> : vector<8xf32>
    %486 = vector.multi_reduction <maximumf>, %485, %cst_190 [1] : vector<8x8xf32> to vector<8xf32>
    %487 = vector.shape_cast %486 : vector<8xf32> to vector<8x1xf32>
    %488 = vector.broadcast %487 : vector<8x1xf32> to vector<8x8xf32>
    %489 = arith.subf %485, %488 : vector<8x8xf32>
    %490 = math.exp %489 : vector<8x8xf32>
    %cst_191 = arith.constant dense<0.000000e+00> : vector<8xf32>
    %491 = vector.multi_reduction <add>, %490, %cst_191 [1] : vector<8x8xf32> to vector<8xf32>
    %492 = vector.shape_cast %491 : vector<8xf32> to vector<8x1xf32>
    %493 = tpu.reciprocal %492 {approx = true} : vector<8x1xf32> -> vector<8x1xf32>
    %494 = vector.broadcast %493 : vector<8x1xf32> to vector<8x8xf32>
    %495 = arith.mulf %490, %494 : vector<8x8xf32>
    %496 = arith.truncf %495 : vector<8x8xf32> to vector<8x8xbf16>
    %497 = arith.truncf %478 : vector<8x8xf32> to vector<8x8xbf16>
    %cst_192 = arith.constant dense<0.000000e+00> : vector<8x8xf32>
    %498 = tpu.matmul %496, %497, %cst_192 {dimension_numbers = #tpu.dot_dimension_numbers<[1], [0], [0], [1], [0, 0, 1, 1], [], []>} : vector<8x8xbf16>, vector<8x8xbf16>, vector<8x8xf32> -> vector<8x8xf32>
    %499 = vector.extract_strided_slice %475 {offsets = [0, 8], sizes = [8, 8], strides = [1, 1]} : vector<8x96xf32> to vector<8x8xf32>
    %500 = vector.extract_strided_slice %475 {offsets = [0, 40], sizes = [8, 8], strides = [1, 1]} : vector<8x96xf32> to vector<8x8xf32>
    %501 = vector.extract_strided_slice %475 {offsets = [0, 72], sizes = [8, 8], strides = [1, 1]} : vector<8x96xf32> to vector<8x8xf32>
    %502 = arith.truncf %499 : vector<8x8xf32> to vector<8x8xbf16>
    %503 = arith.truncf %500 : vector<8x8xf32> to vector<8x8xbf16>
    %cst_193 = arith.constant dense<0.000000e+00> : vector<8x8xf32>
    %504 = tpu.matmul %502, %503, %cst_193 {dimension_numbers = #tpu.dot_dimension_numbers<[1], [1], [0], [0], [0, 0, 1, 0], [], []>} : vector<8x8xbf16>, vector<8x8xbf16>, vector<8x8xf32> -> vector<8x8xf32>
    %cst_194 = arith.constant 0.353553385 : f32
    %505 = vector.broadcast %cst_194 : f32 to vector<8x8xf32>
    %506 = arith.mulf %504, %505 : vector<8x8xf32>
    %507 = vector.broadcast %3 : vector<1x8xf32> to vector<8x8xf32>
    %508 = arith.addf %506, %507 : vector<8x8xf32>
    %cst_195 = arith.constant dense<0xFF800000> : vector<8xf32>
    %509 = vector.multi_reduction <maximumf>, %508, %cst_195 [1] : vector<8x8xf32> to vector<8xf32>
    %510 = vector.shape_cast %509 : vector<8xf32> to vector<8x1xf32>
    %511 = vector.broadcast %510 : vector<8x1xf32> to vector<8x8xf32>
    %512 = arith.subf %508, %511 : vector<8x8xf32>
    %513 = math.exp %512 : vector<8x8xf32>
    %cst_196 = arith.constant dense<0.000000e+00> : vector<8xf32>
    %514 = vector.multi_reduction <add>, %513, %cst_196 [1] : vector<8x8xf32> to vector<8xf32>
    %515 = vector.shape_cast %514 : vector<8xf32> to vector<8x1xf32>
    %516 = tpu.reciprocal %515 {approx = true} : vector<8x1xf32> -> vector<8x1xf32>
    %517 = vector.broadcast %516 : vector<8x1xf32> to vector<8x8xf32>
    %518 = arith.mulf %513, %517 : vector<8x8xf32>
    %519 = arith.truncf %518 : vector<8x8xf32> to vector<8x8xbf16>
    %520 = arith.truncf %501 : vector<8x8xf32> to vector<8x8xbf16>
    %cst_197 = arith.constant dense<0.000000e+00> : vector<8x8xf32>
    %521 = tpu.matmul %519, %520, %cst_197 {dimension_numbers = #tpu.dot_dimension_numbers<[1], [0], [0], [1], [0, 0, 1, 1], [], []>} : vector<8x8xbf16>, vector<8x8xbf16>, vector<8x8xf32> -> vector<8x8xf32>
    %522 = vector.extract_strided_slice %475 {offsets = [0, 16], sizes = [8, 8], strides = [1, 1]} : vector<8x96xf32> to vector<8x8xf32>
    %523 = vector.extract_strided_slice %475 {offsets = [0, 48], sizes = [8, 8], strides = [1, 1]} : vector<8x96xf32> to vector<8x8xf32>
    %524 = vector.extract_strided_slice %475 {offsets = [0, 80], sizes = [8, 8], strides = [1, 1]} : vector<8x96xf32> to vector<8x8xf32>
    %525 = arith.truncf %522 : vector<8x8xf32> to vector<8x8xbf16>
    %526 = arith.truncf %523 : vector<8x8xf32> to vector<8x8xbf16>
    %cst_198 = arith.constant dense<0.000000e+00> : vector<8x8xf32>
    %527 = tpu.matmul %525, %526, %cst_198 {dimension_numbers = #tpu.dot_dimension_numbers<[1], [1], [0], [0], [0, 0, 1, 0], [], []>} : vector<8x8xbf16>, vector<8x8xbf16>, vector<8x8xf32> -> vector<8x8xf32>
    %cst_199 = arith.constant 0.353553385 : f32
    %528 = vector.broadcast %cst_199 : f32 to vector<8x8xf32>
    %529 = arith.mulf %527, %528 : vector<8x8xf32>
    %530 = vector.broadcast %3 : vector<1x8xf32> to vector<8x8xf32>
    %531 = arith.addf %529, %530 : vector<8x8xf32>
    %cst_200 = arith.constant dense<0xFF800000> : vector<8xf32>
    %532 = vector.multi_reduction <maximumf>, %531, %cst_200 [1] : vector<8x8xf32> to vector<8xf32>
    %533 = vector.shape_cast %532 : vector<8xf32> to vector<8x1xf32>
    %534 = vector.broadcast %533 : vector<8x1xf32> to vector<8x8xf32>
    %535 = arith.subf %531, %534 : vector<8x8xf32>
    %536 = math.exp %535 : vector<8x8xf32>
    %cst_201 = arith.constant dense<0.000000e+00> : vector<8xf32>
    %537 = vector.multi_reduction <add>, %536, %cst_201 [1] : vector<8x8xf32> to vector<8xf32>
    %538 = vector.shape_cast %537 : vector<8xf32> to vector<8x1xf32>
    %539 = tpu.reciprocal %538 {approx = true} : vector<8x1xf32> -> vector<8x1xf32>
    %540 = vector.broadcast %539 : vector<8x1xf32> to vector<8x8xf32>
    %541 = arith.mulf %536, %540 : vector<8x8xf32>
    %542 = arith.truncf %541 : vector<8x8xf32> to vector<8x8xbf16>
    %543 = arith.truncf %524 : vector<8x8xf32> to vector<8x8xbf16>
    %cst_202 = arith.constant dense<0.000000e+00> : vector<8x8xf32>
    %544 = tpu.matmul %542, %543, %cst_202 {dimension_numbers = #tpu.dot_dimension_numbers<[1], [0], [0], [1], [0, 0, 1, 1], [], []>} : vector<8x8xbf16>, vector<8x8xbf16>, vector<8x8xf32> -> vector<8x8xf32>
    %545 = vector.extract_strided_slice %475 {offsets = [0, 24], sizes = [8, 8], strides = [1, 1]} : vector<8x96xf32> to vector<8x8xf32>
    %546 = vector.extract_strided_slice %475 {offsets = [0, 56], sizes = [8, 8], strides = [1, 1]} : vector<8x96xf32> to vector<8x8xf32>
    %547 = vector.extract_strided_slice %475 {offsets = [0, 88], sizes = [8, 8], strides = [1, 1]} : vector<8x96xf32> to vector<8x8xf32>
    %548 = arith.truncf %545 : vector<8x8xf32> to vector<8x8xbf16>
    %549 = arith.truncf %546 : vector<8x8xf32> to vector<8x8xbf16>
    %cst_203 = arith.constant dense<0.000000e+00> : vector<8x8xf32>
    %550 = tpu.matmul %548, %549, %cst_203 {dimension_numbers = #tpu.dot_dimension_numbers<[1], [1], [0], [0], [0, 0, 1, 0], [], []>} : vector<8x8xbf16>, vector<8x8xbf16>, vector<8x8xf32> -> vector<8x8xf32>
    %cst_204 = arith.constant 0.353553385 : f32
    %551 = vector.broadcast %cst_204 : f32 to vector<8x8xf32>
    %552 = arith.mulf %550, %551 : vector<8x8xf32>
    %553 = vector.broadcast %3 : vector<1x8xf32> to vector<8x8xf32>
    %554 = arith.addf %552, %553 : vector<8x8xf32>
    %cst_205 = arith.constant dense<0xFF800000> : vector<8xf32>
    %555 = vector.multi_reduction <maximumf>, %554, %cst_205 [1] : vector<8x8xf32> to vector<8xf32>
    %556 = vector.shape_cast %555 : vector<8xf32> to vector<8x1xf32>
    %557 = vector.broadcast %556 : vector<8x1xf32> to vector<8x8xf32>
    %558 = arith.subf %554, %557 : vector<8x8xf32>
    %559 = math.exp %558 : vector<8x8xf32>
    %cst_206 = arith.constant dense<0.000000e+00> : vector<8xf32>
    %560 = vector.multi_reduction <add>, %559, %cst_206 [1] : vector<8x8xf32> to vector<8xf32>
    %561 = vector.shape_cast %560 : vector<8xf32> to vector<8x1xf32>
    %562 = tpu.reciprocal %561 {approx = true} : vector<8x1xf32> -> vector<8x1xf32>
    %563 = vector.broadcast %562 : vector<8x1xf32> to vector<8x8xf32>
    %564 = arith.mulf %559, %563 : vector<8x8xf32>
    %565 = arith.truncf %564 : vector<8x8xf32> to vector<8x8xbf16>
    %566 = arith.truncf %547 : vector<8x8xf32> to vector<8x8xbf16>
    %cst_207 = arith.constant dense<0.000000e+00> : vector<8x8xf32>
    %567 = tpu.matmul %565, %566, %cst_207 {dimension_numbers = #tpu.dot_dimension_numbers<[1], [0], [0], [1], [0, 0, 1, 1], [], []>} : vector<8x8xbf16>, vector<8x8xbf16>, vector<8x8xf32> -> vector<8x8xf32>
    %568 = tpu.concatenate %498, %521, %544, %567 in 1 : vector<8x8xf32>, vector<8x8xf32>, vector<8x8xf32>, vector<8x8xf32> -> vector<8x32xf32>
    %c1_208 = arith.constant 1 : index
    %c0_209 = arith.constant 0 : index
    %c0_210 = arith.constant 0 : index
    %569 = vector.load %arg23[%c1_208, %c0_209, %c0_210] : memref<2x32x32xbf16, #tpu.memory_space<vmem>>, vector<1x32x32xbf16>
    %570 = vector.shape_cast %569 : vector<1x32x32xbf16> to vector<32x32xbf16>
    %571 = arith.truncf %568 : vector<8x32xf32> to vector<8x32xbf16>
    %cst_211 = arith.constant dense<0.000000e+00> : vector<8x32xf32>
    %572 = tpu.matmul %571, %570, %cst_211 {dimension_numbers = #tpu.dot_dimension_numbers<[1], [0], [0], [1], [0, 0, 1, 1], [], []>} : vector<8x32xbf16>, vector<32x32xbf16>, vector<8x32xf32> -> vector<8x32xf32>
    %c1_212 = arith.constant 1 : index
    %c0_213 = arith.constant 0 : index
    %c0_214 = arith.constant 0 : index
    %573 = vector.load %arg24[%c1_212, %c0_213, %c0_214] : memref<2x1x32xf32, #tpu.memory_space<vmem>>, vector<1x1x32xf32>
    %574 = vector.shape_cast %573 : vector<1x1x32xf32> to vector<1x32xf32>
    %575 = vector.broadcast %574 : vector<1x32xf32> to vector<8x32xf32>
    %576 = arith.addf %572, %575 : vector<8x32xf32>
    %577 = arith.addf %576, %467 : vector<8x32xf32>
    %c1_215 = arith.constant 1 : index
    %c0_216 = arith.constant 0 : index
    %c0_217 = arith.constant 0 : index
    %578 = vector.load %arg25[%c1_215, %c0_216, %c0_217] : memref<2x1x32xf32, #tpu.memory_space<vmem>>, vector<1x1x32xf32>
    %579 = vector.shape_cast %578 : vector<1x1x32xf32> to vector<1x32xf32>
    %c1_218 = arith.constant 1 : index
    %c0_219 = arith.constant 0 : index
    %c0_220 = arith.constant 0 : index
    %580 = vector.load %arg26[%c1_218, %c0_219, %c0_220] : memref<2x1x32xf32, #tpu.memory_space<vmem>>, vector<1x1x32xf32>
    %581 = vector.shape_cast %580 : vector<1x1x32xf32> to vector<1x32xf32>
    %cst_221 = arith.constant dense<0.000000e+00> : vector<8xf32>
    %582 = vector.multi_reduction <add>, %577, %cst_221 [1] : vector<8x32xf32> to vector<8xf32>
    %583 = vector.shape_cast %582 : vector<8xf32> to vector<8x1xf32>
    %cst_222 = arith.constant 3.200000e+01 : f32
    %584 = vector.broadcast %cst_222 : f32 to vector<8x1xf32>
    %585 = arith.divf %583, %584 : vector<8x1xf32>
    %586 = vector.broadcast %585 : vector<8x1xf32> to vector<8x32xf32>
    %587 = arith.subf %577, %586 : vector<8x32xf32>
    %588 = arith.mulf %587, %587 : vector<8x32xf32>
    %cst_223 = arith.constant dense<0.000000e+00> : vector<8xf32>
    %589 = vector.multi_reduction <add>, %588, %cst_223 [1] : vector<8x32xf32> to vector<8xf32>
    %590 = vector.shape_cast %589 : vector<8xf32> to vector<8x1xf32>
    %cst_224 = arith.constant 3.200000e+01 : f32
    %591 = vector.broadcast %cst_224 : f32 to vector<8x1xf32>
    %592 = arith.divf %590, %591 : vector<8x1xf32>
    %cst_225 = arith.constant 9.99999974E-6 : f32
    %593 = vector.broadcast %cst_225 : f32 to vector<8x1xf32>
    %594 = arith.addf %592, %593 : vector<8x1xf32>
    %595 = math.rsqrt %594 : vector<8x1xf32>
    %596 = vector.broadcast %595 : vector<8x1xf32> to vector<8x32xf32>
    %597 = arith.mulf %587, %596 : vector<8x32xf32>
    %598 = vector.broadcast %579 : vector<1x32xf32> to vector<8x32xf32>
    %599 = arith.mulf %597, %598 : vector<8x32xf32>
    %600 = vector.broadcast %581 : vector<1x32xf32> to vector<8x32xf32>
    %601 = arith.addf %599, %600 : vector<8x32xf32>
    %602 = vector.broadcast %5 : vector<8x1xf32> to vector<8x32xf32>
    %603 = arith.mulf %601, %602 : vector<8x32xf32>
    %c1_226 = arith.constant 1 : index
    %c0_227 = arith.constant 0 : index
    %c0_228 = arith.constant 0 : index
    %604 = vector.load %arg28[%c1_226, %c0_227, %c0_228] : memref<2x1x16xf32, #tpu.memory_space<vmem>>, vector<1x1x16xf32>
    %605 = vector.shape_cast %604 : vector<1x1x16xf32> to vector<1x16xf32>
    %cst_229 = arith.constant 0.000000e+00 : f32
    %606 = vector.broadcast %cst_229 : f32 to vector<1x32xf32>
    %607 = vector.extract_strided_slice %603 {offsets = [0, 0], sizes = [7, 32], strides = [1, 1]} : vector<8x32xf32> to vector<7x32xf32>
    %608 = tpu.concatenate %606, %607 in 0 : vector<1x32xf32>, vector<7x32xf32> -> vector<8x32xf32>
    %c3 = arith.constant 3 : index
    %c0_230 = arith.constant 0 : index
    %c0_231 = arith.constant 0 : index
    %609 = vector.load %arg27[%c3, %c0_230, %c0_231] : memref<6x32x16xbf16, #tpu.memory_space<vmem>>, vector<1x32x16xbf16>
    %610 = vector.shape_cast %609 : vector<1x32x16xbf16> to vector<32x16xbf16>
    %611 = arith.truncf %608 : vector<8x32xf32> to vector<8x32xbf16>
    %cst_232 = arith.constant dense<0.000000e+00> : vector<8x16xf32>
    %612 = tpu.matmul %611, %610, %cst_232 {dimension_numbers = #tpu.dot_dimension_numbers<[1], [0], [0], [1], [0, 0, 1, 1], [], []>} : vector<8x32xbf16>, vector<32x16xbf16>, vector<8x16xf32> -> vector<8x16xf32>
    %613 = vector.broadcast %605 : vector<1x16xf32> to vector<8x16xf32>
    %614 = arith.addf %613, %612 : vector<8x16xf32>
    %c4 = arith.constant 4 : index
    %c0_233 = arith.constant 0 : index
    %c0_234 = arith.constant 0 : index
    %615 = vector.load %arg27[%c4, %c0_233, %c0_234] : memref<6x32x16xbf16, #tpu.memory_space<vmem>>, vector<1x32x16xbf16>
    %616 = vector.shape_cast %615 : vector<1x32x16xbf16> to vector<32x16xbf16>
    %617 = arith.truncf %603 : vector<8x32xf32> to vector<8x32xbf16>
    %cst_235 = arith.constant dense<0.000000e+00> : vector<8x16xf32>
    %618 = tpu.matmul %617, %616, %cst_235 {dimension_numbers = #tpu.dot_dimension_numbers<[1], [0], [0], [1], [0, 0, 1, 1], [], []>} : vector<8x32xbf16>, vector<32x16xbf16>, vector<8x16xf32> -> vector<8x16xf32>
    %619 = arith.addf %614, %618 : vector<8x16xf32>
    %cst_236 = arith.constant 0.000000e+00 : f32
    %620 = vector.broadcast %cst_236 : f32 to vector<1x32xf32>
    %621 = vector.extract_strided_slice %603 {offsets = [1, 0], sizes = [7, 32], strides = [1, 1]} : vector<8x32xf32> to vector<7x32xf32>
    %622 = tpu.concatenate %621, %620 in 0 : vector<7x32xf32>, vector<1x32xf32> -> vector<8x32xf32>
    %c5 = arith.constant 5 : index
    %c0_237 = arith.constant 0 : index
    %c0_238 = arith.constant 0 : index
    %623 = vector.load %arg27[%c5, %c0_237, %c0_238] : memref<6x32x16xbf16, #tpu.memory_space<vmem>>, vector<1x32x16xbf16>
    %624 = vector.shape_cast %623 : vector<1x32x16xbf16> to vector<32x16xbf16>
    %625 = arith.truncf %622 : vector<8x32xf32> to vector<8x32xbf16>
    %cst_239 = arith.constant dense<0.000000e+00> : vector<8x16xf32>
    %626 = tpu.matmul %625, %624, %cst_239 {dimension_numbers = #tpu.dot_dimension_numbers<[1], [0], [0], [1], [0, 0, 1, 1], [], []>} : vector<8x32xbf16>, vector<32x16xbf16>, vector<8x16xf32> -> vector<8x16xf32>
    %627 = arith.addf %619, %626 : vector<8x16xf32>
    %cst_240 = arith.constant 0.000000e+00 : f32
    %628 = vector.broadcast %cst_240 : f32 to vector<8x16xf32>
    %629 = arith.maximumf %627, %628 : vector<8x16xf32>
    %c1_241 = arith.constant 1 : index
    %c0_242 = arith.constant 0 : index
    %c0_243 = arith.constant 0 : index
    %630 = vector.load %arg30[%c1_241, %c0_242, %c0_243] : memref<2x1x32xf32, #tpu.memory_space<vmem>>, vector<1x1x32xf32>
    %631 = vector.shape_cast %630 : vector<1x1x32xf32> to vector<1x32xf32>
    %cst_244 = arith.constant 0.000000e+00 : f32
    %632 = vector.broadcast %cst_244 : f32 to vector<1x16xf32>
    %633 = vector.extract_strided_slice %629 {offsets = [0, 0], sizes = [7, 16], strides = [1, 1]} : vector<8x16xf32> to vector<7x16xf32>
    %634 = tpu.concatenate %632, %633 in 0 : vector<1x16xf32>, vector<7x16xf32> -> vector<8x16xf32>
    %c3_245 = arith.constant 3 : index
    %c0_246 = arith.constant 0 : index
    %c0_247 = arith.constant 0 : index
    %635 = vector.load %arg29[%c3_245, %c0_246, %c0_247] : memref<6x16x32xbf16, #tpu.memory_space<vmem>>, vector<1x16x32xbf16>
    %636 = vector.shape_cast %635 : vector<1x16x32xbf16> to vector<16x32xbf16>
    %637 = arith.truncf %634 : vector<8x16xf32> to vector<8x16xbf16>
    %cst_248 = arith.constant dense<0.000000e+00> : vector<8x32xf32>
    %638 = tpu.matmul %637, %636, %cst_248 {dimension_numbers = #tpu.dot_dimension_numbers<[1], [0], [0], [1], [0, 0, 1, 1], [], []>} : vector<8x16xbf16>, vector<16x32xbf16>, vector<8x32xf32> -> vector<8x32xf32>
    %639 = vector.broadcast %631 : vector<1x32xf32> to vector<8x32xf32>
    %640 = arith.addf %639, %638 : vector<8x32xf32>
    %c4_249 = arith.constant 4 : index
    %c0_250 = arith.constant 0 : index
    %c0_251 = arith.constant 0 : index
    %641 = vector.load %arg29[%c4_249, %c0_250, %c0_251] : memref<6x16x32xbf16, #tpu.memory_space<vmem>>, vector<1x16x32xbf16>
    %642 = vector.shape_cast %641 : vector<1x16x32xbf16> to vector<16x32xbf16>
    %643 = arith.truncf %629 : vector<8x16xf32> to vector<8x16xbf16>
    %cst_252 = arith.constant dense<0.000000e+00> : vector<8x32xf32>
    %644 = tpu.matmul %643, %642, %cst_252 {dimension_numbers = #tpu.dot_dimension_numbers<[1], [0], [0], [1], [0, 0, 1, 1], [], []>} : vector<8x16xbf16>, vector<16x32xbf16>, vector<8x32xf32> -> vector<8x32xf32>
    %645 = arith.addf %640, %644 : vector<8x32xf32>
    %cst_253 = arith.constant 0.000000e+00 : f32
    %646 = vector.broadcast %cst_253 : f32 to vector<1x16xf32>
    %647 = vector.extract_strided_slice %629 {offsets = [1, 0], sizes = [7, 16], strides = [1, 1]} : vector<8x16xf32> to vector<7x16xf32>
    %648 = tpu.concatenate %647, %646 in 0 : vector<7x16xf32>, vector<1x16xf32> -> vector<8x16xf32>
    %c5_254 = arith.constant 5 : index
    %c0_255 = arith.constant 0 : index
    %c0_256 = arith.constant 0 : index
    %649 = vector.load %arg29[%c5_254, %c0_255, %c0_256] : memref<6x16x32xbf16, #tpu.memory_space<vmem>>, vector<1x16x32xbf16>
    %650 = vector.shape_cast %649 : vector<1x16x32xbf16> to vector<16x32xbf16>
    %651 = arith.truncf %648 : vector<8x16xf32> to vector<8x16xbf16>
    %cst_257 = arith.constant dense<0.000000e+00> : vector<8x32xf32>
    %652 = tpu.matmul %651, %650, %cst_257 {dimension_numbers = #tpu.dot_dimension_numbers<[1], [0], [0], [1], [0, 0, 1, 1], [], []>} : vector<8x16xbf16>, vector<16x32xbf16>, vector<8x32xf32> -> vector<8x32xf32>
    %653 = arith.addf %645, %652 : vector<8x32xf32>
    %654 = arith.addf %653, %603 : vector<8x32xf32>
    %c1_258 = arith.constant 1 : index
    %c0_259 = arith.constant 0 : index
    %c0_260 = arith.constant 0 : index
    %655 = vector.load %arg31[%c1_258, %c0_259, %c0_260] : memref<2x1x32xf32, #tpu.memory_space<vmem>>, vector<1x1x32xf32>
    %656 = vector.shape_cast %655 : vector<1x1x32xf32> to vector<1x32xf32>
    %c1_261 = arith.constant 1 : index
    %c0_262 = arith.constant 0 : index
    %c0_263 = arith.constant 0 : index
    %657 = vector.load %arg32[%c1_261, %c0_262, %c0_263] : memref<2x1x32xf32, #tpu.memory_space<vmem>>, vector<1x1x32xf32>
    %658 = vector.shape_cast %657 : vector<1x1x32xf32> to vector<1x32xf32>
    %cst_264 = arith.constant dense<0.000000e+00> : vector<8xf32>
    %659 = vector.multi_reduction <add>, %654, %cst_264 [1] : vector<8x32xf32> to vector<8xf32>
    %660 = vector.shape_cast %659 : vector<8xf32> to vector<8x1xf32>
    %cst_265 = arith.constant 3.200000e+01 : f32
    %661 = vector.broadcast %cst_265 : f32 to vector<8x1xf32>
    %662 = arith.divf %660, %661 : vector<8x1xf32>
    %663 = vector.broadcast %662 : vector<8x1xf32> to vector<8x32xf32>
    %664 = arith.subf %654, %663 : vector<8x32xf32>
    %665 = arith.mulf %664, %664 : vector<8x32xf32>
    %cst_266 = arith.constant dense<0.000000e+00> : vector<8xf32>
    %666 = vector.multi_reduction <add>, %665, %cst_266 [1] : vector<8x32xf32> to vector<8xf32>
    %667 = vector.shape_cast %666 : vector<8xf32> to vector<8x1xf32>
    %cst_267 = arith.constant 3.200000e+01 : f32
    %668 = vector.broadcast %cst_267 : f32 to vector<8x1xf32>
    %669 = arith.divf %667, %668 : vector<8x1xf32>
    %cst_268 = arith.constant 9.99999974E-6 : f32
    %670 = vector.broadcast %cst_268 : f32 to vector<8x1xf32>
    %671 = arith.addf %669, %670 : vector<8x1xf32>
    %672 = math.rsqrt %671 : vector<8x1xf32>
    %673 = vector.broadcast %672 : vector<8x1xf32> to vector<8x32xf32>
    %674 = arith.mulf %664, %673 : vector<8x32xf32>
    %675 = vector.broadcast %656 : vector<1x32xf32> to vector<8x32xf32>
    %676 = arith.mulf %674, %675 : vector<8x32xf32>
    %677 = vector.broadcast %658 : vector<1x32xf32> to vector<8x32xf32>
    %678 = arith.addf %676, %677 : vector<8x32xf32>
    %679 = vector.broadcast %5 : vector<8x1xf32> to vector<8x32xf32>
    %680 = arith.mulf %678, %679 : vector<8x32xf32>
    %c0_269 = arith.constant 0 : index
    %c0_270 = arith.constant 0 : index
    %681 = vector.load %arg33[%c0_269, %c0_270] : memref<32x4xbf16, #tpu.memory_space<vmem>>, vector<32x4xbf16>
    %682 = arith.truncf %680 : vector<8x32xf32> to vector<8x32xbf16>
    %cst_271 = arith.constant dense<0.000000e+00> : vector<8x4xf32>
    %683 = tpu.matmul %682, %681, %cst_271 {dimension_numbers = #tpu.dot_dimension_numbers<[1], [0], [0], [1], [0, 0, 1, 1], [], []>} : vector<8x32xbf16>, vector<32x4xbf16>, vector<8x4xf32> -> vector<8x4xf32>
    %c0_272 = arith.constant 0 : index
    %c0_273 = arith.constant 0 : index
    %684 = vector.load %arg34[%c0_272, %c0_273] : memref<1x4xf32, #tpu.memory_space<vmem>>, vector<1x4xf32>
    %685 = vector.broadcast %684 : vector<1x4xf32> to vector<8x4xf32>
    %686 = arith.addf %683, %685 : vector<8x4xf32>
    %c0_274 = arith.constant 0 : index
    %c0_275 = arith.constant 0 : index
    %c0_276 = arith.constant 0 : index
    %687 = vector.load %arg35[%c0_274, %c0_275, %c0_276] : memref<1x8x4xf32, #tpu.memory_space<vmem>>, vector<1x8x4xf32>
    %688 = vector.shape_cast %687 : vector<1x8x4xf32> to vector<8x4xf32>
    %689 = vector.shape_cast %686 : vector<8x4xf32> to vector<1x8x4xf32>
    tpu.vector_store %arg35[%c0_274, %c0_275, %c0_276], %689 {strides = array<i32>} : memref<1x8x4xf32, #tpu.memory_space<vmem>>, vector<1x8x4xf32>,
    return
  }
  func.func @transform_0(%arg0: i32) -> (i32, i32, i32) {
    %c0_i32 = arith.constant 0 : i32
    %c0_i32_0 = arith.constant 0 : i32
    %c0_i32_1 = arith.constant 0 : i32
    return %arg0, %c0_i32, %c0_i32_0 : i32, i32, i32
  }
  func.func @transform_1(%arg0: i32) -> (i32, i32, i32) {
    %c0_i32 = arith.constant 0 : i32
    %c0_i32_0 = arith.constant 0 : i32
    %c0_i32_1 = arith.constant 0 : i32
    return %arg0, %c0_i32, %c0_i32_0 : i32, i32, i32
  }
  func.func @transform_2(%arg0: i32) -> (i32, i32, i32) {
    %c0_i32 = arith.constant 0 : i32
    %c0_i32_0 = arith.constant 0 : i32
    %c0_i32_1 = arith.constant 0 : i32
    return %arg0, %c0_i32, %c0_i32_0 : i32, i32, i32
  }
  func.func @transform_3(%arg0: i32) -> (i32, i32) {
    %c0_i32 = arith.constant 0 : i32
    %c0_i32_0 = arith.constant 0 : i32
    %c0_i32_1 = arith.constant 0 : i32
    return %c0_i32, %c0_i32_0 : i32, i32
  }
  func.func @transform_4(%arg0: i32) -> (i32, i32) {
    %c0_i32 = arith.constant 0 : i32
    %c0_i32_0 = arith.constant 0 : i32
    %c0_i32_1 = arith.constant 0 : i32
    return %c0_i32, %c0_i32_0 : i32, i32
  }
  func.func @transform_5(%arg0: i32) -> (i32, i32) {
    %c0_i32 = arith.constant 0 : i32
    %c0_i32_0 = arith.constant 0 : i32
    %c0_i32_1 = arith.constant 0 : i32
    return %c0_i32, %c0_i32_0 : i32, i32
  }
  func.func @transform_6(%arg0: i32) -> (i32, i32) {
    %c0_i32 = arith.constant 0 : i32
    %c0_i32_0 = arith.constant 0 : i32
    %c0_i32_1 = arith.constant 0 : i32
    return %c0_i32, %c0_i32_0 : i32, i32
  }
  func.func @transform_7(%arg0: i32) -> (i32, i32) {
    %c0_i32 = arith.constant 0 : i32
    %c0_i32_0 = arith.constant 0 : i32
    %c0_i32_1 = arith.constant 0 : i32
    return %c0_i32, %c0_i32_0 : i32, i32
  }
  func.func @transform_8(%arg0: i32) -> (i32, i32) {
    %c0_i32 = arith.constant 0 : i32
    %c0_i32_0 = arith.constant 0 : i32
    %c0_i32_1 = arith.constant 0 : i32
    return %c0_i32, %c0_i32_0 : i32, i32
  }
  func.func @transform_9(%arg0: i32) -> (i32, i32) {
    %c0_i32 = arith.constant 0 : i32
    %c0_i32_0 = arith.constant 0 : i32
    %c0_i32_1 = arith.constant 0 : i32
    return %c0_i32, %c0_i32_0 : i32, i32
  }
  func.func @transform_10(%arg0: i32) -> (i32, i32) {
    %c0_i32 = arith.constant 0 : i32
    %c0_i32_0 = arith.constant 0 : i32
    %c0_i32_1 = arith.constant 0 : i32
    return %c0_i32, %c0_i32_0 : i32, i32
  }
  func.func @transform_11(%arg0: i32) -> (i32, i32) {
    %c0_i32 = arith.constant 0 : i32
    %c0_i32_0 = arith.constant 0 : i32
    %c0_i32_1 = arith.constant 0 : i32
    return %c0_i32, %c0_i32_0 : i32, i32
  }
  func.func @transform_12(%arg0: i32) -> (i32, i32) {
    %c0_i32 = arith.constant 0 : i32
    %c0_i32_0 = arith.constant 0 : i32
    %c0_i32_1 = arith.constant 0 : i32
    return %c0_i32, %c0_i32_0 : i32, i32
  }
  func.func @transform_13(%arg0: i32) -> (i32, i32) {
    %c0_i32 = arith.constant 0 : i32
    %c0_i32_0 = arith.constant 0 : i32
    %c0_i32_1 = arith.constant 0 : i32
    return %c0_i32, %c0_i32_0 : i32, i32
  }
  func.func @transform_14(%arg0: i32) -> (i32, i32) {
    %c0_i32 = arith.constant 0 : i32
    %c0_i32_0 = arith.constant 0 : i32
    %c0_i32_1 = arith.constant 0 : i32
    return %c0_i32, %c0_i32_0 : i32, i32
  }
  func.func @transform_15(%arg0: i32) -> (i32, i32) {
    %c0_i32 = arith.constant 0 : i32
    %c0_i32_0 = arith.constant 0 : i32
    %c0_i32_1 = arith.constant 0 : i32
    return %c0_i32, %c0_i32_0 : i32, i32
  }
  func.func @transform_16(%arg0: i32) -> (i32, i32) {
    %c0_i32 = arith.constant 0 : i32
    %c0_i32_0 = arith.constant 0 : i32
    %c0_i32_1 = arith.constant 0 : i32
    return %c0_i32, %c0_i32_0 : i32, i32
  }
  func.func @transform_17(%arg0: i32) -> (i32, i32) {
    %c0_i32 = arith.constant 0 : i32
    %c0_i32_0 = arith.constant 0 : i32
    %c0_i32_1 = arith.constant 0 : i32
    return %c0_i32, %c0_i32_0 : i32, i32
  }
  func.func @transform_18(%arg0: i32) -> (i32, i32) {
    %c0_i32 = arith.constant 0 : i32
    %c0_i32_0 = arith.constant 0 : i32
    %c0_i32_1 = arith.constant 0 : i32
    return %c0_i32, %c0_i32_0 : i32, i32
  }
  func.func @transform_19(%arg0: i32) -> (i32, i32) {
    %c0_i32 = arith.constant 0 : i32
    %c0_i32_0 = arith.constant 0 : i32
    %c0_i32_1 = arith.constant 0 : i32
    return %c0_i32, %c0_i32_0 : i32, i32
  }
  func.func @transform_20(%arg0: i32) -> (i32, i32, i32) {
    %c0_i32 = arith.constant 0 : i32
    %c0_i32_0 = arith.constant 0 : i32
    %c0_i32_1 = arith.constant 0 : i32
    %c0_i32_2 = arith.constant 0 : i32
    return %c0_i32, %c0_i32_0, %c0_i32_1 : i32, i32, i32
  }
  func.func @transform_21(%arg0: i32) -> (i32, i32, i32) {
    %c0_i32 = arith.constant 0 : i32
    %c0_i32_0 = arith.constant 0 : i32
    %c0_i32_1 = arith.constant 0 : i32
    %c0_i32_2 = arith.constant 0 : i32
    return %c0_i32, %c0_i32_0, %c0_i32_1 : i32, i32, i32
  }
  func.func @transform_22(%arg0: i32) -> (i32, i32, i32) {
    %c0_i32 = arith.constant 0 : i32
    %c0_i32_0 = arith.constant 0 : i32
    %c0_i32_1 = arith.constant 0 : i32
    %c0_i32_2 = arith.constant 0 : i32
    return %c0_i32, %c0_i32_0, %c0_i32_1 : i32, i32, i32
  }
  func.func @transform_23(%arg0: i32) -> (i32, i32, i32) {
    %c0_i32 = arith.constant 0 : i32
    %c0_i32_0 = arith.constant 0 : i32
    %c0_i32_1 = arith.constant 0 : i32
    %c0_i32_2 = arith.constant 0 : i32
    return %c0_i32, %c0_i32_0, %c0_i32_1 : i32, i32, i32
  }
  func.func @transform_24(%arg0: i32) -> (i32, i32, i32) {
    %c0_i32 = arith.constant 0 : i32
    %c0_i32_0 = arith.constant 0 : i32
    %c0_i32_1 = arith.constant 0 : i32
    %c0_i32_2 = arith.constant 0 : i32
    return %c0_i32, %c0_i32_0, %c0_i32_1 : i32, i32, i32
  }
  func.func @transform_25(%arg0: i32) -> (i32, i32, i32) {
    %c0_i32 = arith.constant 0 : i32
    %c0_i32_0 = arith.constant 0 : i32
    %c0_i32_1 = arith.constant 0 : i32
    %c0_i32_2 = arith.constant 0 : i32
    return %c0_i32, %c0_i32_0, %c0_i32_1 : i32, i32, i32
  }
  func.func @transform_26(%arg0: i32) -> (i32, i32, i32) {
    %c0_i32 = arith.constant 0 : i32
    %c0_i32_0 = arith.constant 0 : i32
    %c0_i32_1 = arith.constant 0 : i32
    %c0_i32_2 = arith.constant 0 : i32
    return %c0_i32, %c0_i32_0, %c0_i32_1 : i32, i32, i32
  }
  func.func @transform_27(%arg0: i32) -> (i32, i32, i32) {
    %c0_i32 = arith.constant 0 : i32
    %c0_i32_0 = arith.constant 0 : i32
    %c0_i32_1 = arith.constant 0 : i32
    %c0_i32_2 = arith.constant 0 : i32
    return %c0_i32, %c0_i32_0, %c0_i32_1 : i32, i32, i32
  }
  func.func @transform_28(%arg0: i32) -> (i32, i32, i32) {
    %c0_i32 = arith.constant 0 : i32
    %c0_i32_0 = arith.constant 0 : i32
    %c0_i32_1 = arith.constant 0 : i32
    %c0_i32_2 = arith.constant 0 : i32
    return %c0_i32, %c0_i32_0, %c0_i32_1 : i32, i32, i32
  }
  func.func @transform_29(%arg0: i32) -> (i32, i32, i32) {
    %c0_i32 = arith.constant 0 : i32
    %c0_i32_0 = arith.constant 0 : i32
    %c0_i32_1 = arith.constant 0 : i32
    %c0_i32_2 = arith.constant 0 : i32
    return %c0_i32, %c0_i32_0, %c0_i32_1 : i32, i32, i32
  }
  func.func @transform_30(%arg0: i32) -> (i32, i32, i32) {
    %c0_i32 = arith.constant 0 : i32
    %c0_i32_0 = arith.constant 0 : i32
    %c0_i32_1 = arith.constant 0 : i32
    %c0_i32_2 = arith.constant 0 : i32
    return %c0_i32, %c0_i32_0, %c0_i32_1 : i32, i32, i32
  }
  func.func @transform_31(%arg0: i32) -> (i32, i32, i32) {
    %c0_i32 = arith.constant 0 : i32
    %c0_i32_0 = arith.constant 0 : i32
    %c0_i32_1 = arith.constant 0 : i32
    %c0_i32_2 = arith.constant 0 : i32
    return %c0_i32, %c0_i32_0, %c0_i32_1 : i32, i32, i32
  }
  func.func @transform_32(%arg0: i32) -> (i32, i32) {
    %c0_i32 = arith.constant 0 : i32
    %c0_i32_0 = arith.constant 0 : i32
    %c0_i32_1 = arith.constant 0 : i32
    return %c0_i32, %c0_i32_0 : i32, i32
  }
  func.func @transform_33(%arg0: i32) -> (i32, i32) {
    %c0_i32 = arith.constant 0 : i32
    %c0_i32_0 = arith.constant 0 : i32
    %c0_i32_1 = arith.constant 0 : i32
    return %c0_i32, %c0_i32_0 : i32, i32
  }
  func.func @transform_34(%arg0: i32) -> (i32, i32, i32) {
    %c0_i32 = arith.constant 0 : i32
    %c0_i32_0 = arith.constant 0 : i32
    %c0_i32_1 = arith.constant 0 : i32
    return %arg0, %c0_i32, %c0_i32_0 : i32, i32, i32
  }
}

</mosaic_0001>

<llo_original>
// kernel: _lambda_.1
$region0: #{_lambda_.1}
  #allocation0 [shape = 'u32[]', space=smem, size = 0x4, offset = 0x4, fixed_abs, tag = 'smem constant byte address 0x4 - core index']
  #allocation1 [shape = 'u32[144,128]{1,0:T(1,128)}', space=vmem, size = 0x12000, scoped, tag = 'internal scratch']
  #allocation2 [shape = 'f32[8,512]{1,0:T(8,128)}', space=vmem, size = 0x4000, scoped, tag = 'scratch operand']
  #allocation3 [shape = 'f32[8,512]{1,0:T(8,128)}', space=vmem, size = 0x4000, scoped, tag = 'scratch operand']
  #allocation4 [shape = 'f32[8,512]{1,0:T(8,128)}', space=vmem, size = 0x4000, scoped, tag = 'scratch operand']
  %s0 = inlined_call_operand.smem [shape: u32[35], index: -1, kind: input, shape index: {}]
  %s1 = sld [smem:[%s0]]
  %s2 = scalar_lea.smem %s0, 1
  %s3 = sld [smem:[%s2]]
  %s4 = scalar_lea.smem %s0, 2
  %s5 = sld [smem:[%s4]]
  %s6 = scalar_lea.smem %s0, 3
  %s7 = sld [smem:[%s6]]
  %s8 = scalar_lea.smem %s0, 4
  %s9 = sld [smem:[%s8]]
  %s10 = scalar_lea.smem %s0, 5
  %s11 = sld [smem:[%s10]]
  %s12 = scalar_lea.smem %s0, 6
  %s13 = sld [smem:[%s12]]
  %s14 = scalar_lea.smem %s0, 7
  %s15 = sld [smem:[%s14]]
  %s16 = scalar_lea.smem %s0, 8
  %s17 = sld [smem:[%s16]]
  %s18 = scalar_lea.smem %s0, 9
  %s19 = sld [smem:[%s18]]
  %s20 = scalar_lea.smem %s0, 10
  %s21 = sld [smem:[%s20]]
  %s22 = scalar_lea.smem %s0, 11
  %s23 = sld [smem:[%s22]]
  %s24 = scalar_lea.smem %s0, 12
  %s25 = sld [smem:[%s24]]
  %s26 = scalar_lea.smem %s0, 13
  %s27 = sld [smem:[%s26]]
  %s28 = scalar_lea.smem %s0, 14
  %s29 = sld [smem:[%s28]]
  %s30 = scalar_lea.smem %s0, 15
  %s31 = sld [smem:[%s30]]
  %s32 = scalar_lea.smem %s0, 16
  %s33 = sld [smem:[%s32]]
  %s34 = scalar_lea.smem %s0, 17
  %s35 = sld [smem:[%s34]]
  %s36 = scalar_lea.smem %s0, 18
  %s37 = sld [smem:[%s36]]
  %s38 = scalar_lea.smem %s0, 19
  %s39 = sld [smem:[%s38]]
  %s40 = scalar_lea.smem %s0, 20
  %s41 = sld [smem:[%s40]]
  %s42 = scalar_lea.smem %s0, 21
  %s43 = sld [smem:[%s42]]
  %s44 = scalar_lea.smem %s0, 22
  %s45 = sld [smem:[%s44]]
  %s46 = scalar_lea.smem %s0, 23
  %s47 = sld [smem:[%s46]]
  %s48 = scalar_lea.smem %s0, 24
  %s49 = sld [smem:[%s48]]
  %s50 = scalar_lea.smem %s0, 25
  %s51 = sld [smem:[%s50]]
  %s52 = scalar_lea.smem %s0, 26
  %s53 = sld [smem:[%s52]]
  %s54 = scalar_lea.smem %s0, 27
  %s55 = sld [smem:[%s54]]
  %s56 = scalar_lea.smem %s0, 28
  %s57 = sld [smem:[%s56]]
  %s58 = scalar_lea.smem %s0, 29
  %s59 = sld [smem:[%s58]]
  %s60 = scalar_lea.smem %s0, 30
  %s61 = sld [smem:[%s60]]
  %s62 = scalar_lea.smem %s0, 31
  %s63 = sld [smem:[%s62]]
  %s64 = scalar_lea.smem %s0, 32
  %s65 = sld [smem:[%s64]]
  %s66 = scalar_lea.smem %s0, 33
  %s67 = sld [smem:[%s66]]
  %s68 = scalar_lea.smem %s0, 34
  %s69 = sld [smem:[%s68]]
  %s70 = sld [smem:[#allocation0]]
  $region169: #{_lambda_.1} parent=0
    _
  %s72 = ssub.s32 1, %s70
  %s73 = scalar_select 0, %s72, %s70
  loop: start=0, step=1, limit=4
  $region2: #{_lambda_.1} parent=0 // loop_pre_header
    _
  $region3: #{_lambda_.1} parent=0 // loop_header
    %s75 = sphi 0, %s79
    %p76 = scmp.ge.s32.totalorder %s75, 4
    %s85 = sphi 0, %s87
    %s88 = sphi 0, %s85
    %s89 = sphi 0, %s88
    %s105 = sphi 0, %s89
    %s111 = sphi 0, %s113
    %s114 = sphi 0, %s111
    %s115 = sphi 0, %s114
    %s131 = sphi 0, %s115
    %s137 = sphi 0, %s139
    %s140 = sphi 0, %s137
    %s141 = sphi 0, %s140
    %s157 = sphi 0, %s141
    %s161 = sphi 0, %s161
    %s163 = sphi 0, %s161
    %s164 = sphi 0, %s163
    %s178 = sphi 0, %s164
    %s182 = sphi 0, %s182
    %s184 = sphi 0, %s182
    %s185 = sphi 0, %s184
    %s199 = sphi 0, %s185
    %s203 = sphi 0, %s203
    %s205 = sphi 0, %s203
    %s206 = sphi 0, %s205
    %s220 = sphi 0, %s206
    %s224 = sphi 0, %s224
    %s226 = sphi 0, %s224
    %s227 = sphi 0, %s226
    %s241 = sphi 0, %s227
    %s245 = sphi 0, %s245
    %s247 = sphi 0, %s245
    %s248 = sphi 0, %s247
    %s262 = sphi 0, %s248
    %s266 = sphi 0, %s266
    %s268 = sphi 0, %s266
    %s269 = sphi 0, %s268
    %s283 = sphi 0, %s269
    %s287 = sphi 0, %s287
    %s289 = sphi 0, %s287
    %s290 = sphi 0, %s289
    %s304 = sphi 0, %s290
    %s308 = sphi 0, %s308
    %s310 = sphi 0, %s308
    %s311 = sphi 0, %s310
    %s325 = sphi 0, %s311
    %s329 = sphi 0, %s329
    %s331 = sphi 0, %s329
    %s332 = sphi 0, %s331
    %s346 = sphi 0, %s332
    %s350 = sphi 0, %s350
    %s352 = sphi 0, %s350
    %s353 = sphi 0, %s352
    %s367 = sphi 0, %s353
    %s371 = sphi 0, %s371
    %s373 = sphi 0, %s371
    %s374 = sphi 0, %s373
    %s388 = sphi 0, %s374
    %s392 = sphi 0, %s392
    %s394 = sphi 0, %s392
    %s395 = sphi 0, %s394
    %s409 = sphi 0, %s395
    %s413 = sphi 0, %s413
    %s415 = sphi 0, %s413
    %s416 = sphi 0, %s415
    %s430 = sphi 0, %s416
    %s434 = sphi 0, %s434
    %s436 = sphi 0, %s434
    %s437 = sphi 0, %s436
    %s451 = sphi 0, %s437
    %s455 = sphi 0, %s455
    %s457 = sphi 0, %s455
    %s458 = sphi 0, %s457
    %s472 = sphi 0, %s458
    %s476 = sphi 0, %s476
    %s478 = sphi 0, %s476
    %s479 = sphi 0, %s478
    %s493 = sphi 0, %s479
    %s497 = sphi 0, %s497
    %s499 = sphi 0, %s497
    %s500 = sphi 0, %s499
    %s514 = sphi 0, %s500
    %s518 = sphi 0, %s518
    %s520 = sphi 0, %s518
    %s521 = sphi 0, %s520
    %s535 = sphi 0, %s521
    %s539 = sphi 0, %s539
    %s541 = sphi 0, %s539
    %s542 = sphi 0, %s541
    %s556 = sphi 0, %s542
    %s560 = sphi 0, %s560
    %s562 = sphi 0, %s560
    %s563 = sphi 0, %s562
    %s577 = sphi 0, %s563
    %s581 = sphi 0, %s581
    %s583 = sphi 0, %s581
    %s584 = sphi 0, %s583
    %s598 = sphi 0, %s584
    %s602 = sphi 0, %s602
    %s604 = sphi 0, %s602
    %s605 = sphi 0, %s604
    %s619 = sphi 0, %s605
    %s623 = sphi 0, %s623
    %s625 = sphi 0, %s623
    %s626 = sphi 0, %s625
    %s640 = sphi 0, %s626
    %s644 = sphi 0, %s644
    %s646 = sphi 0, %s644
    %s647 = sphi 0, %s646
    %s661 = sphi 0, %s647
    %s665 = sphi 0, %s665
    %s667 = sphi 0, %s665
    %s668 = sphi 0, %s667
    %s682 = sphi 0, %s668
    %s686 = sphi 0, %s686
    %s688 = sphi 0, %s686
    %s689 = sphi 0, %s688
    %s703 = sphi 0, %s689
    %s707 = sphi 0, %s707
    %s709 = sphi 0, %s707
    %s710 = sphi 0, %s709
    %s724 = sphi 0, %s710
    %s728 = sphi 0, %s728
    %s730 = sphi 0, %s728
    %s731 = sphi 0, %s730
    %s745 = sphi 0, %s731
    %s749 = sphi 0, %s749
    %s751 = sphi 0, %s749
    %s752 = sphi 0, %s751
    %s766 = sphi 0, %s752
    %s770 = sphi 0, %s770
    %s772 = sphi 0, %s770
    %s773 = sphi 0, %s772
    %s787 = sphi 0, %s773
    %s791 = sphi 0, %s791
    %s793 = sphi 0, %s791
    %s794 = sphi 0, %s793
    %s808 = sphi 0, %s794
    %s814 = sphi 0, %s816
    %s817 = sphi 0, %s814
    %s818 = sphi 0, %s817
    %s834 = sphi 0, %s818
  $region4: #{_lambda_.1} parent=0 // loop_header_branch
    %78 = sbr.rel (%p76) target = $region8
  $region5: #{_lambda_.1} parent=0 // loop_body
    %s80 = ssub.s32 %s75, 1
    %s81 = ssub.s32 %s75, 2
    %s82 = sadd.s32 %s75, 1
    %s83 = ssub.s32 %s75, %s82
    %p84 = scmp.eq.s32.totalorder %s83, 0
    %s86 = sadd.s32 %s85, 1
    %s87 = scalar_select %p84, %s85, %s86
    %p90 = pneg %p84
    %p91 = scmp.eq.s32.totalorder %s75, 1
    %p92 = por %p90, %p91
    %p93 = scmp.ne.s32.totalorder %s85, %s88
    %p94 = scmp.eq.s32.totalorder %s75, 0
    %p95 = por %p93, %p94
    %p96 = scmp.ne.s32.totalorder %s85, %s88
    %p97 = scmp.eq.s32.totalorder %s80, 1
    %p98 = por %p96, %p97
    %p99 = scmp.ne.s32.totalorder %s88, %s89
    %p100 = scmp.eq.s32.totalorder %s80, 0
    %p101 = por %p99, %p100
    %p102 = scmp.ne.s32.totalorder %s88, %s89
    %p103 = scmp.eq.s32.totalorder %s81, 1
    %p104 = por %p102, %p103
    %p106 = scmp.ne.s32.totalorder %s89, %s105
    %p107 = scmp.eq.s32.totalorder %s81, 0
    %p108 = por %p106, %p107
    %s109 = ssub.s32 %s75, %s82
    %p110 = scmp.eq.s32.totalorder %s109, 0
    %s112 = sadd.s32 %s111, 1
    %s113 = scalar_select %p110, %s111, %s112
    %p116 = pneg %p110
    %p117 = scmp.eq.s32.totalorder %s75, 1
    %p118 = por %p116, %p117
    %p119 = scmp.ne.s32.totalorder %s111, %s114
    %p120 = scmp.eq.s32.totalorder %s75, 0
    %p121 = por %p119, %p120
    %p122 = scmp.ne.s32.totalorder %s111, %s114
    %p123 = scmp.eq.s32.totalorder %s80, 1
    %p124 = por %p122, %p123
    %p125 = scmp.ne.s32.totalorder %s114, %s115
    %p126 = scmp.eq.s32.totalorder %s80, 0
    %p127 = por %p125, %p126
    %p128 = scmp.ne.s32.totalorder %s114, %s115
    %p129 = scmp.eq.s32.totalorder %s81, 1
    %p130 = por %p128, %p129
    %p132 = scmp.ne.s32.totalorder %s115, %s131
    %p133 = scmp.eq.s32.totalorder %s81, 0
    %p134 = por %p132, %p133
    %s135 = ssub.s32 %s75, %s82
    %p136 = scmp.eq.s32.totalorder %s135, 0
    %s138 = sadd.s32 %s137, 1
    %s139 = scalar_select %p136, %s137, %s138
    %p142 = pneg %p136
    %p143 = scmp.eq.s32.totalorder %s75, 1
    %p144 = por %p142, %p143
    %p145 = scmp.ne.s32.totalorder %s137, %s140
    %p146 = scmp.eq.s32.totalorder %s75, 0
    %p147 = por %p145, %p146
    %p148 = scmp.ne.s32.totalorder %s137, %s140
    %p149 = scmp.eq.s32.totalorder %s80, 1
    %p150 = por %p148, %p149
    %p151 = scmp.ne.s32.totalorder %s140, %s141
    %p152 = scmp.eq.s32.totalorder %s80, 0
    %p153 = por %p151, %p152
    %p154 = scmp.ne.s32.totalorder %s140, %s141
    %p155 = scmp.eq.s32.totalorder %s81, 1
    %p156 = por %p154, %p155
    %p158 = scmp.ne.s32.totalorder %s141, %s157
    %p159 = scmp.eq.s32.totalorder %s81, 0
    %p160 = por %p158, %p159
    %s162 = sadd.s32 %s161, 1
    %p165 = scmp.eq.s32.totalorder %s75, 1
    %p166 = scmp.ne.s32.totalorder %s161, %s163
    %p167 = scmp.eq.s32.totalorder %s75, 0
    %p168 = por %p166, %p167
    %p169 = scmp.ne.s32.totalorder %s161, %s163
    %p170 = scmp.eq.s32.totalorder %s80, 1
    %p171 = por %p169, %p170
    %p172 = scmp.ne.s32.totalorder %s163, %s164
    %p173 = scmp.eq.s32.totalorder %s80, 0
    %p174 = por %p172, %p173
    %p175 = scmp.ne.s32.totalorder %s163, %s164
    %p176 = scmp.eq.s32.totalorder %s81, 1
    %p177 = por %p175, %p176
    %p179 = scmp.ne.s32.totalorder %s164, %s178
    %p180 = scmp.eq.s32.totalorder %s81, 0
    %p181 = por %p179, %p180
    %s183 = sadd.s32 %s182, 1
    %p186 = scmp.eq.s32.totalorder %s75, 1
    %p187 = scmp.ne.s32.totalorder %s182, %s184
    %p188 = scmp.eq.s32.totalorder %s75, 0
    %p189 = por %p187, %p188
    %p190 = scmp.ne.s32.totalorder %s182, %s184
    %p191 = scmp.eq.s32.totalorder %s80, 1
    %p192 = por %p190, %p191
    %p193 = scmp.ne.s32.totalorder %s184, %s185
    %p194 = scmp.eq.s32.totalorder %s80, 0
    %p195 = por %p193, %p194
    %p196 = scmp.ne.s32.totalorder %s184, %s185
    %p197 = scmp.eq.s32.totalorder %s81, 1
    %p198 = por %p196, %p197
    %p200 = scmp.ne.s32.totalorder %s185, %s199
    %p201 = scmp.eq.s32.totalorder %s81, 0
    %p202 = por %p200, %p201
    %s204 = sadd.s32 %s203, 1
    %p207 = scmp.eq.s32.totalorder %s75, 1
    %p208 = scmp.ne.s32.totalorder %s203, %s205
    %p209 = scmp.eq.s32.totalorder %s75, 0
    %p210 = por %p208, %p209
    %p211 = scmp.ne.s32.totalorder %s203, %s205
    %p212 = scmp.eq.s32.totalorder %s80, 1
    %p213 = por %p211, %p212
    %p214 = scmp.ne.s32.totalorder %s205, %s206
    %p215 = scmp.eq.s32.totalorder %s80, 0
    %p216 = por %p214, %p215
    %p217 = scmp.ne.s32.totalorder %s205, %s206
    %p218 = scmp.eq.s32.totalorder %s81, 1
    %p219 = por %p217, %p218
    %p221 = scmp.ne.s32.totalorder %s206, %s220
    %p222 = scmp.eq.s32.totalorder %s81, 0
    %p223 = por %p221, %p222
    %s225 = sadd.s32 %s224, 1
    %p228 = scmp.eq.s32.totalorder %s75, 1
    %p229 = scmp.ne.s32.totalorder %s224, %s226
    %p230 = scmp.eq.s32.totalorder %s75, 0
    %p231 = por %p229, %p230
    %p232 = scmp.ne.s32.totalorder %s224, %s226
    %p233 = scmp.eq.s32.totalorder %s80, 1
    %p234 = por %p232, %p233
    %p235 = scmp.ne.s32.totalorder %s226, %s227
    %p236 = scmp.eq.s32.totalorder %s80, 0
    %p237 = por %p235, %p236
    %p238 = scmp.ne.s32.totalorder %s226, %s227
    %p239 = scmp.eq.s32.totalorder %s81, 1
    %p240 = por %p238, %p239
    %p242 = scmp.ne.s32.totalorder %s227, %s241
    %p243 = scmp.eq.s32.totalorder %s81, 0
    %p244 = por %p242, %p243
    %s246 = sadd.s32 %s245, 1
    %p249 = scmp.eq.s32.totalorder %s75, 1
    %p250 = scmp.ne.s32.totalorder %s245, %s247
    %p251 = scmp.eq.s32.totalorder %s75, 0
    %p252 = por %p250, %p251
    %p253 = scmp.ne.s32.totalorder %s245, %s247
    %p254 = scmp.eq.s32.totalorder %s80, 1
    %p255 = por %p253, %p254
    %p256 = scmp.ne.s32.totalorder %s247, %s248
    %p257 = scmp.eq.s32.totalorder %s80, 0
    %p258 = por %p256, %p257
    %p259 = scmp.ne.s32.totalorder %s247, %s248
    %p260 = scmp.eq.s32.totalorder %s81, 1
    %p261 = por %p259, %p260
    %p263 = scmp.ne.s32.totalorder %s248, %s262
    %p264 = scmp.eq.s32.totalorder %s81, 0
    %p265 = por %p263, %p264
    %s267 = sadd.s32 %s266, 1
    %p270 = scmp.eq.s32.totalorder %s75, 1
    %p271 = scmp.ne.s32.totalorder %s266, %s268
    %p272 = scmp.eq.s32.totalorder %s75, 0
    %p273 = por %p271, %p272
    %p274 = scmp.ne.s32.totalorder %s266, %s268
    %p275 = scmp.eq.s32.totalorder %s80, 1
    %p276 = por %p274, %p275
    %p277 = scmp.ne.s32.totalorder %s268, %s269
    %p278 = scmp.eq.s32.totalorder %s80, 0
    %p279 = por %p277, %p278
    %p280 = scmp.ne.s32.totalorder %s268, %s269
    %p281 = scmp.eq.s32.totalorder %s81, 1
    %p282 = por %p280, %p281
    %p284 = scmp.ne.s32.totalorder %s269, %s283
    %p285 = scmp.eq.s32.totalorder %s81, 0
    %p286 = por %p284, %p285
    %s288 = sadd.s32 %s287, 1
    %p291 = scmp.eq.s32.totalorder %s75, 1
    %p292 = scmp.ne.s32.totalorder %s287, %s289
    %p293 = scmp.eq.s32.totalorder %s75, 0
    %p294 = por %p292, %p293
    %p295 = scmp.ne.s32.totalorder %s287, %s289
    %p296 = scmp.eq.s32.totalorder %s80, 1
    %p297 = por %p295, %p296
    %p298 = scmp.ne.s32.totalorder %s289, %s290
    %p299 = scmp.eq.s32.totalorder %s80, 0
    %p300 = por %p298, %p299
    %p301 = scmp.ne.s32.totalorder %s289, %s290
    %p302 = scmp.eq.s32.totalorder %s81, 1
    %p303 = por %p301, %p302
    %p305 = scmp.ne.s32.totalorder %s290, %s304
    %p306 = scmp.eq.s32.totalorder %s81, 0
    %p307 = por %p305, %p306
    %s309 = sadd.s32 %s308, 1
    %p312 = scmp.eq.s32.totalorder %s75, 1
    %p313 = scmp.ne.s32.totalorder %s308, %s310
    %p314 = scmp.eq.s32.totalorder %s75, 0
    %p315 = por %p313, %p314
    %p316 = scmp.ne.s32.totalorder %s308, %s310
    %p317 = scmp.eq.s32.totalorder %s80, 1
    %p318 = por %p316, %p317
    %p319 = scmp.ne.s32.totalorder %s310, %s311
    %p320 = scmp.eq.s32.totalorder %s80, 0
    %p321 = por %p319, %p320
    %p322 = scmp.ne.s32.totalorder %s310, %s311
    %p323 = scmp.eq.s32.totalorder %s81, 1
    %p324 = por %p322, %p323
    %p326 = scmp.ne.s32.totalorder %s311, %s325
    %p327 = scmp.eq.s32.totalorder %s81, 0
    %p328 = por %p326, %p327
    %s330 = sadd.s32 %s329, 1
    %p333 = scmp.eq.s32.totalorder %s75, 1
    %p334 = scmp.ne.s32.totalorder %s329, %s331
    %p335 = scmp.eq.s32.totalorder %s75, 0
    %p336 = por %p334, %p335
    %p337 = scmp.ne.s32.totalorder %s329, %s331
    %p338 = scmp.eq.s32.totalorder %s80, 1
    %p339 = por %p337, %p338
    %p340 = scmp.ne.s32.totalorder %s331, %s332
    %p341 = scmp.eq.s32.totalorder %s80, 0
    %p342 = por %p340, %p341
    %p343 = scmp.ne.s32.totalorder %s331, %s332
    %p344 = scmp.eq.s32.totalorder %s81, 1
    %p345 = por %p343, %p344
    %p347 = scmp.ne.s32.totalorder %s332, %s346
    %p348 = scmp.eq.s32.totalorder %s81, 0
    %p349 = por %p347, %p348
    %s351 = sadd.s32 %s350, 1
    %p354 = scmp.eq.s32.totalorder %s75, 1
    %p355 = scmp.ne.s32.totalorder %s350, %s352
    %p356 = scmp.eq.s32.totalorder %s75, 0
    %p357 = por %p355, %p356
    %p358 = scmp.ne.s32.totalorder %s350, %s352
    %p359 = scmp.eq.s32.totalorder %s80, 1
    %p360 = por %p358, %p359
    %p361 = scmp.ne.s32.totalorder %s352, %s353
    %p362 = scmp.eq.s32.totalorder %s80, 0
    %p363 = por %p361, %p362
    %p364 = scmp.ne.s32.totalorder %s352, %s353
    %p365 = scmp.eq.s32.totalorder %s81, 1
    %p366 = por %p364, %p365
    %p368 = scmp.ne.s32.totalorder %s353, %s367
    %p369 = scmp.eq.s32.totalorder %s81, 0
    %p370 = por %p368, %p369
    %s372 = sadd.s32 %s371, 1
    %p375 = scmp.eq.s32.totalorder %s75, 1
    %p376 = scmp.ne.s32.totalorder %s371, %s373
    %p377 = scmp.eq.s32.totalorder %s75, 0
    %p378 = por %p376, %p377
    %p379 = scmp.ne.s32.totalorder %s371, %s373
    %p380 = scmp.eq.s32.totalorder %s80, 1
    %p381 = por %p379, %p380
    %p382 = scmp.ne.s32.totalorder %s373, %s374
    %p383 = scmp.eq.s32.totalorder %s80, 0
    %p384 = por %p382, %p383
    %p385 = scmp.ne.s32.totalorder %s373, %s374
    %p386 = scmp.eq.s32.totalorder %s81, 1
    %p387 = por %p385, %p386
    %p389 = scmp.ne.s32.totalorder %s374, %s388
    %p390 = scmp.eq.s32.totalorder %s81, 0
    %p391 = por %p389, %p390
    %s393 = sadd.s32 %s392, 1
    %p396 = scmp.eq.s32.totalorder %s75, 1
    %p397 = scmp.ne.s32.totalorder %s392, %s394
    %p398 = scmp.eq.s32.totalorder %s75, 0
    %p399 = por %p397, %p398
    %p400 = scmp.ne.s32.totalorder %s392, %s394
    %p401 = scmp.eq.s32.totalorder %s80, 1
    %p402 = por %p400, %p401
    %p403 = scmp.ne.s32.totalorder %s394, %s395
    %p404 = scmp.eq.s32.totalorder %s80, 0
    %p405 = por %p403, %p404
    %p406 = scmp.ne.s32.totalorder %s394, %s395
    %p407 = scmp.eq.s32.totalorder %s81, 1
    %p408 = por %p406, %p407
    %p410 = scmp.ne.s32.totalorder %s395, %s409
    %p411 = scmp.eq.s32.totalorder %s81, 0
    %p412 = por %p410, %p411
    %s414 = sadd.s32 %s413, 1
    %p417 = scmp.eq.s32.totalorder %s75, 1
    %p418 = scmp.ne.s32.totalorder %s413, %s415
    %p419 = scmp.eq.s32.totalorder %s75, 0
    %p420 = por %p418, %p419
    %p421 = scmp.ne.s32.totalorder %s413, %s415
    %p422 = scmp.eq.s32.totalorder %s80, 1
    %p423 = por %p421, %p422
    %p424 = scmp.ne.s32.totalorder %s415, %s416
    %p425 = scmp.eq.s32.totalorder %s80, 0
    %p426 = por %p424, %p425
    %p427 = scmp.ne.s32.totalorder %s415, %s416
    %p428 = scmp.eq.s32.totalorder %s81, 1
    %p429 = por %p427, %p428
    %p431 = scmp.ne.s32.totalorder %s416, %s430
    %p432 = scmp.eq.s32.totalorder %s81, 0
    %p433 = por %p431, %p432
    %s435 = sadd.s32 %s434, 1
    %p438 = scmp.eq.s32.totalorder %s75, 1
    %p439 = scmp.ne.s32.totalorder %s434, %s436
    %p440 = scmp.eq.s32.totalorder %s75, 0
    %p441 = por %p439, %p440
    %p442 = scmp.ne.s32.totalorder %s434, %s436
    %p443 = scmp.eq.s32.totalorder %s80, 1
    %p444 = por %p442, %p443
    %p445 = scmp.ne.s32.totalorder %s436, %s437
    %p446 = scmp.eq.s32.totalorder %s80, 0
    %p447 = por %p445, %p446
    %p448 = scmp.ne.s32.totalorder %s436, %s437
    %p449 = scmp.eq.s32.totalorder %s81, 1
    %p450 = por %p448, %p449
    %p452 = scmp.ne.s32.totalorder %s437, %s451
    %p453 = scmp.eq.s32.totalorder %s81, 0
    %p454 = por %p452, %p453
    %s456 = sadd.s32 %s455, 1
    %p459 = scmp.eq.s32.totalorder %s75, 1
    %p460 = scmp.ne.s32.totalorder %s455, %s457
    %p461 = scmp.eq.s32.totalorder %s75, 0
    %p462 = por %p460, %p461
    %p463 = scmp.ne.s32.totalorder %s455, %s457
    %p464 = scmp.eq.s32.totalorder %s80, 1
    %p465 = por %p463, %p464
    %p466 = scmp.ne.s32.totalorder %s457, %s458
    %p467 = scmp.eq.s32.totalorder %s80, 0
    %p468 = por %p466, %p467
    %p469 = scmp.ne.s32.totalorder %s457, %s458
    %p470 = scmp.eq.s32.totalorder %s81, 1
    %p471 = por %p469, %p470
    %p473 = scmp.ne.s32.totalorder %s458, %s472
    %p474 = scmp.eq.s32.totalorder %s81, 0
    %p475 = por %p473, %p474
    %s477 = sadd.s32 %s476, 1
    %p480 = scmp.eq.s32.totalorder %s75, 1
    %p481 = scmp.ne.s32.totalorder %s476, %s478
    %p482 = scmp.eq.s32.totalorder %s75, 0
    %p483 = por %p481, %p482
    %p484 = scmp.ne.s32.totalorder %s476, %s478
    %p485 = scmp.eq.s32.totalorder %s80, 1
    %p486 = por %p484, %p485
    %p487 = scmp.ne.s32.totalorder %s478, %s479
    %p488 = scmp.eq.s32.totalorder %s80, 0
    %p489 = por %p487, %p488
    %p490 = scmp.ne.s32.totalorder %s478, %s479
    %p491 = scmp.eq.s32.totalorder %s81, 1
    %p492 = por %p490, %p491
    %p494 = scmp.ne.s32.totalorder %s479, %s493
    %p495 = scmp.eq.s32.totalorder %s81, 0
    %p496 = por %p494, %p495
    %s498 = sadd.s32 %s497, 1
    %p501 = scmp.eq.s32.totalorder %s75, 1
    %p502 = scmp.ne.s32.totalorder %s497, %s499
    %p503 = scmp.eq.s32.totalorder %s75, 0
    %p504 = por %p502, %p503
    %p505 = scmp.ne.s32.totalorder %s497, %s499
    %p506 = scmp.eq.s32.totalorder %s80, 1
    %p507 = por %p505, %p506
    %p508 = scmp.ne.s32.totalorder %s499, %s500
    %p509 = scmp.eq.s32.totalorder %s80, 0
    %p510 = por %p508, %p509
    %p511 = scmp.ne.s32.totalorder %s499, %s500
    %p512 = scmp.eq.s32.totalorder %s81, 1
    %p513 = por %p511, %p512
    %p515 = scmp.ne.s32.totalorder %s500, %s514
    %p516 = scmp.eq.s32.totalorder %s81, 0
    %p517 = por %p515, %p516
    %s519 = sadd.s32 %s518, 1
    %p522 = scmp.eq.s32.totalorder %s75, 1
    %p523 = scmp.ne.s32.totalorder %s518, %s520
    %p524 = scmp.eq.s32.totalorder %s75, 0
    %p525 = por %p523, %p524
    %p526 = scmp.ne.s32.totalorder %s518, %s520
    %p527 = scmp.eq.s32.totalorder %s80, 1
    %p528 = por %p526, %p527
    %p529 = scmp.ne.s32.totalorder %s520, %s521
    %p530 = scmp.eq.s32.totalorder %s80, 0
    %p531 = por %p529, %p530
    %p532 = scmp.ne.s32.totalorder %s520, %s521
    %p533 = scmp.eq.s32.totalorder %s81, 1
    %p534 = por %p532, %p533
    %p536 = scmp.ne.s32.totalorder %s521, %s535
    %p537 = scmp.eq.s32.totalorder %s81, 0
    %p538 = por %p536, %p537
    %s540 = sadd.s32 %s539, 1
    %p543 = scmp.eq.s32.totalorder %s75, 1
    %p544 = scmp.ne.s32.totalorder %s539, %s541
    %p545 = scmp.eq.s32.totalorder %s75, 0
    %p546 = por %p544, %p545
    %p547 = scmp.ne.s32.totalorder %s539, %s541
    %p548 = scmp.eq.s32.totalorder %s80, 1
    %p549 = por %p547, %p548
    %p550 = scmp.ne.s32.totalorder %s541, %s542
    %p551 = scmp.eq.s32.totalorder %s80, 0
    %p552 = por %p550, %p551
    %p553 = scmp.ne.s32.totalorder %s541, %s542
    %p554 = scmp.eq.s32.totalorder %s81, 1
    %p555 = por %p553, %p554
    %p557 = scmp.ne.s32.totalorder %s542, %s556
    %p558 = scmp.eq.s32.totalorder %s81, 0
    %p559 = por %p557, %p558
    %s561 = sadd.s32 %s560, 1
    %p564 = scmp.eq.s32.totalorder %s75, 1
    %p565 = scmp.ne.s32.totalorder %s560, %s562
    %p566 = scmp.eq.s32.totalorder %s75, 0
    %p567 = por %p565, %p566
    %p568 = scmp.ne.s32.totalorder %s560, %s562
    %p569 = scmp.eq.s32.totalorder %s80, 1
    %p570 = por %p568, %p569
    %p571 = scmp.ne.s32.totalorder %s562, %s563
    %p572 = scmp.eq.s32.totalorder %s80, 0
    %p573 = por %p571, %p572
    %p574 = scmp.ne.s32.totalorder %s562, %s563
    %p575 = scmp.eq.s32.totalorder %s81, 1
    %p576 = por %p574, %p575
    %p578 = scmp.ne.s32.totalorder %s563, %s577
    %p579 = scmp.eq.s32.totalorder %s81, 0
    %p580 = por %p578, %p579
    %s582 = sadd.s32 %s581, 1
    %p585 = scmp.eq.s32.totalorder %s75, 1
    %p586 = scmp.ne.s32.totalorder %s581, %s583
    %p587 = scmp.eq.s32.totalorder %s75, 0
    %p588 = por %p586, %p587
    %p589 = scmp.ne.s32.totalorder %s581, %s583
    %p590 = scmp.eq.s32.totalorder %s80, 1
    %p591 = por %p589, %p590
    %p592 = scmp.ne.s32.totalorder %s583, %s584
    %p593 = scmp.eq.s32.totalorder %s80, 0
    %p594 = por %p592, %p593
    %p595 = scmp.ne.s32.totalorder %s583, %s584
    %p596 = scmp.eq.s32.totalorder %s81, 1
    %p597 = por %p595, %p596
    %p599 = scmp.ne.s32.totalorder %s584, %s598
    %p600 = scmp.eq.s32.totalorder %s81, 0
    %p601 = por %p599, %p600
    %s603 = sadd.s32 %s602, 1
    %p606 = scmp.eq.s32.totalorder %s75, 1
    %p607 = scmp.ne.s32.totalorder %s602, %s604
    %p608 = scmp.eq.s32.totalorder %s75, 0
    %p609 = por %p607, %p608
    %p610 = scmp.ne.s32.totalorder %s602, %s604
    %p611 = scmp.eq.s32.totalorder %s80, 1
    %p612 = por %p610, %p611
    %p613 = scmp.ne.s32.totalorder %s604, %s605
    %p614 = scmp.eq.s32.totalorder %s80, 0
    %p615 = por %p613, %p614
    %p616 = scmp.ne.s32.totalorder %s604, %s605
    %p617 = scmp.eq.s32.totalorder %s81, 1
    %p618 = por %p616, %p617
    %p620 = scmp.ne.s32.totalorder %s605, %s619
    %p621 = scmp.eq.s32.totalorder %s81, 0
    %p622 = por %p620, %p621
    %s624 = sadd.s32 %s623, 1
    %p627 = scmp.eq.s32.totalorder %s75, 1
    %p628 = scmp.ne.s32.totalorder %s623, %s625
    %p629 = scmp.eq.s32.totalorder %s75, 0
    %p630 = por %p628, %p629
    %p631 = scmp.ne.s32.totalorder %s623, %s625
    %p632 = scmp.eq.s32.totalorder %s80, 1
    %p633 = por %p631, %p632
    %p634 = scmp.ne.s32.totalorder %s625, %s626
    %p635 = scmp.eq.s32.totalorder %s80, 0
    %p636 = por %p634, %p635
    %p637 = scmp.ne.s32.totalorder %s625, %s626
    %p638 = scmp.eq.s32.totalorder %s81, 1
    %p639 = por %p637, %p638
    %p641 = scmp.ne.s32.totalorder %s626, %s640
    %p642 = scmp.eq.s32.totalorder %s81, 0
    %p643 = por %p641, %p642
    %s645 = sadd.s32 %s644, 1
    %p648 = scmp.eq.s32.totalorder %s75, 1
    %p649 = scmp.ne.s32.totalorder %s644, %s646
    %p650 = scmp.eq.s32.totalorder %s75, 0
    %p651 = por %p649, %p650
    %p652 = scmp.ne.s32.totalorder %s644, %s646
    %p653 = scmp.eq.s32.totalorder %s80, 1
    %p654 = por %p652, %p653
    %p655 = scmp.ne.s32.totalorder %s646, %s647
    %p656 = scmp.eq.s32.totalorder %s80, 0
    %p657 = por %p655, %p656
    %p658 = scmp.ne.s32.totalorder %s646, %s647
    %p659 = scmp.eq.s32.totalorder %s81, 1
    %p660 = por %p658, %p659
    %p662 = scmp.ne.s32.totalorder %s647, %s661
    %p663 = scmp.eq.s32.totalorder %s81, 0
    %p664 = por %p662, %p663
    %s666 = sadd.s32 %s665, 1
    %p669 = scmp.eq.s32.totalorder %s75, 1
    %p670 = scmp.ne.s32.totalorder %s665, %s667
    %p671 = scmp.eq.s32.totalorder %s75, 0
    %p672 = por %p670, %p671
    %p673 = scmp.ne.s32.totalorder %s665, %s667
    %p674 = scmp.eq.s32.totalorder %s80, 1
    %p675 = por %p673, %p674
    %p676 = scmp.ne.s32.totalorder %s667, %s668
    %p677 = scmp.eq.s32.totalorder %s80, 0
    %p678 = por %p676, %p677
    %p679 = scmp.ne.s32.totalorder %s667, %s668
    %p680 = scmp.eq.s32.totalorder %s81, 1
    %p681 = por %p679, %p680
    %p683 = scmp.ne.s32.totalorder %s668, %s682
    %p684 = scmp.eq.s32.totalorder %s81, 0
    %p685 = por %p683, %p684
    %s687 = sadd.s32 %s686, 1
    %p690 = scmp.eq.s32.totalorder %s75, 1
    %p691 = scmp.ne.s32.totalorder %s686, %s688
    %p692 = scmp.eq.s32.totalorder %s75, 0
    %p693 = por %p691, %p692
    %p694 = scmp.ne.s32.totalorder %s686, %s688
    %p695 = scmp.eq.s32.totalorder %s80, 1
    %p696 = por %p694, %p695
    %p697 = scmp.ne.s32.totalorder %s688, %s689
    %p698 = scmp.eq.s32.totalorder %s80, 0
    %p699 = por %p697, %p698
    %p700 = scmp.ne.s32.totalorder %s688, %s689
    %p701 = scmp.eq.s32.totalorder %s81, 1
    %p702 = por %p700, %p701
    %p704 = scmp.ne.s32.totalorder %s689, %s703
    %p705 = scmp.eq.s32.totalorder %s81, 0
    %p706 = por %p704, %p705
    %s708 = sadd.s32 %s707, 1
    %p711 = scmp.eq.s32.totalorder %s75, 1
    %p712 = scmp.ne.s32.totalorder %s707, %s709
    %p713 = scmp.eq.s32.totalorder %s75, 0
    %p714 = por %p712, %p713
    %p715 = scmp.ne.s32.totalorder %s707, %s709
    %p716 = scmp.eq.s32.totalorder %s80, 1
    %p717 = por %p715, %p716
    %p718 = scmp.ne.s32.totalorder %s709, %s710
    %p719 = scmp.eq.s32.totalorder %s80, 0
    %p720 = por %p718, %p719
    %p721 = scmp.ne.s32.totalorder %s709, %s710
    %p722 = scmp.eq.s32.totalorder %s81, 1
    %p723 = por %p721, %p722
    %p725 = scmp.ne.s32.totalorder %s710, %s724
    %p726 = scmp.eq.s32.totalorder %s81, 0
    %p727 = por %p725, %p726
    %s729 = sadd.s32 %s728, 1
    %p732 = scmp.eq.s32.totalorder %s75, 1
    %p733 = scmp.ne.s32.totalorder %s728, %s730
    %p734 = scmp.eq.s32.totalorder %s75, 0
    %p735 = por %p733, %p734
    %p736 = scmp.ne.s32.totalorder %s728, %s730
    %p737 = scmp.eq.s32.totalorder %s80, 1
    %p738 = por %p736, %p737
    %p739 = scmp.ne.s32.totalorder %s730, %s731
    %p740 = scmp.eq.s32.totalorder %s80, 0
    %p741 = por %p739, %p740
    %p742 = scmp.ne.s32.totalorder %s730, %s731
    %p743 = scmp.eq.s32.totalorder %s81, 1
    %p744 = por %p742, %p743
    %p746 = scmp.ne.s32.totalorder %s731, %s745
    %p747 = scmp.eq.s32.totalorder %s81, 0
    %p748 = por %p746, %p747
    %s750 = sadd.s32 %s749, 1
    %p753 = scmp.eq.s32.totalorder %s75, 1
    %p754 = scmp.ne.s32.totalorder %s749, %s751
    %p755 = scmp.eq.s32.totalorder %s75, 0
    %p756 = por %p754, %p755
    %p757 = scmp.ne.s32.totalorder %s749, %s751
    %p758 = scmp.eq.s32.totalorder %s80, 1
    %p759 = por %p757, %p758
    %p760 = scmp.ne.s32.totalorder %s751, %s752
    %p761 = scmp.eq.s32.totalorder %s80, 0
    %p762 = por %p760, %p761
    %p763 = scmp.ne.s32.totalorder %s751, %s752
    %p764 = scmp.eq.s32.totalorder %s81, 1
    %p765 = por %p763, %p764
    %p767 = scmp.ne.s32.totalorder %s752, %s766
    %p768 = scmp.eq.s32.totalorder %s81, 0
    %p769 = por %p767, %p768
    %s771 = sadd.s32 %s770, 1
    %p774 = scmp.eq.s32.totalorder %s75, 1
    %p775 = scmp.ne.s32.totalorder %s770, %s772
    %p776 = scmp.eq.s32.totalorder %s75, 0
    %p777 = por %p775, %p776
    %p778 = scmp.ne.s32.totalorder %s770, %s772
    %p779 = scmp.eq.s32.totalorder %s80, 1
    %p780 = por %p778, %p779
    %p781 = scmp.ne.s32.totalorder %s772, %s773
    %p782 = scmp.eq.s32.totalorder %s80, 0
    %p783 = por %p781, %p782
    %p784 = scmp.ne.s32.totalorder %s772, %s773
    %p785 = scmp.eq.s32.totalorder %s81, 1
    %p786 = por %p784, %p785
    %p788 = scmp.ne.s32.totalorder %s773, %s787
    %p789 = scmp.eq.s32.totalorder %s81, 0
    %p790 = por %p788, %p789
    %s792 = sadd.s32 %s791, 1
    %p795 = scmp.eq.s32.totalorder %s75, 1
    %p796 = scmp.ne.s32.totalorder %s791, %s793
    %p797 = scmp.eq.s32.totalorder %s75, 0
    %p798 = por %p796, %p797
    %p799 = scmp.ne.s32.totalorder %s791, %s793
    %p800 = scmp.eq.s32.totalorder %s80, 1
    %p801 = por %p799, %p800
    %p802 = scmp.ne.s32.totalorder %s793, %s794
    %p803 = scmp.eq.s32.totalorder %s80, 0
    %p804 = por %p802, %p803
    %p805 = scmp.ne.s32.totalorder %s793, %s794
    %p806 = scmp.eq.s32.totalorder %s81, 1
    %p807 = por %p805, %p806
    %p809 = scmp.ne.s32.totalorder %s794, %s808
    %p810 = scmp.eq.s32.totalorder %s81, 0
    %p811 = por %p809, %p810
    %s812 = ssub.s32 %s75, %s82
    %p813 = scmp.eq.s32.totalorder %s812, 0
    %s815 = sadd.s32 %s814, 1
    %s816 = scalar_select %p813, %s814, %s815
    %p819 = pneg %p813
    %p820 = scmp.eq.s32.totalorder %s75, 1
    %p821 = por %p819, %p820
    %p822 = scmp.ne.s32.totalorder %s814, %s817
    %p823 = scmp.eq.s32.totalorder %s75, 0
    %p824 = por %p822, %p823
    %p825 = scmp.ne.s32.totalorder %s814, %s817
    %p826 = scmp.eq.s32.totalorder %s80, 1
    %p827 = por %p825, %p826
    %p828 = scmp.ne.s32.totalorder %s817, %s818
    %p829 = scmp.eq.s32.totalorder %s80, 0
    %p830 = por %p828, %p829
    %p831 = scmp.ne.s32.totalorder %s817, %s818
    %p832 = scmp.eq.s32.totalorder %s81, 1
    %p833 = por %p831, %p832
    %p835 = scmp.ne.s32.totalorder %s818, %s834
    %p836 = scmp.eq.s32.totalorder %s81, 0
    %p837 = por %p835, %p836
    %p838 = scmp.le.s32.totalorder 1, %s75
    %p839 = scmp.lt.s32.totalorder %s75, 3
    %p840 = pnand %p838, %p839
    %p841 = pneg %p840
    // Predicated region
    $region9: #{_lambda_.1} parent=5 // pred_check
      _
    $region10: #{_lambda_.1} parent=5 // pred_check_branch
      %843 = sbr.rel (%p840) target = $region12
    $region11: #{_lambda_.1} parent=5 // pred_region
      %s844 = ssub.s32 %s75, 1
      // Predicated region
      $region13: #{_lambda_.1} parent=11 // pred_check
        %p845 = pneg %p174
      $region14: #{_lambda_.1} parent=11 // pred_check_branch
        %847 = sbr.rel (%p845) target = $region16
      $region15: #{_lambda_.1} parent=11 // pred_region
        _
      $region16: #{_lambda_.1} parent=11 // pred_fallthru
        _
      // Predicated region
      $region17: #{_lambda_.1} parent=11 // pred_check
        %p848 = pneg %p195
      $region18: #{_lambda_.1} parent=11 // pred_check_branch
        %850 = sbr.rel (%p848) target = $region20
      $region19: #{_lambda_.1} parent=11 // pred_region
        _
      $region20: #{_lambda_.1} parent=11 // pred_fallthru
        _
      // Predicated region
      $region21: #{_lambda_.1} parent=11 // pred_check
        %p851 = pneg %p216
      $region22: #{_lambda_.1} parent=11 // pred_check_branch
        %853 = sbr.rel (%p851) target = $region24
      $region23: #{_lambda_.1} parent=11 // pred_region
        _
      $region24: #{_lambda_.1} parent=11 // pred_fallthru
        _
      // Predicated region
      $region25: #{_lambda_.1} parent=11 // pred_check
        %p854 = pneg %p237
      $region26: #{_lambda_.1} parent=11 // pred_check_branch
        %856 = sbr.rel (%p854) target = $region28
      $region27: #{_lambda_.1} parent=11 // pred_region
        _
      $region28: #{_lambda_.1} parent=11 // pred_fallthru
        _
      // Predicated region
      $region29: #{_lambda_.1} parent=11 // pred_check
        %p857 = pneg %p258
      $region30: #{_lambda_.1} parent=11 // pred_check_branch
        %859 = sbr.rel (%p857) target = $region32
      $region31: #{_lambda_.1} parent=11 // pred_region
        _
      $region32: #{_lambda_.1} parent=11 // pred_fallthru
        _
      // Predicated region
      $region33: #{_lambda_.1} parent=11 // pred_check
        %p860 = pneg %p279
      $region34: #{_lambda_.1} parent=11 // pred_check_branch
        %862 = sbr.rel (%p860) target = $region36
      $region35: #{_lambda_.1} parent=11 // pred_region
        _
      $region36: #{_lambda_.1} parent=11 // pred_fallthru
        _
      // Predicated region
      $region37: #{_lambda_.1} parent=11 // pred_check
        %p863 = pneg %p300
      $region38: #{_lambda_.1} parent=11 // pred_check_branch
        %865 = sbr.rel (%p863) target = $region40
      $region39: #{_lambda_.1} parent=11 // pred_region
        _
      $region40: #{_lambda_.1} parent=11 // pred_fallthru
        _
      // Predicated region
      $region41: #{_lambda_.1} parent=11 // pred_check
        %p866 = pneg %p321
      $region42: #{_lambda_.1} parent=11 // pred_check_branch
        %868 = sbr.rel (%p866) target = $region44
      $region43: #{_lambda_.1} parent=11 // pred_region
        _
      $region44: #{_lambda_.1} parent=11 // pred_fallthru
        _
      // Predicated region
      $region45: #{_lambda_.1} parent=11 // pred_check
        %p869 = pneg %p342
      $region46: #{_lambda_.1} parent=11 // pred_check_branch
        %871 = sbr.rel (%p869) target = $region48
      $region47: #{_lambda_.1} parent=11 // pred_region
        _
      $region48: #{_lambda_.1} parent=11 // pred_fallthru
        _
      // Predicated region
      $region49: #{_lambda_.1} parent=11 // pred_check
        %p872 = pneg %p363
      $region50: #{_lambda_.1} parent=11 // pred_check_branch
        %874 = sbr.rel (%p872) target = $region52
      $region51: #{_lambda_.1} parent=11 // pred_region
        _
      $region52: #{_lambda_.1} parent=11 // pred_fallthru
        _
      // Predicated region
      $region53: #{_lambda_.1} parent=11 // pred_check
        %p875 = pneg %p384
      $region54: #{_lambda_.1} parent=11 // pred_check_branch
        %877 = sbr.rel (%p875) target = $region56
      $region55: #{_lambda_.1} parent=11 // pred_region
        _
      $region56: #{_lambda_.1} parent=11 // pred_fallthru
        _
      // Predicated region
      $region57: #{_lambda_.1} parent=11 // pred_check
        %p878 = pneg %p405
      $region58: #{_lambda_.1} parent=11 // pred_check_branch
        %880 = sbr.rel (%p878) target = $region60
      $region59: #{_lambda_.1} parent=11 // pred_region
        _
      $region60: #{_lambda_.1} parent=11 // pred_fallthru
        _
      // Predicated region
      $region61: #{_lambda_.1} parent=11 // pred_check
        %p881 = pneg %p426
      $region62: #{_lambda_.1} parent=11 // pred_check_branch
        %883 = sbr.rel (%p881) target = $region64
      $region63: #{_lambda_.1} parent=11 // pred_region
        _
      $region64: #{_lambda_.1} parent=11 // pred_fallthru
        _
      // Predicated region
      $region65: #{_lambda_.1} parent=11 // pred_check
        %p884 = pneg %p447
      $region66: #{_lambda_.1} parent=11 // pred_check_branch
        %886 = sbr.rel (%p884) target = $region68
      $region67: #{_lambda_.1} parent=11 // pred_region
        _
      $region68: #{_lambda_.1} parent=11 // pred_fallthru
        _
      // Predicated region
      $region69: #{_lambda_.1} parent=11 // pred_check
        %p887 = pneg %p468
      $region70: #{_lambda_.1} parent=11 // pred_check_branch
        %889 = sbr.rel (%p887) target = $region72
      $region71: #{_lambda_.1} parent=11 // pred_region
        _
      $region72: #{_lambda_.1} parent=11 // pred_fallthru
        _
      // Predicated region
      $region73: #{_lambda_.1} parent=11 // pred_check
        %p890 = pneg %p489
      $region74: #{_lambda_.1} parent=11 // pred_check_branch
        %892 = sbr.rel (%p890) target = $region76
      $region75: #{_lambda_.1} parent=11 // pred_region
        _
      $region76: #{_lambda_.1} parent=11 // pred_fallthru
        _
      // Predicated region
      $region77: #{_lambda_.1} parent=11 // pred_check
        %p893 = pneg %p510
      $region78: #{_lambda_.1} parent=11 // pred_check_branch
        %895 = sbr.rel (%p893) target = $region80
      $region79: #{_lambda_.1} parent=11 // pred_region
        _
      $region80: #{_lambda_.1} parent=11 // pred_fallthru
        _
      // Predicated region
      $region81: #{_lambda_.1} parent=11 // pred_check
        %p896 = pneg %p531
      $region82: #{_lambda_.1} parent=11 // pred_check_branch
        %898 = sbr.rel (%p896) target = $region84
      $region83: #{_lambda_.1} parent=11 // pred_region
        _
      $region84: #{_lambda_.1} parent=11 // pred_fallthru
        _
      // Predicated region
      $region85: #{_lambda_.1} parent=11 // pred_check
        %p899 = pneg %p552
      $region86: #{_lambda_.1} parent=11 // pred_check_branch
        %901 = sbr.rel (%p899) target = $region88
      $region87: #{_lambda_.1} parent=11 // pred_region
        _
      $region88: #{_lambda_.1} parent=11 // pred_fallthru
        _
      // Predicated region
      $region89: #{_lambda_.1} parent=11 // pred_check
        %p902 = pneg %p573
      $region90: #{_lambda_.1} parent=11 // pred_check_branch
        %904 = sbr.rel (%p902) target = $region92
      $region91: #{_lambda_.1} parent=11 // pred_region
        _
      $region92: #{_lambda_.1} parent=11 // pred_fallthru
        _
      // Predicated region
      $region93: #{_lambda_.1} parent=11 // pred_check
        %p905 = pneg %p594
      $region94: #{_lambda_.1} parent=11 // pred_check_branch
        %907 = sbr.rel (%p905) target = $region96
      $region95: #{_lambda_.1} parent=11 // pred_region
        _
      $region96: #{_lambda_.1} parent=11 // pred_fallthru
        _
      // Predicated region
      $region97: #{_lambda_.1} parent=11 // pred_check
        %p908 = pneg %p615
      $region98: #{_lambda_.1} parent=11 // pred_check_branch
        %910 = sbr.rel (%p908) target = $region100
      $region99: #{_lambda_.1} parent=11 // pred_region
        _
      $region100: #{_lambda_.1} parent=11 // pred_fallthru
        _
      // Predicated region
      $region101: #{_lambda_.1} parent=11 // pred_check
        %p911 = pneg %p636
      $region102: #{_lambda_.1} parent=11 // pred_check_branch
        %913 = sbr.rel (%p911) target = $region104
      $region103: #{_lambda_.1} parent=11 // pred_region
        _
      $region104: #{_lambda_.1} parent=11 // pred_fallthru
        _
      // Predicated region
      $region105: #{_lambda_.1} parent=11 // pred_check
        %p914 = pneg %p657
      $region106: #{_lambda_.1} parent=11 // pred_check_branch
        %916 = sbr.rel (%p914) target = $region108
      $region107: #{_lambda_.1} parent=11 // pred_region
        _
      $region108: #{_lambda_.1} parent=11 // pred_fallthru
        _
      // Predicated region
      $region109: #{_lambda_.1} parent=11 // pred_check
        %p917 = pneg %p678
      $region110: #{_lambda_.1} parent=11 // pred_check_branch
        %919 = sbr.rel (%p917) target = $region112
      $region111: #{_lambda_.1} parent=11 // pred_region
        _
      $region112: #{_lambda_.1} parent=11 // pred_fallthru
        _
      // Predicated region
      $region113: #{_lambda_.1} parent=11 // pred_check
        %p920 = pneg %p699
      $region114: #{_lambda_.1} parent=11 // pred_check_branch
        %922 = sbr.rel (%p920) target = $region116
      $region115: #{_lambda_.1} parent=11 // pred_region
        _
      $region116: #{_lambda_.1} parent=11 // pred_fallthru
        _
      // Predicated region
      $region117: #{_lambda_.1} parent=11 // pred_check
        %p923 = pneg %p720
      $region118: #{_lambda_.1} parent=11 // pred_check_branch
        %925 = sbr.rel (%p923) target = $region120
      $region119: #{_lambda_.1} parent=11 // pred_region
        _
      $region120: #{_lambda_.1} parent=11 // pred_fallthru
        _
      // Predicated region
      $region121: #{_lambda_.1} parent=11 // pred_check
        %p926 = pneg %p741
      $region122: #{_lambda_.1} parent=11 // pred_check_branch
        %928 = sbr.rel (%p926) target = $region124
      $region123: #{_lambda_.1} parent=11 // pred_region
        _
      $region124: #{_lambda_.1} parent=11 // pred_fallthru
        _
      // Predicated region
      $region125: #{_lambda_.1} parent=11 // pred_check
        %p929 = pneg %p762
      $region126: #{_lambda_.1} parent=11 // pred_check_branch
        %931 = sbr.rel (%p929) target = $region128
      $region127: #{_lambda_.1} parent=11 // pred_region
        _
      $region128: #{_lambda_.1} parent=11 // pred_fallthru
        _
      // Predicated region
      $region129: #{_lambda_.1} parent=11 // pred_check
        %p932 = pneg %p783
      $region130: #{_lambda_.1} parent=11 // pred_check_branch
        %934 = sbr.rel (%p932) target = $region132
      $region131: #{_lambda_.1} parent=11 // pred_region
        _
      $region132: #{_lambda_.1} parent=11 // pred_fallthru
        _
      // Predicated region
      $region133: #{_lambda_.1} parent=11 // pred_check
        %p935 = pneg %p804
      $region134: #{_lambda_.1} parent=11 // pred_check_branch
        %937 = sbr.rel (%p935) target = $region136
      $region135: #{_lambda_.1} parent=11 // pred_region
        _
      $region136: #{_lambda_.1} parent=11 // pred_fallthru
        _
    $region12: #{_lambda_.1} parent=5 // pred_fallthru
      _
    %p938 = scmp.lt.s32.totalorder %s75, 2
    // Predicated region
    $region137: #{_lambda_.1} parent=5 // pred_check
      %p939 = pneg %p938
    $region138: #{_lambda_.1} parent=5 // pred_check_branch
      %941 = sbr.rel (%p939) target = $region140
    $region139: #{_lambda_.1} parent=5 // pred_region
      // Predicated region
      $region141: #{_lambda_.1} parent=139 // pred_check
        %p942 = pneg %p95
      $region142: #{_lambda_.1} parent=139 // pred_check_branch
        %944 = sbr.rel (%p942) target = $region144
      $region143: #{_lambda_.1} parent=139 // pred_region
        %p945 = scmp.lt.s32.totalorder %s75, 1
        %s946 = scalar_select %p945, %s75, 1
        %s947 = smul.addr %s946, 8
        %s948 = scalar_lea.vmem %s1, %s947
      $region144: #{_lambda_.1} parent=139 // pred_fallthru
        _
      // Predicated region
      $region145: #{_lambda_.1} parent=139 // pred_check
        %p949 = pneg %p121
      $region146: #{_lambda_.1} parent=139 // pred_check_branch
        %951 = sbr.rel (%p949) target = $region148
      $region147: #{_lambda_.1} parent=139 // pred_region
        %p952 = scmp.lt.s32.totalorder %s75, 1
        %s953 = scalar_select %p952, %s75, 1
        %s954 = scalar_lea.vmem %s3, %s953
      $region148: #{_lambda_.1} parent=139 // pred_fallthru
        _
      // Predicated region
      $region149: #{_lambda_.1} parent=139 // pred_check
        %p955 = pneg %p147
      $region150: #{_lambda_.1} parent=139 // pred_check_branch
        %957 = sbr.rel (%p955) target = $region152
      $region151: #{_lambda_.1} parent=139 // pred_region
        %p958 = scmp.lt.s32.totalorder %s75, 1
        %s959 = scalar_select %p958, %s75, 1
        %s960 = smul.addr %s959, 8
        %s961 = scalar_lea.vmem %s5, %s960
      $region152: #{_lambda_.1} parent=139 // pred_fallthru
        _
    $region140: #{_lambda_.1} parent=5 // pred_fallthru
      _
    %p962 = scmp.le.s32.totalorder 1, %s75
    %p963 = scmp.lt.s32.totalorder %s75, 3
    %p964 = pnand %p962, %p963
    %p965 = pneg %p964
    // Predicated region
    $region153: #{_lambda_.1} parent=5 // pred_check
      _
    $region154: #{_lambda_.1} parent=5 // pred_check_branch
      %967 = sbr.rel (%p964) target = $region156
    $region155: #{_lambda_.1} parent=5 // pred_region
      %s968 = ssub.s32 %s75, 1
      %p969 = scmp.lt.s32.totalorder %s80, 1
      %s970 = scalar_select %p969, %s80, 1
      %s971 = smul.addr %s970, 8
      %s972 = scalar_lea.vmem %s1, %s971
      %p973 = pneg %p101
      %p974 = pneg %p98
      %p975 = scmp.lt.s32.totalorder %s80, 1
      %s976 = scalar_select %p975, %s80, 1
      %s977 = scalar_lea.vmem %s3, %s976
      %p978 = pneg %p127
      %p979 = pneg %p124
      %p980 = scmp.lt.s32.totalorder %s80, 1
      %s981 = scalar_select %p980, %s80, 1
      %s982 = smul.addr %s981, 8
      %s983 = scalar_lea.vmem %s5, %s982
      %p984 = pneg %p153
      %p985 = pneg %p150
      %p986 = pneg %p174
      %p987 = pneg %p171
      %p988 = pneg %p195
      %p989 = pneg %p192
      %p990 = pneg %p216
      %p991 = pneg %p213
      %p992 = pneg %p237
      %p993 = pneg %p234
      %p994 = pneg %p258
      %p995 = pneg %p255
      %p996 = pneg %p279
      %p997 = pneg %p276
      %p998 = pneg %p300
      %p999 = pneg %p297
      %p1000 = pneg %p321
      %p1001 = pneg %p318
      %p1002 = pneg %p342
      %p1003 = pneg %p339
      %p1004 = pneg %p363
      %p1005 = pneg %p360
      %p1006 = pneg %p384
      %p1007 = pneg %p381
      %p1008 = pneg %p405
      %p1009 = pneg %p402
      %p1010 = pneg %p426
      %p1011 = pneg %p423
      %p1012 = pneg %p447
      %p1013 = pneg %p444
      %p1014 = pneg %p468
      %p1015 = pneg %p465
      %p1016 = pneg %p489
      %p1017 = pneg %p486
      %p1018 = pneg %p510
      %p1019 = pneg %p507
      %p1020 = pneg %p531
      %p1021 = pneg %p528
      %p1022 = pneg %p552
      %p1023 = pneg %p549
      %p1024 = pneg %p573
      %p1025 = pneg %p570
      %p1026 = pneg %p594
      %p1027 = pneg %p591
      %p1028 = pneg %p615
      %p1029 = pneg %p612
      %p1030 = pneg %p636
      %p1031 = pneg %p633
      %p1032 = pneg %p657
      %p1033 = pneg %p654
      %p1034 = pneg %p678
      %p1035 = pneg %p675
      %p1036 = pneg %p699
      %p1037 = pneg %p696
      %p1038 = pneg %p720
      %p1039 = pneg %p717
      %p1040 = pneg %p741
      %p1041 = pneg %p738
      %p1042 = pneg %p762
      %p1043 = pneg %p759
      %p1044 = pneg %p783
      %p1045 = pneg %p780
      %p1046 = pneg %p804
      %p1047 = pneg %p801
      %p1048 = pneg %p830
      %p1049 = pneg %p827
      %p1050 = scmp.lt.s32.totalorder %s80, 1
      %s1051 = scalar_select %p1050, %s80, 1
      %s1052 = smul.addr %s1051, 8
      %s1053 = scalar_lea.vmem %s69, %s1052
      %p1054 = scmp.lt.s32.totalorder %s80, 1
      %s1055 = scalar_select %p1054, %s80, 1
      %s1056 = smul.addr %s1055, 8
      %s1057 = scalar_lea.vmem %s1, %s1056
      %p1058 = scmp.lt.s32.totalorder %s80, 1
      %s1059 = scalar_select %p1058, %s80, 1
      %s1060 = scalar_lea.vmem %s3, %s1059
      %p1061 = scmp.lt.s32.totalorder %s80, 1
      %s1062 = scalar_select %p1061, %s80, 1
      %s1063 = smul.addr %s1062, 8
      %s1064 = scalar_lea.vmem %s5, %s1063
      %p1065 = scmp.lt.s32.totalorder %s80, 1
      %s1066 = scalar_select %p1065, %s80, 1
      %s1067 = smul.addr %s1066, 8
      %s1068 = scalar_lea.vmem %s69, %s1067
      %v1070 = vld [vmem:[%s1057] sm:$0xff]
      %v1071 = vld [vmem:[%s1060] sm:$0x1]
      %v1072 = vld [vmem:[%s1064] sm:$0xff]
      %v1073 = vld [vmem:[%s7] sm:$0xf]
      %v1074 = vld [vmem:[%s7 + $0x4] sm:$0xf]
      %v1075 = vld [vmem:[%s7 + $0x8] sm:$0xf]
      %v1076 = vld [vmem:[%s7 + $0xc] sm:$0xf]
      %v1077 = vpack.c.bf16 %v1070, %v1070
      %v1078 = vld [vmem:[%s9] sm:$0x1]
      %v1080 = vlaneseq
      %v1081 = vshrl.u32 %v1080, 7
      %v1082 = vsub.s32 0, %v1081
      %v1083 = vrot.slane %v1078, %v1082
      %v1089 = vunpack.c.l.b16 %v1073
      %v1090 = vunpack.c.l.b16 %v1074
      %v1091 = vunpack.c.l.b16 %v1075
      %v1092 = vunpack.c.l.b16 %v1076
      %v1093 = vpack.c.b16 %v1090, %v1089
      %v1094 = vpack.c.b16 %v1092, %v1091
      %vm1097 = vcmask 261120
      %v1099 = vsel %vm1097, %v1077, 0
      %1101 = vmatprep.subr.bf16.mxu0 0
      %1102 = vmatpush1.bf16.msra.mxu0 0
      %1103 = vmatprep.subr.bf16.mxu0 0
      %1104 = vmatpush1.bf16.msra.mxu0 0
      %1105 = vmatprep.subr.bf16.mxu0 0
      %1106 = vmatpush1.bf16.msra.mxu0 0
      %1107 = vmatprep.subr.bf16.mxu0 0
      %1108 = vmatpush1.bf16.msra.mxu0 0
      %1109 = vmatprep.subr.bf16.mxu0 0
      %1110 = vmatpush1.bf16.msra.mxu0 0
      %1111 = vmatprep.subr.bf16.mxu0 0
      %1112 = vmatpush1.bf16.msra.mxu0 0
      %1113 = vmatprep.subr.bf16.mxu0 0
      %1114 = vmatpush1.bf16.msra.mxu0 %v1094
      %1115 = vmatprep.subr.bf16.mxu0 0
      %1116 = vmatpush1.bf16.msra.mxu0 %v1093
      %1117 = vmatprep.subr.bf16.mxu0 0
      %1118 = vmatpush2.bf16.msra.mxu0 0
      %1119 = vmatprep.subr.bf16.mxu0 0
      %1120 = vmatpush2.bf16.msra.mxu0 0
      %1121 = vmatprep.subr.bf16.mxu0 0
      %1122 = vmatpush2.bf16.msra.mxu0 0
      %1123 = vmatprep.subr.bf16.mxu0 0
      %1124 = vmatpush2.bf16.msra.mxu0 0
      %1125 = vmatprep.subr.bf16.mxu0 0
      %1126 = vmatpush2.bf16.msra.mxu0 0
      %1127 = vmatprep.subr.bf16.mxu0 0
      %1128 = vmatpush2.bf16.msra.mxu0 0
      %1129 = vmatprep.subr.bf16.mxu0 0
      %1130 = vmatpush2.bf16.msra.mxu0 0
      %1131 = vmatprep.subr.bf16.mxu0 0
      %1132 = vmatpush2.bf16.msra.mxu0 0
      %1133 = vmatprep.mubr.bf16.mxu0 0
      %1134 = vmatmul.mubr.bf16.gmra.mxu0 %v1099
      %v1135 = vpop.f32.mrf.mxu0
      %v1136 = vadd.f32 %v1083, %v1135
      %v1137 = vpop.f32.mrf.mxu0
      %v1138 = vpop.f32.mrf.mxu0
      %v1139 = vpop.f32.mrf.mxu0
      %1140 = vdwg.mxu0
      %v1141 = vld [vmem:[%s11] sm:$0xff]
      %v1142 = vadd.f32 %v1136, %v1141
      %v1143 = vld [vmem:[%s13] sm:$0xf]
      %v1144 = vld [vmem:[%s13 + $0x4] sm:$0xf]
      %v1145 = vld [vmem:[%s13 + $0x8] sm:$0xf]
      %v1146 = vld [vmem:[%s13 + $0xc] sm:$0xf]
      %v1147 = vpack.c.bf16 %v1142, %v1142
      %v1148 = vld [vmem:[%s15] sm:$0x1]
      %v1150 = vlaneseq
      %v1151 = vshrl.u32 %v1150, 7
      %v1152 = vsub.s32 0, %v1151
      %v1153 = vrot.slane %v1148, %v1152
      %v1159 = vunpack.c.l.b16 %v1143
      %v1160 = vunpack.c.l.b16 %v1144
      %v1161 = vunpack.c.l.b16 %v1145
      %v1162 = vunpack.c.l.b16 %v1146
      %v1163 = vpack.c.b16 %v1160, %v1159
      %v1164 = vpack.c.b16 %v1162, %v1161
      %v1168 = vsel %vm1097, %v1147, 0
      %1170 = vmatprep.subr.bf16.mxu0 0
      %1171 = vmatpush1.bf16.msra.mxu0 0
      %1172 = vmatprep.subr.bf16.mxu0 0
      %1173 = vmatpush1.bf16.msra.mxu0 0
      %1174 = vmatprep.subr.bf16.mxu0 0
      %1175 = vmatpush1.bf16.msra.mxu0 0
      %1176 = vmatprep.subr.bf16.mxu0 0
      %1177 = vmatpush1.bf16.msra.mxu0 0
      %1178 = vmatprep.subr.bf16.mxu0 0
      %1179 = vmatpush1.bf16.msra.mxu0 0
      %1180 = vmatprep.subr.bf16.mxu0 0
      %1181 = vmatpush1.bf16.msra.mxu0 0
      %1182 = vmatprep.subr.bf16.mxu0 0
      %1183 = vmatpush1.bf16.msra.mxu0 %v1164
      %1184 = vmatprep.subr.bf16.mxu0 0
      %1185 = vmatpush1.bf16.msra.mxu0 %v1163
      %1186 = vmatprep.subr.bf16.mxu0 0
      %1187 = vmatpush2.bf16.msra.mxu0 0
      %1188 = vmatprep.subr.bf16.mxu0 0
      %1189 = vmatpush2.bf16.msra.mxu0 0
      %1190 = vmatprep.subr.bf16.mxu0 0
      %1191 = vmatpush2.bf16.msra.mxu0 0
      %1192 = vmatprep.subr.bf16.mxu0 0
      %1193 = vmatpush2.bf16.msra.mxu0 0
      %1194 = vmatprep.subr.bf16.mxu0 0
      %1195 = vmatpush2.bf16.msra.mxu0 0
      %1196 = vmatprep.subr.bf16.mxu0 0
      %1197 = vmatpush2.bf16.msra.mxu0 0
      %1198 = vmatprep.subr.bf16.mxu0 0
      %1199 = vmatpush2.bf16.msra.mxu0 0
      %1200 = vmatprep.subr.bf16.mxu0 0
      %1201 = vmatpush2.bf16.msra.mxu0 0
      %1202 = vmatprep.mubr.bf16.mxu0 0
      %1203 = vmatmul.mubr.bf16.gmra.mxu0 %v1168
      %v1204 = vpop.f32.mrf.mxu0
      %v1205 = vadd.f32 %v1153, %v1204
      %v1206 = vpop.f32.mrf.mxu0
      %v1207 = vpop.f32.mrf.mxu0
      %v1208 = vpop.f32.mrf.mxu0
      %1209 = vdwg.mxu0
      %v1210 = vld [vmem:[%s19] sm:$0x1]
      %v1212 = vrot.slane %v1205, 6
      %vm1214 = vcmask 1041408
      %v1215 = vsel %vm1214, 0.0, %v1212
      %v1216 = vld [vmem:[%s17] sm:$0x1]
      %v1217 = vlaneseq
      %v1218 = vshrl.u32 %v1217, 7
      %v1219 = vsub.s32 0, %v1218
      %v1220 = vrot.slane %v1216, %v1219
      %v1221 = vmul.f32 %v1215, %v1220
      %v1223 = vlaneseq
      %v1224 = vshrl.u32 %v1223, 7
      %v1225 = vsub.s32 0, %v1224
      %v1226 = vrot.slane %v1210, %v1225
      %v1228 = vadd.f32 %v1226, %v1221
      %v1229 = vrot.slane %v1205, 7
      %vm1231 = vcmask 1040384
      %v1232 = vsel %vm1231, 0.0, %v1229
      %v1233 = vld [vmem:[%s17 + $0x1] sm:$0x1]
      %v1234 = vlaneseq
      %v1235 = vshrl.u32 %v1234, 7
      %v1236 = vsub.s32 0, %v1235
      %v1237 = vrot.slane %v1233, %v1236
      %v1238 = vmul.f32 %v1232, %v1237
      %v1239 = vadd.f32 %v1228, %v1238
      %v1240 = vld [vmem:[%s17 + $0x2] sm:$0x1]
      %v1241 = vlaneseq
      %v1242 = vshrl.u32 %v1241, 7
      %v1243 = vsub.s32 0, %v1242
      %v1244 = vrot.slane %v1240, %v1243
      %v1245 = vmul.f32 %v1205, %v1244
      %v1246 = vadd.f32 %v1239, %v1245
      %v1247 = vxor.u32 %v1246, 2147483648
      %v1248 = vmul.f32 %v1247, 1.442695
      %v1249 = vpow.pop %v1248
      %v1250 = vadd.f32 %v1249, 1.0
      %v1251 = vrcp.pop %v1250
      %v1252 = vmul.f32 1.0, %v1251
      %v1253 = vmul.f32 %v1246, %v1252
      %v1254 = vld [vmem:[%s21] sm:$0xf]
      %v1255 = vld [vmem:[%s21 + $0x4] sm:$0xf]
      %v1256 = vld [vmem:[%s21 + $0x8] sm:$0xf]
      %v1257 = vld [vmem:[%s21 + $0xc] sm:$0xf]
      %v1258 = vld [vmem:[%s21 + $0x10] sm:$0xf]
      %v1259 = vld [vmem:[%s21 + $0x14] sm:$0xf]
      %v1260 = vld [vmem:[%s21 + $0x18] sm:$0xf]
      %v1261 = vld [vmem:[%s21 + $0x1c] sm:$0xf]
      %v1262 = vpack.c.bf16 %v1253, %v1253
      %v1263 = vld [vmem:[%s23] sm:$0x1]
      %v1265 = vlaneseq
      %v1266 = vshrl.u32 %v1265, 7
      %v1267 = vsub.s32 0, %v1266
      %v1268 = vrot.slane %v1263, %v1267
      %v1278 = vunpack.c.l.b16 %v1254
      %v1279 = vunpack.c.l.b16 %v1255
      %v1280 = vunpack.c.l.b16 %v1256
      %v1281 = vunpack.c.l.b16 %v1257
      %v1282 = vunpack.c.l.b16 %v1258
      %v1283 = vunpack.c.l.b16 %v1259
      %v1284 = vunpack.c.l.b16 %v1260
      %v1285 = vunpack.c.l.b16 %v1261
      %v1286 = vpack.c.b16 %v1279, %v1278
      %v1287 = vpack.c.b16 %v1281, %v1280
      %v1288 = vpack.c.b16 %v1283, %v1282
      %v1289 = vpack.c.b16 %v1285, %v1284
      %vm1294 = vcmask 523264
      %v1296 = vsel %vm1294, %v1262, 0
      %1298 = vmatprep.subr.bf16.mxu0 0
      %1299 = vmatpush1.bf16.msra.mxu0 0
      %1300 = vmatprep.subr.bf16.mxu0 0
      %1301 = vmatpush1.bf16.msra.mxu0 0
      %1302 = vmatprep.subr.bf16.mxu0 0
      %1303 = vmatpush1.bf16.msra.mxu0 0
      %1304 = vmatprep.subr.bf16.mxu0 0
      %1305 = vmatpush1.bf16.msra.mxu0 0
      %1306 = vmatprep.subr.bf16.mxu0 0
      %1307 = vmatpush1.bf16.msra.mxu0 %v1289
      %1308 = vmatprep.subr.bf16.mxu0 0
      %1309 = vmatpush1.bf16.msra.mxu0 %v1288
      %1310 = vmatprep.subr.bf16.mxu0 0
      %1311 = vmatpush1.bf16.msra.mxu0 %v1287
      %1312 = vmatprep.subr.bf16.mxu0 0
      %1313 = vmatpush1.bf16.msra.mxu0 %v1286
      %1314 = vmatprep.subr.bf16.mxu0 0
      %1315 = vmatpush2.bf16.msra.mxu0 0
      %1316 = vmatprep.subr.bf16.mxu0 0
      %1317 = vmatpush2.bf16.msra.mxu0 0
      %1318 = vmatprep.subr.bf16.mxu0 0
      %1319 = vmatpush2.bf16.msra.mxu0 0
      %1320 = vmatprep.subr.bf16.mxu0 0
      %1321 = vmatpush2.bf16.msra.mxu0 0
      %1322 = vmatprep.subr.bf16.mxu0 0
      %1323 = vmatpush2.bf16.msra.mxu0 0
      %1324 = vmatprep.subr.bf16.mxu0 0
      %1325 = vmatpush2.bf16.msra.mxu0 0
      %1326 = vmatprep.subr.bf16.mxu0 0
      %1327 = vmatpush2.bf16.msra.mxu0 0
      %1328 = vmatprep.subr.bf16.mxu0 0
      %1329 = vmatpush2.bf16.msra.mxu0 0
      %1330 = vmatprep.mubr.bf16.mxu0 0
      %1331 = vmatmul.mubr.bf16.gmra.mxu0 %v1296
      %v1332 = vpop.f32.mrf.mxu0
      %v1333 = vadd.f32 %v1268, %v1332
      %v1334 = vpop.f32.mrf.mxu0
      %v1335 = vpop.f32.mrf.mxu0
      %v1336 = vpop.f32.mrf.mxu0
      %1337 = vdwg.mxu0
      %v1338 = vld [vmem:[%s25] sm:$0x1]
      %v1339 = vpack.c.bf16 %v1333, %v1333
      %v1340 = vld [vmem:[%s27] sm:$0x1]
      %v1342 = vlaneseq
      %v1343 = vshrl.u32 %v1342, 7
      %v1344 = vsub.s32 0, %v1343
      %v1345 = vrot.slane %v1340, %v1344
      %vm1347 = vcmask 15360
      %v1349 = vsel %vm1347, %v1339, 0
      %v1352 = vsel %vm1231, %v1338, 0
      %1354 = vmatprep.subr.bf16.mxu0 0
      %1355 = vmatpush1.bf16.msra.mxu0 0
      %1356 = vmatprep.subr.bf16.mxu0 0
      %1357 = vmatpush1.bf16.msra.mxu0 0
      %1358 = vmatprep.subr.bf16.mxu0 0
      %1359 = vmatpush1.bf16.msra.mxu0 0
      %1360 = vmatprep.subr.bf16.mxu0 0
      %1361 = vmatpush1.bf16.msra.mxu0 0
      %1362 = vmatprep.subr.bf16.mxu0 0
      %1363 = vmatpush1.bf16.msra.mxu0 0
      %1364 = vmatprep.subr.bf16.mxu0 0
      %1365 = vmatpush1.bf16.msra.mxu0 0
      %1366 = vmatprep.subr.bf16.mxu0 0
      %1367 = vmatpush1.bf16.msra.mxu0 0
      %1368 = vmatprep.subr.bf16.mxu0 0
      %1369 = vmatpush1.bf16.msra.mxu0 %v1352
      %1370 = vmatprep.subr.bf16.mxu0 0
      %1371 = vmatpush2.bf16.msra.mxu0 0
      %1372 = vmatprep.subr.bf16.mxu0 0
      %1373 = vmatpush2.bf16.msra.mxu0 0
      %1374 = vmatprep.subr.bf16.mxu0 0
      %1375 = vmatpush2.bf16.msra.mxu0 0
      %1376 = vmatprep.subr.bf16.mxu0 0
      %1377 = vmatpush2.bf16.msra.mxu0 0
      %1378 = vmatprep.subr.bf16.mxu0 0
      %1379 = vmatpush2.bf16.msra.mxu0 0
      %1380 = vmatprep.subr.bf16.mxu0 0
      %1381 = vmatpush2.bf16.msra.mxu0 0
      %1382 = vmatprep.subr.bf16.mxu0 0
      %1383 = vmatpush2.bf16.msra.mxu0 0
      %1384 = vmatprep.subr.bf16.mxu0 0
      %1385 = vmatpush2.bf16.msra.mxu0 0
      %1386 = vmatprep.mubr.bf16.mxu0 0
      %1387 = vmatmul.mubr.bf16.gmra.mxu0 %v1349
      %v1388 = vpop.f32.mrf.mxu0
      %v1389 = vadd.f32 %v1345, %v1388
      %v1390 = vpop.f32.mrf.mxu0
      %v1391 = vpop.f32.mrf.mxu0
      %v1392 = vpop.f32.mrf.mxu0
      %1393 = vdwg.mxu0
      %v1394 = vmax.f32 %v1389, 0.0
      %vm1395 = vcmp.ne.f32.partialorder %v1389, %v1389
      %v1396 = vadd.f32 %v1389, 0.0
      %v1397 = vand.u32 2147483647, %v1389
      %v1398 = vsub.f32 0.0, %v1397
      %v1399 = vmul.f32 %v1398, 1.442695
      %v1400 = vpow.pop %v1399
      %v1401 = vadd.f32 %v1400, 1.0
      %v1402 = vlog2.pop %v1401
      %v1403 = vmul.f32 %v1402, 0.6931472
      %v1404 = vmul.f32 -0.5, %v1400
      %v1405 = vadd.f32 %v1404, 1.0
      %v1406 = vmul.f32 %v1405, %v1400
      %v1407 = vand.u32 2147483647, %v1400
      %vm1408 = vcmp.lt.f32.partialorder %v1407, 0.0004427343
      %v1409 = vsel %vm1408, %v1406, %v1403
      %v1410 = vadd.f32 %v1394, %v1409
      %v1411 = vsel %vm1395, %v1396, %v1410
      %v1412 = vmul.f32 %v1411, %v1253
      %1414 = vrot.lane.b32.xlu0 %v1411, 64
      %v1415 = vpop.permute.xlu0 %1414
      %v1417 = vsel %vm1294, %v1411, %v1415
      %v1418 = vld [vmem:[%s29] sm:$0xf]
      %v1420 = vlaneseq
      %v1421 = vshrl.u32 %v1420, 7
      %v1422 = vsub.s32 0, %v1421
      %v1423 = vrot.slane %v1418, %v1422
      %v1424 = vlaneseq
      %v1425 = vshrl.u32 %v1424, 7
      %v1426 = vsub.s32 1, %v1425
      %v1427 = vrot.slane %v1418, %v1426
      %v1428 = vlaneseq
      %v1429 = vshrl.u32 %v1428, 7
      %v1430 = vsub.s32 2, %v1429
      %v1431 = vrot.slane %v1418, %v1430
      %v1432 = vlaneseq
      %v1433 = vshrl.u32 %v1432, 7
      %v1434 = vsub.s32 3, %v1433
      %v1435 = vrot.slane %v1418, %v1434
      %v1440 = vmul.f32 %v1417, %v1423
      %v1441 = vmul.f32 %v1417, %v1427
      %v1442 = vmul.f32 %v1417, %v1431
      %v1443 = vmul.f32 %v1417, %v1435
      %v1444 = vmul.f32 %v1440, 1.442695
      %v1445 = vpow.pop %v1444
      %v1446 = vmul.f32 %v1441, 1.442695
      %v1447 = vpow.pop %v1446
      %v1448 = vmul.f32 %v1442, 1.442695
      %v1449 = vpow.pop %v1448
      %v1450 = vmul.f32 %v1443, 1.442695
      %v1451 = vpow.pop %v1450
      %1452 = vst [vmem:[#allocation2] sm:$0xff] %v1445
      %1453 = vst [vmem:[#allocation2 + $0x8] sm:$0xff] %v1447
      %1454 = vst [vmem:[#allocation2 + $0x10] sm:$0xff] %v1449
      %1455 = vst [vmem:[#allocation2 + $0x18] sm:$0xff] %v1451
      %1457 = vset.pattern.permute.xlu0 2
      %1458 = vperm.xlu0 %1457, %v1333
      %v1459 = vpop.permute.xlu0 %1458
      %v1461 = vmul.f32 %v1459, %v1412
      %1462 = vset.pattern.permute.xlu0 3
      %1463 = vperm.xlu0 %1462, %v1333
      %v1464 = vpop.permute.xlu0 %1463
      %v1466 = vmul.f32 %v1464, %v1412
      %1467 = vset.pattern.permute.xlu0 4
      %1468 = vperm.xlu0 %1467, %v1333
      %v1469 = vpop.permute.xlu0 %1468
      %v1471 = vmul.f32 %v1469, %v1412
      %1472 = vset.pattern.permute.xlu0 5
      %1473 = vperm.xlu0 %1472, %v1333
      %v1474 = vpop.permute.xlu0 %1473
      %v1476 = vmul.f32 %v1474, %v1412
      %1477 = vset.pattern.permute.xlu0 6
      %1478 = vperm.xlu0 %1477, %v1333
      %v1479 = vpop.permute.xlu0 %1478
      %v1481 = vmul.f32 %v1479, %v1412
      %1482 = vset.pattern.permute.xlu0 7
      %1483 = vperm.xlu0 %1482, %v1333
      %v1484 = vpop.permute.xlu0 %1483
      %v1486 = vmul.f32 %v1484, %v1412
      %1487 = vset.pattern.permute.xlu0 8
      %1488 = vperm.xlu0 %1487, %v1333
      %v1489 = vpop.permute.xlu0 %1488
      %v1491 = vmul.f32 %v1489, %v1412
      %1492 = vset.pattern.permute.xlu0 9
      %1493 = vperm.xlu0 %1492, %v1333
      %v1494 = vpop.permute.xlu0 %1493
      %v1496 = vmul.f32 %v1494, %v1412
      %1498 = vrot.lane.b32.xlu0 %v1466, 64
      %v1499 = vpop.permute.xlu0 %1498
      %1502 = vrot.lane.b32.xlu0 %v1476, 64
      %v1503 = vpop.permute.xlu0 %1502
      %1506 = vrot.lane.b32.xlu0 %v1486, 64
      %v1507 = vpop.permute.xlu0 %1506
      %1510 = vrot.lane.b32.xlu0 %v1496, 64
      %v1511 = vpop.permute.xlu0 %1510
      %v1513 = vsel %vm1294, %v1461, %v1499
      %v1514 = vsel %vm1294, %v1471, %v1503
      %v1515 = vsel %vm1294, %v1481, %v1507
      %v1516 = vsel %vm1294, %v1491, %v1511
      %1517 = vst [vmem:[#allocation3] sm:$0xff] %v1513
      %1518 = vst [vmem:[#allocation3 + $0x8] sm:$0xff] %v1514
      %1519 = vst [vmem:[#allocation3 + $0x10] sm:$0xff] %v1515
      %1520 = vst [vmem:[#allocation3 + $0x18] sm:$0xff] %v1516
      %v1521 = vld [vmem:[#allocation2] ss:$8 sm:$0xf]
      %v1522 = vmul.f32 %v1521, 0.0
      %v1523 = vld [vmem:[#allocation3] ss:$8 sm:$0xf]
      %v1524 = vadd.f32 %v1522, %v1523
      %v1525 = vlaneseq
      %vm1526 = vcmp.ge.s32.totalorder %v1525, 0
      %vm1527 = vcmp.lt.s32.totalorder %v1525, 512
      %vm1528 = vmand %vm1526, %vm1527
      %1529 = vst.msk [vmem:[#allocation4] ss:$8 sm:$0xf] %vm1528, %v1524
      %1530 = vst.msk [vmem:[#allocation4] ss:$8 sm:$0x0] %vm1528, %v1524
      %s1531 = scalar_lea.vmem [#allocation2], 1
      %v1532 = vld [vmem:[%s1531] ss:$8 sm:$0xf]
      %v1533 = vmul.f32 %v1532, %v1524
      %s1534 = scalar_lea.vmem [#allocation3], 1
      %v1535 = vld [vmem:[%s1534] ss:$8 sm:$0xf]
      %v1536 = vadd.f32 %v1533, %v1535
      %s1537 = scalar_lea.vmem [#allocation4], 1
      %1538 = vst.msk [vmem:[%s1537] ss:$8 sm:$0xf] %vm1528, %v1536
      %1539 = vst.msk [vmem:[%s1537] ss:$8 sm:$0x0] %vm1528, %v1536
      %s1540 = scalar_lea.vmem [#allocation2], 2
      %v1541 = vld [vmem:[%s1540] ss:$8 sm:$0xf]
      %v1542 = vmul.f32 %v1541, %v1536
      %s1543 = scalar_lea.vmem [#allocation3], 2
      %v1544 = vld [vmem:[%s1543] ss:$8 sm:$0xf]
      %v1545 = vadd.f32 %v1542, %v1544
      %s1546 = scalar_lea.vmem [#allocation4], 2
      %1547 = vst.msk [vmem:[%s1546] ss:$8 sm:$0xf] %vm1528, %v1545
      %1548 = vst.msk [vmem:[%s1546] ss:$8 sm:$0x0] %vm1528, %v1545
      %s1549 = scalar_lea.vmem [#allocation2], 3
      %v1550 = vld [vmem:[%s1549] ss:$8 sm:$0xf]
      %v1551 = vmul.f32 %v1550, %v1545
      %s1552 = scalar_lea.vmem [#allocation3], 3
      %v1553 = vld [vmem:[%s1552] ss:$8 sm:$0xf]
      %v1554 = vadd.f32 %v1551, %v1553
      %s1555 = scalar_lea.vmem [#allocation4], 3
      %1556 = vst.msk [vmem:[%s1555] ss:$8 sm:$0xf] %vm1528, %v1554
      %1557 = vst.msk [vmem:[%s1555] ss:$8 sm:$0x0] %vm1528, %v1554
      %s1558 = scalar_lea.vmem [#allocation2], 4
      %v1559 = vld [vmem:[%s1558] ss:$8 sm:$0xf]
      %v1560 = vmul.f32 %v1559, %v1554
      %s1561 = scalar_lea.vmem [#allocation3], 4
      %v1562 = vld [vmem:[%s1561] ss:$8 sm:$0xf]
      %v1563 = vadd.f32 %v1560, %v1562
      %s1564 = scalar_lea.vmem [#allocation4], 4
      %1565 = vst.msk [vmem:[%s1564] ss:$8 sm:$0xf] %vm1528, %v1563
      %1566 = vst.msk [vmem:[%s1564] ss:$8 sm:$0x0] %vm1528, %v1563
      %s1567 = scalar_lea.vmem [#allocation2], 5
      %v1568 = vld [vmem:[%s1567] ss:$8 sm:$0xf]
      %v1569 = vmul.f32 %v1568, %v1563
      %s1570 = scalar_lea.vmem [#allocation3], 5
      %v1571 = vld [vmem:[%s1570] ss:$8 sm:$0xf]
      %v1572 = vadd.f32 %v1569, %v1571
      %s1573 = scalar_lea.vmem [#allocation4], 5
      %1574 = vst.msk [vmem:[%s1573] ss:$8 sm:$0xf] %vm1528, %v1572
      %1575 = vst.msk [vmem:[%s1573] ss:$8 sm:$0x0] %vm1528, %v1572
      %s1576 = scalar_lea.vmem [#allocation2], 6
      %v1577 = vld [vmem:[%s1576] ss:$8 sm:$0xf]
      %v1578 = vmul.f32 %v1577, %v1572
      %s1579 = scalar_lea.vmem [#allocation3], 6
      %v1580 = vld [vmem:[%s1579] ss:$8 sm:$0xf]
      %v1581 = vadd.f32 %v1578, %v1580
      %s1582 = scalar_lea.vmem [#allocation4], 6
      %1583 = vst.msk [vmem:[%s1582] ss:$8 sm:$0xf] %vm1528, %v1581
      %1584 = vst.msk [vmem:[%s1582] ss:$8 sm:$0x0] %vm1528, %v1581
      %s1585 = scalar_lea.vmem [#allocation2], 7
      %v1586 = vld [vmem:[%s1585] ss:$8 sm:$0xf]
      %v1587 = vmul.f32 %v1586, %v1581
      %s1588 = scalar_lea.vmem [#allocation3], 7
      %v1589 = vld [vmem:[%s1588] ss:$8 sm:$0xf]
      %v1590 = vadd.f32 %v1587, %v1589
      %s1591 = scalar_lea.vmem [#allocation4], 7
      %1592 = vst.msk [vmem:[%s1591] ss:$8 sm:$0xf] %vm1528, %v1590
      %1593 = vst.msk [vmem:[%s1591] ss:$8 sm:$0x0] %vm1528, %v1590
      %v1594 = vld [vmem:[#allocation4] sm:$0xff]
      %v1595 = vld [vmem:[#allocation4 + $0x8] sm:$0xff]
      %v1596 = vld [vmem:[#allocation4 + $0x10] sm:$0xff]
      %v1597 = vld [vmem:[#allocation4 + $0x18] sm:$0xff]
      %v1598 = vld [vmem:[%s31] sm:$0x1]
      %v1600 = vlaneseq
      %v1601 = vshrl.u32 %v1600, 7
      %v1602 = vsub.s32 0, %v1601
      %v1603 = vrot.slane %v1598, %v1602
      %v1605 = vmul.f32 %v1253, %v1603
      %1606 = vset.pattern.permute.xlu0 10
      %1607 = vperm.xlu0 %1606, %v1333
      %v1608 = vpop.permute.xlu0 %1607
      %v1610 = vmul.f32 %v1608, %v1594
      %v1611 = vadd.f32 %v1605, %v1610
      %1612 = vset.pattern.permute.xlu0 11
      %1613 = vperm.xlu0 %1612, %v1333
      %v1614 = vpop.permute.xlu0 %1613
      %v1616 = vmul.f32 %v1614, %v1594
      %1618 = vrot.lane.b32.xlu0 %v1616, 64
      %v1619 = vpop.permute.xlu0 %1618
      %v1621 = vadd.f32 %v1611, %v1619
      %1622 = vset.pattern.permute.xlu0 12
      %1623 = vperm.xlu0 %1622, %v1333
      %v1624 = vpop.permute.xlu0 %1623
      %v1626 = vmul.f32 %v1624, %v1595
      %v1627 = vadd.f32 %v1621, %v1626
      %1628 = vset.pattern.permute.xlu0 13
      %1629 = vperm.xlu0 %1628, %v1333
      %v1630 = vpop.permute.xlu0 %1629
      %v1632 = vmul.f32 %v1630, %v1595
      %1634 = vrot.lane.b32.xlu0 %v1632, 64
      %v1635 = vpop.permute.xlu0 %1634
      %v1637 = vadd.f32 %v1627, %v1635
      %1638 = vset.pattern.permute.xlu0 14
      %1639 = vperm.xlu0 %1638, %v1333
      %v1640 = vpop.permute.xlu0 %1639
      %v1642 = vmul.f32 %v1640, %v1596
      %v1643 = vadd.f32 %v1637, %v1642
      %1644 = vset.pattern.permute.xlu0 15
      %1645 = vperm.xlu0 %1644, %v1333
      %v1646 = vpop.permute.xlu0 %1645
      %v1648 = vmul.f32 %v1646, %v1596
      %1650 = vrot.lane.b32.xlu0 %v1648, 64
      %v1651 = vpop.permute.xlu0 %1650
      %v1653 = vadd.f32 %v1643, %v1651
      %1654 = vset.pattern.permute.xlu0 16
      %1655 = vperm.xlu0 %1654, %v1333
      %v1656 = vpop.permute.xlu0 %1655
      %v1658 = vmul.f32 %v1656, %v1597
      %v1659 = vadd.f32 %v1653, %v1658
      %1660 = vset.pattern.permute.xlu0 17
      %1661 = vperm.xlu0 %1660, %v1333
      %v1662 = vpop.permute.xlu0 %1661
      %v1664 = vmul.f32 %v1662, %v1597
      %1666 = vrot.lane.b32.xlu0 %v1664, 64
      %v1667 = vpop.permute.xlu0 %1666
      %v1669 = vadd.f32 %v1659, %v1667
      %v1670 = vxor.u32 %v1205, 2147483648
      %v1671 = vmul.f32 %v1670, 1.442695
      %v1672 = vpow.pop %v1671
      %v1673 = vadd.f32 %v1672, 1.0
      %v1674 = vrcp.pop %v1673
      %v1675 = vmul.f32 1.0, %v1674
      %v1676 = vmul.f32 %v1205, %v1675
      %1678 = vrot.lane.b32.xlu0 %v1676, 64
      %v1679 = vpop.permute.xlu0 %1678
      %v1681 = vmul.f32 %v1669, %v1679
      %v1682 = vld [vmem:[%s33] sm:$0xf]
      %v1683 = vld [vmem:[%s33 + $0x4] sm:$0xf]
      %v1684 = vld [vmem:[%s33 + $0x8] sm:$0xf]
      %v1685 = vld [vmem:[%s33 + $0xc] sm:$0xf]
      %v1686 = vld [vmem:[%s33 + $0x10] sm:$0xf]
      %v1687 = vld [vmem:[%s33 + $0x14] sm:$0xf]
      %v1688 = vld [vmem:[%s33 + $0x18] sm:$0xf]
      %v1689 = vld [vmem:[%s33 + $0x1c] sm:$0xf]
      %v1690 = vpack.c.bf16 %v1681, %v1681
      %v1691 = vld [vmem:[%s35] sm:$0x1]
      %v1693 = vlaneseq
      %v1694 = vshrl.u32 %v1693, 7
      %v1695 = vsub.s32 0, %v1694
      %v1696 = vrot.slane %v1691, %v1695
      %v1706 = vunpack.c.l.b16 %v1682
      %v1707 = vunpack.c.l.b16 %v1683
      %v1708 = vunpack.c.l.b16 %v1684
      %v1709 = vunpack.c.l.b16 %v1685
      %v1710 = vunpack.c.l.b16 %v1686
      %v1711 = vunpack.c.l.b16 %v1687
      %v1712 = vunpack.c.l.b16 %v1688
      %v1713 = vunpack.c.l.b16 %v1689
      %v1714 = vpack.c.b16 %v1707, %v1706
      %v1715 = vpack.c.b16 %v1709, %v1708
      %v1716 = vpack.c.b16 %v1711, %v1710
      %v1717 = vpack.c.b16 %v1713, %v1712
      %v1723 = vsel %vm1294, %v1690, 0
      %1725 = vmatprep.subr.bf16.mxu0 0
      %1726 = vmatpush1.bf16.msra.mxu0 0
      %1727 = vmatprep.subr.bf16.mxu0 0
      %1728 = vmatpush1.bf16.msra.mxu0 0
      %1729 = vmatprep.subr.bf16.mxu0 0
      %1730 = vmatpush1.bf16.msra.mxu0 0
      %1731 = vmatprep.subr.bf16.mxu0 0
      %1732 = vmatpush1.bf16.msra.mxu0 0
      %1733 = vmatprep.subr.bf16.mxu0 0
      %1734 = vmatpush1.bf16.msra.mxu0 %v1717
      %1735 = vmatprep.subr.bf16.mxu0 0
      %1736 = vmatpush1.bf16.msra.mxu0 %v1716
      %1737 = vmatprep.subr.bf16.mxu0 0
      %1738 = vmatpush1.bf16.msra.mxu0 %v1715
      %1739 = vmatprep.subr.bf16.mxu0 0
      %1740 = vmatpush1.bf16.msra.mxu0 %v1714
      %1741 = vmatprep.subr.bf16.mxu0 0
      %1742 = vmatpush2.bf16.msra.mxu0 0
      %1743 = vmatprep.subr.bf16.mxu0 0
      %1744 = vmatpush2.bf16.msra.mxu0 0
      %1745 = vmatprep.subr.bf16.mxu0 0
      %1746 = vmatpush2.bf16.msra.mxu0 0
      %1747 = vmatprep.subr.bf16.mxu0 0
      %1748 = vmatpush2.bf16.msra.mxu0 0
      %1749 = vmatprep.subr.bf16.mxu0 0
      %1750 = vmatpush2.bf16.msra.mxu0 0
      %1751 = vmatprep.subr.bf16.mxu0 0
      %1752 = vmatpush2.bf16.msra.mxu0 0
      %1753 = vmatprep.subr.bf16.mxu0 0
      %1754 = vmatpush2.bf16.msra.mxu0 0
      %1755 = vmatprep.subr.bf16.mxu0 0
      %1756 = vmatpush2.bf16.msra.mxu0 0
      %1757 = vmatprep.mubr.bf16.mxu0 0
      %1758 = vmatmul.mubr.bf16.gmra.mxu0 %v1723
      %v1759 = vpop.f32.mrf.mxu0
      %v1760 = vadd.f32 %v1696, %v1759
      %v1761 = vpop.f32.mrf.mxu0
      %v1762 = vpop.f32.mrf.mxu0
      %v1763 = vpop.f32.mrf.mxu0
      %1764 = vdwg.mxu0
      %v1765 = vadd.f32 %v1142, %v1760
      %v1766 = vld [vmem:[%s37] sm:$0x1]
      %v1767 = vld [vmem:[%s39] sm:$0x1]
      %v1768 = vsel %vm1097, %v1765, 0.0
      %1769 = vadd.xlane.f32.xlu0 %v1768
      %v1770 = vpop.xlane.xlu0 %1769
      %v1771 = vrcp.pop 32.0
      %v1772 = vmul.f32 %v1770, %v1771
      %v1773 = vsub.f32 %v1765, %v1772
      %v1774 = vmul.f32 %v1773, %v1773
      %v1775 = vsel %vm1097, %v1774, 0.0
      %1776 = vadd.xlane.f32.xlu0 %v1775
      %v1777 = vpop.xlane.xlu0 %1776
      %v1778 = vmul.f32 %v1777, %v1771
      %v1779 = vadd.f32 %v1778, 1e-05
      %v1780 = vrsqrt.pop %v1779
      %v1781 = vmul.f32 %v1773, %v1780
      %v1783 = vlaneseq
      %v1784 = vshrl.u32 %v1783, 7
      %v1785 = vsub.s32 0, %v1784
      %v1786 = vrot.slane %v1766, %v1785
      %v1788 = vmul.f32 %v1781, %v1786
      %v1790 = vlaneseq
      %v1791 = vshrl.u32 %v1790, 7
      %v1792 = vsub.s32 0, %v1791
      %v1793 = vrot.slane %v1767, %v1792
      %v1795 = vadd.f32 %v1788, %v1793
      %v1796 = vld [vmem:[%s41] sm:$0xf]
      %v1797 = vld [vmem:[%s41 + $0x4] sm:$0xf]
      %v1798 = vld [vmem:[%s41 + $0x8] sm:$0xf]
      %v1799 = vld [vmem:[%s41 + $0xc] sm:$0xf]
      %v1800 = vpack.c.bf16 %v1795, %v1795
      %v1801 = vld [vmem:[%s43] sm:$0x1]
      %v1803 = vlaneseq
      %v1804 = vshrl.u32 %v1803, 7
      %v1805 = vsub.s32 0, %v1804
      %v1806 = vrot.slane %v1801, %v1805
      %v1812 = vunpack.c.l.b16 %v1796
      %v1813 = vunpack.c.l.b16 %v1797
      %v1814 = vunpack.c.l.b16 %v1798
      %v1815 = vunpack.c.l.b16 %v1799
      %v1816 = vpack.c.b16 %v1813, %v1812
      %v1817 = vpack.c.b16 %v1815, %v1814
      %v1821 = vsel %vm1097, %v1800, 0
      %1823 = vmatprep.subr.bf16.mxu0 0
      %1824 = vmatpush1.bf16.msra.mxu0 0
      %1825 = vmatprep.subr.bf16.mxu0 0
      %1826 = vmatpush1.bf16.msra.mxu0 0
      %1827 = vmatprep.subr.bf16.mxu0 0
      %1828 = vmatpush1.bf16.msra.mxu0 0
      %1829 = vmatprep.subr.bf16.mxu0 0
      %1830 = vmatpush1.bf16.msra.mxu0 0
      %1831 = vmatprep.subr.bf16.mxu0 0
      %1832 = vmatpush1.bf16.msra.mxu0 0
      %1833 = vmatprep.subr.bf16.mxu0 0
      %1834 = vmatpush1.bf16.msra.mxu0 0
      %1835 = vmatprep.subr.bf16.mxu0 0
      %1836 = vmatpush1.bf16.msra.mxu0 %v1817
      %1837 = vmatprep.subr.bf16.mxu0 0
      %1838 = vmatpush1.bf16.msra.mxu0 %v1816
      %1839 = vmatprep.subr.bf16.mxu0 0
      %1840 = vmatpush2.bf16.msra.mxu0 0
      %1841 = vmatprep.subr.bf16.mxu0 0
      %1842 = vmatpush2.bf16.msra.mxu0 0
      %1843 = vmatprep.subr.bf16.mxu0 0
      %1844 = vmatpush2.bf16.msra.mxu0 0
      %1845 = vmatprep.subr.bf16.mxu0 0
      %1846 = vmatpush2.bf16.msra.mxu0 0
      %1847 = vmatprep.subr.bf16.mxu0 0
      %1848 = vmatpush2.bf16.msra.mxu0 0
      %1849 = vmatprep.subr.bf16.mxu0 0
      %1850 = vmatpush2.bf16.msra.mxu0 0
      %1851 = vmatprep.subr.bf16.mxu0 0
      %1852 = vmatpush2.bf16.msra.mxu0 0
      %1853 = vmatprep.subr.bf16.mxu0 0
      %1854 = vmatpush2.bf16.msra.mxu0 0
      %1855 = vmatprep.mubr.bf16.mxu0 0
      %1856 = vmatmul.mubr.bf16.gmra.mxu0 %v1821
      %v1857 = vpop.f32.mrf.mxu0
      %v1858 = vadd.f32 %v1806, %v1857
      %v1859 = vpop.f32.mrf.mxu0
      %v1860 = vpop.f32.mrf.mxu0
      %v1861 = vpop.f32.mrf.mxu0
      %1862 = vdwg.mxu0
      %v1863 = vpack.c.bf16 %v1858, %v1858
      %1865 = vrot.lane.b32.xlu0 %v1863, 96
      %v1866 = vpop.permute.xlu0 %1865
      %vm1867 = vcmask 64512
      %v1869 = vsel %vm1867, %v1863, 0
      %v1872 = vsel %vm1867, %v1866, 0
      %1874 = vmatprep.subr.bf16.mxu0 0
      %1875 = vmatpush1.bf16.xpose.msra.mxu0 0
      %1876 = vmatprep.subr.bf16.mxu0 0
      %1877 = vmatpush1.bf16.xpose.msra.mxu0 0
      %1878 = vmatprep.subr.bf16.mxu0 0
      %1879 = vmatpush1.bf16.xpose.msra.mxu0 0
      %1880 = vmatprep.subr.bf16.mxu0 0
      %1881 = vmatpush1.bf16.xpose.msra.mxu0 0
      %1882 = vmatprep.subr.bf16.mxu0 0
      %1883 = vmatpush1.bf16.xpose.msra.mxu0 0
      %1884 = vmatprep.subr.bf16.mxu0 0
      %1885 = vmatpush1.bf16.xpose.msra.mxu0 0
      %1886 = vmatprep.subr.bf16.mxu0 0
      %1887 = vmatpush1.bf16.xpose.msra.mxu0 0
      %1888 = vmatprep.subr.bf16.mxu0 0
      %1889 = vmatpush1.bf16.xpose.msra.mxu0 %v1872
      %1890 = vmatprep.subr.bf16.mxu0 0
      %1891 = vmatpush2.bf16.xpose.msra.mxu0 0
      %1892 = vmatprep.subr.bf16.mxu0 0
      %1893 = vmatpush2.bf16.xpose.msra.mxu0 0
      %1894 = vmatprep.subr.bf16.mxu0 0
      %1895 = vmatpush2.bf16.xpose.msra.mxu0 0
      %1896 = vmatprep.subr.bf16.mxu0 0
      %1897 = vmatpush2.bf16.xpose.msra.mxu0 0
      %1898 = vmatprep.subr.bf16.mxu0 0
      %1899 = vmatpush2.bf16.xpose.msra.mxu0 0
      %1900 = vmatprep.subr.bf16.mxu0 0
      %1901 = vmatpush2.bf16.xpose.msra.mxu0 0
      %1902 = vmatprep.subr.bf16.mxu0 0
      %1903 = vmatpush2.bf16.xpose.msra.mxu0 0
      %1904 = vmatprep.subr.bf16.mxu0 0
      %1905 = vmatpush2.bf16.xpose.msra.mxu0 0
      %1906 = vmatprep.mubr.bf16.mxu0 0
      %1907 = vmatmul.mubr.bf16.gmra.mxu0 %v1869
      %v1908 = vpop.f32.mrf.mxu0
      %v1909 = vadd.f32 0.0, %v1908
      %v1910 = vpop.f32.mrf.mxu0
      %v1911 = vpop.f32.mrf.mxu0
      %v1912 = vpop.f32.mrf.mxu0
      %1913 = vdwg.mxu0
      %v1914 = vmul.f32 %v1909, 0.35355338
      %v1916 = vlaneseq
      %v1917 = vshrl.u32 %v1916, 7
      %v1918 = vsub.s32 0, %v1917
      %v1919 = vrot.slane %v1071, %v1918
      %v1921 = vadd.f32 %v1914, %v1919
      %v1922 = vsel %vm1867, %v1921, -inf
      %1923 = vmax.xlane.f32.xlu0 %v1922
      %v1924 = vpop.xlane.xlu0 %1923
      %v1925 = vsub.f32 %v1921, %v1924
      %v1926 = vmul.f32 %v1925, 1.442695
      %v1927 = vpow.pop %v1926
      %v1928 = vsel %vm1867, %v1927, 0.0
      %1929 = vadd.xlane.f32.xlu0 %v1928
      %v1930 = vpop.xlane.xlu0 %1929
      %v1931 = vrcp.pop %v1930
      %v1932 = vmul.f32 %v1927, %v1931
      %v1933 = vpack.c.bf16 %v1932, %v1932
      %1934 = vrot.lane.b32.xlu0 %v1863, 64
      %v1935 = vpop.permute.xlu0 %1934
      %v1937 = vsel %vm1867, %v1933, 0
      %vm1939 = vcmask 1043456
      %v1941 = vsel %vm1939, %v1935, 0
      %1943 = vmatprep.subr.bf16.mxu0 0
      %1944 = vmatpush1.bf16.msra.mxu0 0
      %1945 = vmatprep.subr.bf16.mxu0 0
      %1946 = vmatpush1.bf16.msra.mxu0 0
      %1947 = vmatprep.subr.bf16.mxu0 0
      %1948 = vmatpush1.bf16.msra.mxu0 0
      %1949 = vmatprep.subr.bf16.mxu0 0
      %1950 = vmatpush1.bf16.msra.mxu0 0
      %1951 = vmatprep.subr.bf16.mxu0 0
      %1952 = vmatpush1.bf16.msra.mxu0 0
      %1953 = vmatprep.subr.bf16.mxu0 0
      %1954 = vmatpush1.bf16.msra.mxu0 0
      %1955 = vmatprep.subr.bf16.mxu0 0
      %1956 = vmatpush1.bf16.msra.mxu0 0
      %1957 = vmatprep.subr.bf16.mxu0 0
      %1958 = vmatpush1.bf16.msra.mxu0 %v1941
      %1959 = vmatprep.subr.bf16.mxu0 0
      %1960 = vmatpush2.bf16.msra.mxu0 0
      %1961 = vmatprep.subr.bf16.mxu0 0
      %1962 = vmatpush2.bf16.msra.mxu0 0
      %1963 = vmatprep.subr.bf16.mxu0 0
      %1964 = vmatpush2.bf16.msra.mxu0 0
      %1965 = vmatprep.subr.bf16.mxu0 0
      %1966 = vmatpush2.bf16.msra.mxu0 0
      %1967 = vmatprep.subr.bf16.mxu0 0
      %1968 = vmatpush2.bf16.msra.mxu0 0
      %1969 = vmatprep.subr.bf16.mxu0 0
      %1970 = vmatpush2.bf16.msra.mxu0 0
      %1971 = vmatprep.subr.bf16.mxu0 0
      %1972 = vmatpush2.bf16.msra.mxu0 0
      %1973 = vmatprep.subr.bf16.mxu0 0
      %1974 = vmatpush2.bf16.msra.mxu0 0
      %1975 = vmatprep.mubr.bf16.mxu0 0
      %1976 = vmatmul.mubr.bf16.gmra.mxu0 %v1937
      %v1977 = vpop.f32.mrf.mxu0
      %v1978 = vadd.f32 0.0, %v1977
      %v1979 = vpop.f32.mrf.mxu0
      %v1980 = vpop.f32.mrf.mxu0
      %v1981 = vpop.f32.mrf.mxu0
      %1982 = vdwg.mxu0
      %1983 = vrot.lane.b32.xlu0 %v1863, 120
      %v1984 = vpop.permute.xlu0 %1983
      %1985 = vrot.lane.b32.xlu0 %v1863, 88
      %v1986 = vpop.permute.xlu0 %1985
      %v1988 = vsel %vm1867, %v1984, 0
      %v1991 = vsel %vm1867, %v1986, 0
      %1993 = vmatprep.subr.bf16.mxu0 0
      %1994 = vmatpush1.bf16.xpose.msra.mxu0 0
      %1995 = vmatprep.subr.bf16.mxu0 0
      %1996 = vmatpush1.bf16.xpose.msra.mxu0 0
      %1997 = vmatprep.subr.bf16.mxu0 0
      %1998 = vmatpush1.bf16.xpose.msra.mxu0 0
      %1999 = vmatprep.subr.bf16.mxu0 0
      %2000 = vmatpush1.bf16.xpose.msra.mxu0 0
      %2001 = vmatprep.subr.bf16.mxu0 0
      %2002 = vmatpush1.bf16.xpose.msra.mxu0 0
      %2003 = vmatprep.subr.bf16.mxu0 0
      %2004 = vmatpush1.bf16.xpose.msra.mxu0 0
      %2005 = vmatprep.subr.bf16.mxu0 0
      %2006 = vmatpush1.bf16.xpose.msra.mxu0 0
      %2007 = vmatprep.subr.bf16.mxu0 0
      %2008 = vmatpush1.bf16.xpose.msra.mxu0 %v1991
      %2009 = vmatprep.subr.bf16.mxu0 0
      %2010 = vmatpush2.bf16.xpose.msra.mxu0 0
      %2011 = vmatprep.subr.bf16.mxu0 0
      %2012 = vmatpush2.bf16.xpose.msra.mxu0 0
      %2013 = vmatprep.subr.bf16.mxu0 0
      %2014 = vmatpush2.bf16.xpose.msra.mxu0 0
      %2015 = vmatprep.subr.bf16.mxu0 0
      %2016 = vmatpush2.bf16.xpose.msra.mxu0 0
      %2017 = vmatprep.subr.bf16.mxu0 0
      %2018 = vmatpush2.bf16.xpose.msra.mxu0 0
      %2019 = vmatprep.subr.bf16.mxu0 0
      %2020 = vmatpush2.bf16.xpose.msra.mxu0 0
      %2021 = vmatprep.subr.bf16.mxu0 0
      %2022 = vmatpush2.bf16.xpose.msra.mxu0 0
      %2023 = vmatprep.subr.bf16.mxu0 0
      %2024 = vmatpush2.bf16.xpose.msra.mxu0 0
      %2025 = vmatprep.mubr.bf16.mxu0 0
      %2026 = vmatmul.mubr.bf16.gmra.mxu0 %v1988
      %v2027 = vpop.f32.mrf.mxu0
      %v2028 = vadd.f32 0.0, %v2027
      %v2029 = vpop.f32.mrf.mxu0
      %v2030 = vpop.f32.mrf.mxu0
      %v2031 = vpop.f32.mrf.mxu0
      %2032 = vdwg.mxu0
      %v2033 = vmul.f32 %v2028, 0.35355338
      %v2034 = vadd.f32 %v2033, %v1919
      %v2035 = vsel %vm1867, %v2034, -inf
      %2036 = vmax.xlane.f32.xlu0 %v2035
      %v2037 = vpop.xlane.xlu0 %2036
      %v2038 = vsub.f32 %v2034, %v2037
      %v2039 = vmul.f32 %v2038, 1.442695
      %v2040 = vpow.pop %v2039
      %v2041 = vsel %vm1867, %v2040, 0.0
      %2042 = vadd.xlane.f32.xlu0 %v2041
      %v2043 = vpop.xlane.xlu0 %2042
      %v2044 = vrcp.pop %v2043
      %v2045 = vmul.f32 %v2040, %v2044
      %v2046 = vpack.c.bf16 %v2045, %v2045
      %2047 = vrot.lane.b32.xlu0 %v1863, 56
      %v2048 = vpop.permute.xlu0 %2047
      %v2050 = vsel %vm1867, %v2046, 0
      %v2053 = vsel %vm1939, %v2048, 0
      %2055 = vmatprep.subr.bf16.mxu0 0
      %2056 = vmatpush1.bf16.msra.mxu0 0
      %2057 = vmatprep.subr.bf16.mxu0 0
      %2058 = vmatpush1.bf16.msra.mxu0 0
      %2059 = vmatprep.subr.bf16.mxu0 0
      %2060 = vmatpush1.bf16.msra.mxu0 0
      %2061 = vmatprep.subr.bf16.mxu0 0
      %2062 = vmatpush1.bf16.msra.mxu0 0
      %2063 = vmatprep.subr.bf16.mxu0 0
      %2064 = vmatpush1.bf16.msra.mxu0 0
      %2065 = vmatprep.subr.bf16.mxu0 0
      %2066 = vmatpush1.bf16.msra.mxu0 0
      %2067 = vmatprep.subr.bf16.mxu0 0
      %2068 = vmatpush1.bf16.msra.mxu0 0
      %2069 = vmatprep.subr.bf16.mxu0 0
      %2070 = vmatpush1.bf16.msra.mxu0 %v2053
      %2071 = vmatprep.subr.bf16.mxu0 0
      %2072 = vmatpush2.bf16.msra.mxu0 0
      %2073 = vmatprep.subr.bf16.mxu0 0
      %2074 = vmatpush2.bf16.msra.mxu0 0
      %2075 = vmatprep.subr.bf16.mxu0 0
      %2076 = vmatpush2.bf16.msra.mxu0 0
      %2077 = vmatprep.subr.bf16.mxu0 0
      %2078 = vmatpush2.bf16.msra.mxu0 0
      %2079 = vmatprep.subr.bf16.mxu0 0
      %2080 = vmatpush2.bf16.msra.mxu0 0
      %2081 = vmatprep.subr.bf16.mxu0 0
      %2082 = vmatpush2.bf16.msra.mxu0 0
      %2083 = vmatprep.subr.bf16.mxu0 0
      %2084 = vmatpush2.bf16.msra.mxu0 0
      %2085 = vmatprep.subr.bf16.mxu0 0
      %2086 = vmatpush2.bf16.msra.mxu0 0
      %2087 = vmatprep.mubr.bf16.mxu0 0
      %2088 = vmatmul.mubr.bf16.gmra.mxu0 %v2050
      %v2089 = vpop.f32.mrf.mxu0
      %v2090 = vadd.f32 0.0, %v2089
      %v2091 = vpop.f32.mrf.mxu0
      %v2092 = vpop.f32.mrf.mxu0
      %v2093 = vpop.f32.mrf.mxu0
      %2094 = vdwg.mxu0
      %2095 = vrot.lane.b32.xlu0 %v1863, 112
      %v2096 = vpop.permute.xlu0 %2095
      %2097 = vrot.lane.b32.xlu0 %v1863, 80
      %v2098 = vpop.permute.xlu0 %2097
      %v2100 = vsel %vm1867, %v2096, 0
      %v2103 = vsel %vm1867, %v2098, 0
      %2105 = vmatprep.subr.bf16.mxu0 0
      %2106 = vmatpush1.bf16.xpose.msra.mxu0 0
      %2107 = vmatprep.subr.bf16.mxu0 0
      %2108 = vmatpush1.bf16.xpose.msra.mxu0 0
      %2109 = vmatprep.subr.bf16.mxu0 0
      %2110 = vmatpush1.bf16.xpose.msra.mxu0 0
      %2111 = vmatprep.subr.bf16.mxu0 0
      %2112 = vmatpush1.bf16.xpose.msra.mxu0 0
      %2113 = vmatprep.subr.bf16.mxu0 0
      %2114 = vmatpush1.bf16.xpose.msra.mxu0 0
      %2115 = vmatprep.subr.bf16.mxu0 0
      %2116 = vmatpush1.bf16.xpose.msra.mxu0 0
      %2117 = vmatprep.subr.bf16.mxu0 0
      %2118 = vmatpush1.bf16.xpose.msra.mxu0 0
      %2119 = vmatprep.subr.bf16.mxu0 0
      %2120 = vmatpush1.bf16.xpose.msra.mxu0 %v2103
      %2121 = vmatprep.subr.bf16.mxu0 0
      %2122 = vmatpush2.bf16.xpose.msra.mxu0 0
      %2123 = vmatprep.subr.bf16.mxu0 0
      %2124 = vmatpush2.bf16.xpose.msra.mxu0 0
      %2125 = vmatprep.subr.bf16.mxu0 0
      %2126 = vmatpush2.bf16.xpose.msra.mxu0 0
      %2127 = vmatprep.subr.bf16.mxu0 0
      %2128 = vmatpush2.bf16.xpose.msra.mxu0 0
      %2129 = vmatprep.subr.bf16.mxu0 0
      %2130 = vmatpush2.bf16.xpose.msra.mxu0 0
      %2131 = vmatprep.subr.bf16.mxu0 0
      %2132 = vmatpush2.bf16.xpose.msra.mxu0 0
      %2133 = vmatprep.subr.bf16.mxu0 0
      %2134 = vmatpush2.bf16.xpose.msra.mxu0 0
      %2135 = vmatprep.subr.bf16.mxu0 0
      %2136 = vmatpush2.bf16.xpose.msra.mxu0 0
      %2137 = vmatprep.mubr.bf16.mxu0 0
      %2138 = vmatmul.mubr.bf16.gmra.mxu0 %v2100
      %v2139 = vpop.f32.mrf.mxu0
      %v2140 = vadd.f32 0.0, %v2139
      %v2141 = vpop.f32.mrf.mxu0
      %v2142 = vpop.f32.mrf.mxu0
      %v2143 = vpop.f32.mrf.mxu0
      %2144 = vdwg.mxu0
      %v2145 = vmul.f32 %v2140, 0.35355338
      %v2146 = vadd.f32 %v2145, %v1919
      %v2147 = vsel %vm1867, %v2146, -inf
      %2148 = vmax.xlane.f32.xlu0 %v2147
      %v2149 = vpop.xlane.xlu0 %2148
      %v2150 = vsub.f32 %v2146, %v2149
      %v2151 = vmul.f32 %v2150, 1.442695
      %v2152 = vpow.pop %v2151
      %v2153 = vsel %vm1867, %v2152, 0.0
      %2154 = vadd.xlane.f32.xlu0 %v2153
      %v2155 = vpop.xlane.xlu0 %2154
      %v2156 = vrcp.pop %v2155
      %v2157 = vmul.f32 %v2152, %v2156
      %v2158 = vpack.c.bf16 %v2157, %v2157
      %2159 = vrot.lane.b32.xlu0 %v1863, 48
      %v2160 = vpop.permute.xlu0 %2159
      %v2162 = vsel %vm1867, %v2158, 0
      %v2165 = vsel %vm1939, %v2160, 0
      %2167 = vmatprep.subr.bf16.mxu0 0
      %2168 = vmatpush1.bf16.msra.mxu0 0
      %2169 = vmatprep.subr.bf16.mxu0 0
      %2170 = vmatpush1.bf16.msra.mxu0 0
      %2171 = vmatprep.subr.bf16.mxu0 0
      %2172 = vmatpush1.bf16.msra.mxu0 0
      %2173 = vmatprep.subr.bf16.mxu0 0
      %2174 = vmatpush1.bf16.msra.mxu0 0
      %2175 = vmatprep.subr.bf16.mxu0 0
      %2176 = vmatpush1.bf16.msra.mxu0 0
      %2177 = vmatprep.subr.bf16.mxu0 0
      %2178 = vmatpush1.bf16.msra.mxu0 0
      %2179 = vmatprep.subr.bf16.mxu0 0
      %2180 = vmatpush1.bf16.msra.mxu0 0
      %2181 = vmatprep.subr.bf16.mxu0 0
      %2182 = vmatpush1.bf16.msra.mxu0 %v2165
      %2183 = vmatprep.subr.bf16.mxu0 0
      %2184 = vmatpush2.bf16.msra.mxu0 0
      %2185 = vmatprep.subr.bf16.mxu0 0
      %2186 = vmatpush2.bf16.msra.mxu0 0
      %2187 = vmatprep.subr.bf16.mxu0 0
      %2188 = vmatpush2.bf16.msra.mxu0 0
      %2189 = vmatprep.subr.bf16.mxu0 0
      %2190 = vmatpush2.bf16.msra.mxu0 0
      %2191 = vmatprep.subr.bf16.mxu0 0
      %2192 = vmatpush2.bf16.msra.mxu0 0
      %2193 = vmatprep.subr.bf16.mxu0 0
      %2194 = vmatpush2.bf16.msra.mxu0 0
      %2195 = vmatprep.subr.bf16.mxu0 0
      %2196 = vmatpush2.bf16.msra.mxu0 0
      %2197 = vmatprep.subr.bf16.mxu0 0
      %2198 = vmatpush2.bf16.msra.mxu0 0
      %2199 = vmatprep.mubr.bf16.mxu0 0
      %2200 = vmatmul.mubr.bf16.gmra.mxu0 %v2162
      %v2201 = vpop.f32.mrf.mxu0
      %v2202 = vadd.f32 0.0, %v2201
      %v2203 = vpop.f32.mrf.mxu0
      %v2204 = vpop.f32.mrf.mxu0
      %v2205 = vpop.f32.mrf.mxu0
      %2206 = vdwg.mxu0
      %2207 = vrot.lane.b32.xlu0 %v1863, 104
      %v2208 = vpop.permute.xlu0 %2207
      %2209 = vrot.lane.b32.xlu0 %v1863, 72
      %v2210 = vpop.permute.xlu0 %2209
      %v2212 = vsel %vm1867, %v2208, 0
      %v2215 = vsel %vm1867, %v2210, 0
      %2217 = vmatprep.subr.bf16.mxu0 0
      %2218 = vmatpush1.bf16.xpose.msra.mxu0 0
      %2219 = vmatprep.subr.bf16.mxu0 0
      %2220 = vmatpush1.bf16.xpose.msra.mxu0 0
      %2221 = vmatprep.subr.bf16.mxu0 0
      %2222 = vmatpush1.bf16.xpose.msra.mxu0 0
      %2223 = vmatprep.subr.bf16.mxu0 0
      %2224 = vmatpush1.bf16.xpose.msra.mxu0 0
      %2225 = vmatprep.subr.bf16.mxu0 0
      %2226 = vmatpush1.bf16.xpose.msra.mxu0 0
      %2227 = vmatprep.subr.bf16.mxu0 0
      %2228 = vmatpush1.bf16.xpose.msra.mxu0 0
      %2229 = vmatprep.subr.bf16.mxu0 0
      %2230 = vmatpush1.bf16.xpose.msra.mxu0 0
      %2231 = vmatprep.subr.bf16.mxu0 0
      %2232 = vmatpush1.bf16.xpose.msra.mxu0 %v2215
      %2233 = vmatprep.subr.bf16.mxu0 0
      %2234 = vmatpush2.bf16.xpose.msra.mxu0 0
      %2235 = vmatprep.subr.bf16.mxu0 0
      %2236 = vmatpush2.bf16.xpose.msra.mxu0 0
      %2237 = vmatprep.subr.bf16.mxu0 0
      %2238 = vmatpush2.bf16.xpose.msra.mxu0 0
      %2239 = vmatprep.subr.bf16.mxu0 0
      %2240 = vmatpush2.bf16.xpose.msra.mxu0 0
      %2241 = vmatprep.subr.bf16.mxu0 0
      %2242 = vmatpush2.bf16.xpose.msra.mxu0 0
      %2243 = vmatprep.subr.bf16.mxu0 0
      %2244 = vmatpush2.bf16.xpose.msra.mxu0 0
      %2245 = vmatprep.subr.bf16.mxu0 0
      %2246 = vmatpush2.bf16.xpose.msra.mxu0 0
      %2247 = vmatprep.subr.bf16.mxu0 0
      %2248 = vmatpush2.bf16.xpose.msra.mxu0 0
      %2249 = vmatprep.mubr.bf16.mxu0 0
      %2250 = vmatmul.mubr.bf16.gmra.mxu0 %v2212
      %v2251 = vpop.f32.mrf.mxu0
      %v2252 = vadd.f32 0.0, %v2251
      %v2253 = vpop.f32.mrf.mxu0
      %v2254 = vpop.f32.mrf.mxu0
      %v2255 = vpop.f32.mrf.mxu0
      %2256 = vdwg.mxu0
      %v2257 = vmul.f32 %v2252, 0.35355338
      %v2258 = vadd.f32 %v2257, %v1919
      %v2259 = vsel %vm1867, %v2258, -inf
      %2260 = vmax.xlane.f32.xlu0 %v2259
      %v2261 = vpop.xlane.xlu0 %2260
      %v2262 = vsub.f32 %v2258, %v2261
      %v2263 = vmul.f32 %v2262, 1.442695
      %v2264 = vpow.pop %v2263
      %v2265 = vsel %vm1867, %v2264, 0.0
      %2266 = vadd.xlane.f32.xlu0 %v2265
      %v2267 = vpop.xlane.xlu0 %2266
      %v2268 = vrcp.pop %v2267
      %v2269 = vmul.f32 %v2264, %v2268
      %v2270 = vpack.c.bf16 %v2269, %v2269
      %2271 = vrot.lane.b32.xlu0 %v1863, 40
      %v2272 = vpop.permute.xlu0 %2271
      %v2274 = vsel %vm1867, %v2270, 0
      %v2277 = vsel %vm1939, %v2272, 0
      %2279 = vmatprep.subr.bf16.mxu0 0
      %2280 = vmatpush1.bf16.msra.mxu0 0
      %2281 = vmatprep.subr.bf16.mxu0 0
      %2282 = vmatpush1.bf16.msra.mxu0 0
      %2283 = vmatprep.subr.bf16.mxu0 0
      %2284 = vmatpush1.bf16.msra.mxu0 0
      %2285 = vmatprep.subr.bf16.mxu0 0
      %2286 = vmatpush1.bf16.msra.mxu0 0
      %2287 = vmatprep.subr.bf16.mxu0 0
      %2288 = vmatpush1.bf16.msra.mxu0 0
      %2289 = vmatprep.subr.bf16.mxu0 0
      %2290 = vmatpush1.bf16.msra.mxu0 0
      %2291 = vmatprep.subr.bf16.mxu0 0
      %2292 = vmatpush1.bf16.msra.mxu0 0
      %2293 = vmatprep.subr.bf16.mxu0 0
      %2294 = vmatpush1.bf16.msra.mxu0 %v2277
      %2295 = vmatprep.subr.bf16.mxu0 0
      %2296 = vmatpush2.bf16.msra.mxu0 0
      %2297 = vmatprep.subr.bf16.mxu0 0
      %2298 = vmatpush2.bf16.msra.mxu0 0
      %2299 = vmatprep.subr.bf16.mxu0 0
      %2300 = vmatpush2.bf16.msra.mxu0 0
      %2301 = vmatprep.subr.bf16.mxu0 0
      %2302 = vmatpush2.bf16.msra.mxu0 0
      %2303 = vmatprep.subr.bf16.mxu0 0
      %2304 = vmatpush2.bf16.msra.mxu0 0
      %2305 = vmatprep.subr.bf16.mxu0 0
      %2306 = vmatpush2.bf16.msra.mxu0 0
      %2307 = vmatprep.subr.bf16.mxu0 0
      %2308 = vmatpush2.bf16.msra.mxu0 0
      %2309 = vmatprep.subr.bf16.mxu0 0
      %2310 = vmatpush2.bf16.msra.mxu0 0
      %2311 = vmatprep.mubr.bf16.mxu0 0
      %2312 = vmatmul.mubr.bf16.gmra.mxu0 %v2274
      %v2313 = vpop.f32.mrf.mxu0
      %v2314 = vadd.f32 0.0, %v2313
      %v2315 = vpop.f32.mrf.mxu0
      %v2316 = vpop.f32.mrf.mxu0
      %v2317 = vpop.f32.mrf.mxu0
      %2318 = vdwg.mxu0
      %2320 = vrot.lane.b32.xlu0 %v2090, 8
      %v2321 = vpop.permute.xlu0 %2320
      %2324 = vrot.lane.b32.xlu0 %v2202, 16
      %v2325 = vpop.permute.xlu0 %2324
      %2328 = vrot.lane.b32.xlu0 %v2314, 24
      %v2329 = vpop.permute.xlu0 %2328
      %v2331 = vsel %vm1867, %v1978, %v2321
      %vm2332 = vcmask 130048
      %v2333 = vsel %vm2332, %v2331, %v2325
      %vm2334 = vcmask 195584
      %v2335 = vsel %vm2334, %v2333, %v2329
      %v2336 = vld [vmem:[%s45] sm:$0xf]
      %v2337 = vld [vmem:[%s45 + $0x4] sm:$0xf]
      %v2338 = vld [vmem:[%s45 + $0x8] sm:$0xf]
      %v2339 = vld [vmem:[%s45 + $0xc] sm:$0xf]
      %v2340 = vpack.c.bf16 %v2335, %v2335
      %v2341 = vld [vmem:[%s47] sm:$0x1]
      %v2343 = vlaneseq
      %v2344 = vshrl.u32 %v2343, 7
      %v2345 = vsub.s32 0, %v2344
      %v2346 = vrot.slane %v2341, %v2345
      %v2352 = vunpack.c.l.b16 %v2336
      %v2353 = vunpack.c.l.b16 %v2337
      %v2354 = vunpack.c.l.b16 %v2338
      %v2355 = vunpack.c.l.b16 %v2339
      %v2356 = vpack.c.b16 %v2353, %v2352
      %v2357 = vpack.c.b16 %v2355, %v2354
      %v2361 = vsel %vm1097, %v2340, 0
      %2363 = vmatprep.subr.bf16.mxu0 0
      %2364 = vmatpush1.bf16.msra.mxu0 0
      %2365 = vmatprep.subr.bf16.mxu0 0
      %2366 = vmatpush1.bf16.msra.mxu0 0
      %2367 = vmatprep.subr.bf16.mxu0 0
      %2368 = vmatpush1.bf16.msra.mxu0 0
      %2369 = vmatprep.subr.bf16.mxu0 0
      %2370 = vmatpush1.bf16.msra.mxu0 0
      %2371 = vmatprep.subr.bf16.mxu0 0
      %2372 = vmatpush1.bf16.msra.mxu0 0
      %2373 = vmatprep.subr.bf16.mxu0 0
      %2374 = vmatpush1.bf16.msra.mxu0 0
      %2375 = vmatprep.subr.bf16.mxu0 0
      %2376 = vmatpush1.bf16.msra.mxu0 %v2357
      %2377 = vmatprep.subr.bf16.mxu0 0
      %2378 = vmatpush1.bf16.msra.mxu0 %v2356
      %2379 = vmatprep.subr.bf16.mxu0 0
      %2380 = vmatpush2.bf16.msra.mxu0 0
      %2381 = vmatprep.subr.bf16.mxu0 0
      %2382 = vmatpush2.bf16.msra.mxu0 0
      %2383 = vmatprep.subr.bf16.mxu0 0
      %2384 = vmatpush2.bf16.msra.mxu0 0
      %2385 = vmatprep.subr.bf16.mxu0 0
      %2386 = vmatpush2.bf16.msra.mxu0 0
      %2387 = vmatprep.subr.bf16.mxu0 0
      %2388 = vmatpush2.bf16.msra.mxu0 0
      %2389 = vmatprep.subr.bf16.mxu0 0
      %2390 = vmatpush2.bf16.msra.mxu0 0
      %2391 = vmatprep.subr.bf16.mxu0 0
      %2392 = vmatpush2.bf16.msra.mxu0 0
      %2393 = vmatprep.subr.bf16.mxu0 0
      %2394 = vmatpush2.bf16.msra.mxu0 0
      %2395 = vmatprep.mubr.bf16.mxu0 0
      %2396 = vmatmul.mubr.bf16.gmra.mxu0 %v2361
      %v2397 = vpop.f32.mrf.mxu0
      %v2398 = vadd.f32 %v2346, %v2397
      %v2399 = vpop.f32.mrf.mxu0
      %v2400 = vpop.f32.mrf.mxu0
      %v2401 = vpop.f32.mrf.mxu0
      %2402 = vdwg.mxu0
      %v2403 = vadd.f32 %v2398, %v1795
      %v2404 = vld [vmem:[%s49] sm:$0x1]
      %v2405 = vld [vmem:[%s51] sm:$0x1]
      %v2406 = vsel %vm1097, %v2403, 0.0
      %2407 = vadd.xlane.f32.xlu0 %v2406
      %v2408 = vpop.xlane.xlu0 %2407
      %v2409 = vmul.f32 %v2408, %v1771
      %v2410 = vsub.f32 %v2403, %v2409
      %v2411 = vmul.f32 %v2410, %v2410
      %v2412 = vsel %vm1097, %v2411, 0.0
      %2413 = vadd.xlane.f32.xlu0 %v2412
      %v2414 = vpop.xlane.xlu0 %2413
      %v2415 = vmul.f32 %v2414, %v1771
      %v2416 = vadd.f32 %v2415, 1e-05
      %v2417 = vrsqrt.pop %v2416
      %v2418 = vmul.f32 %v2410, %v2417
      %v2420 = vlaneseq
      %v2421 = vshrl.u32 %v2420, 7
      %v2422 = vsub.s32 0, %v2421
      %v2423 = vrot.slane %v2404, %v2422
      %v2425 = vmul.f32 %v2418, %v2423
      %v2427 = vlaneseq
      %v2428 = vshrl.u32 %v2427, 7
      %v2429 = vsub.s32 0, %v2428
      %v2430 = vrot.slane %v2405, %v2429
      %v2432 = vadd.f32 %v2425, %v2430
      %2434 = vset.pattern.permute.xlu0 0
      %2435 = vperm.xlu0 %2434, %v1072
      %v2436 = vpop.permute.xlu0 %2435
      %v2438 = vmul.f32 %v2432, %v2436
      %v2439 = vld [vmem:[%s55] sm:$0x1]
      %v2441 = vrot.slane %v2438, 7
      %v2443 = vsel %vm1231, 0.0, %v2441
      %v2444 = vld [vmem:[%s53] sm:$0xf]
      %v2445 = vld [vmem:[%s53 + $0x4] sm:$0xf]
      %v2446 = vld [vmem:[%s53 + $0x8] sm:$0xf]
      %v2447 = vld [vmem:[%s53 + $0xc] sm:$0xf]
      %v2448 = vpack.c.bf16 %v2443, %v2443
      %v2453 = vunpack.c.l.b16 %v2444
      %v2454 = vunpack.c.l.b16 %v2445
      %v2455 = vunpack.c.l.b16 %v2446
      %v2456 = vunpack.c.l.b16 %v2447
      %v2457 = vpack.c.b16 %v2454, %v2453
      %v2458 = vpack.c.b16 %v2456, %v2455
      %v2462 = vsel %vm1097, %v2448, 0
      %2464 = vmatprep.subr.bf16.mxu0 0
      %2465 = vmatpush1.bf16.msra.mxu0 0
      %2466 = vmatprep.subr.bf16.mxu0 0
      %2467 = vmatpush1.bf16.msra.mxu0 0
      %2468 = vmatprep.subr.bf16.mxu0 0
      %2469 = vmatpush1.bf16.msra.mxu0 0
      %2470 = vmatprep.subr.bf16.mxu0 0
      %2471 = vmatpush1.bf16.msra.mxu0 0
      %2472 = vmatprep.subr.bf16.mxu0 0
      %2473 = vmatpush1.bf16.msra.mxu0 0
      %2474 = vmatprep.subr.bf16.mxu0 0
      %2475 = vmatpush1.bf16.msra.mxu0 0
      %2476 = vmatprep.subr.bf16.mxu0 0
      %2477 = vmatpush1.bf16.msra.mxu0 %v2458
      %2478 = vmatprep.subr.bf16.mxu0 0
      %2479 = vmatpush1.bf16.msra.mxu0 %v2457
      %2480 = vmatprep.subr.bf16.mxu0 0
      %2481 = vmatpush2.bf16.msra.mxu0 0
      %2482 = vmatprep.subr.bf16.mxu0 0
      %2483 = vmatpush2.bf16.msra.mxu0 0
      %2484 = vmatprep.subr.bf16.mxu0 0
      %2485 = vmatpush2.bf16.msra.mxu0 0
      %2486 = vmatprep.subr.bf16.mxu0 0
      %2487 = vmatpush2.bf16.msra.mxu0 0
      %2488 = vmatprep.subr.bf16.mxu0 0
      %2489 = vmatpush2.bf16.msra.mxu0 0
      %2490 = vmatprep.subr.bf16.mxu0 0
      %2491 = vmatpush2.bf16.msra.mxu0 0
      %2492 = vmatprep.subr.bf16.mxu0 0
      %2493 = vmatpush2.bf16.msra.mxu0 0
      %2494 = vmatprep.subr.bf16.mxu0 0
      %2495 = vmatpush2.bf16.msra.mxu0 0
      %2496 = vmatprep.mubr.bf16.mxu0 0
      %2497 = vmatmul.mubr.bf16.gmra.mxu0 %v2462
      %v2498 = vpop.f32.mrf.mxu0
      %v2499 = vadd.f32 0.0, %v2498
      %v2500 = vpop.f32.mrf.mxu0
      %v2501 = vpop.f32.mrf.mxu0
      %v2502 = vpop.f32.mrf.mxu0
      %2503 = vdwg.mxu0
      %v2505 = vlaneseq
      %v2506 = vshrl.u32 %v2505, 7
      %v2507 = vsub.s32 0, %v2506
      %v2508 = vrot.slane %v2439, %v2507
      %v2510 = vadd.f32 %v2508, %v2499
      %s2511 = scalar_lea.vmem %s53, 16
      %v2512 = vld [vmem:[%s2511] sm:$0xf]
      %v2513 = vld [vmem:[%s2511 + $0x4] sm:$0xf]
      %v2514 = vld [vmem:[%s2511 + $0x8] sm:$0xf]
      %v2515 = vld [vmem:[%s2511 + $0xc] sm:$0xf]
      %v2516 = vpack.c.bf16 %v2438, %v2438
      %v2521 = vunpack.c.l.b16 %v2512
      %v2522 = vunpack.c.l.b16 %v2513
      %v2523 = vunpack.c.l.b16 %v2514
      %v2524 = vunpack.c.l.b16 %v2515
      %v2525 = vpack.c.b16 %v2522, %v2521
      %v2526 = vpack.c.b16 %v2524, %v2523
      %v2530 = vsel %vm1097, %v2516, 0
      %2532 = vmatprep.subr.bf16.mxu0 0
      %2533 = vmatpush1.bf16.msra.mxu0 0
      %2534 = vmatprep.subr.bf16.mxu0 0
      %2535 = vmatpush1.bf16.msra.mxu0 0
      %2536 = vmatprep.subr.bf16.mxu0 0
      %2537 = vmatpush1.bf16.msra.mxu0 0
      %2538 = vmatprep.subr.bf16.mxu0 0
      %2539 = vmatpush1.bf16.msra.mxu0 0
      %2540 = vmatprep.subr.bf16.mxu0 0
      %2541 = vmatpush1.bf16.msra.mxu0 0
      %2542 = vmatprep.subr.bf16.mxu0 0
      %2543 = vmatpush1.bf16.msra.mxu0 0
      %2544 = vmatprep.subr.bf16.mxu0 0
      %2545 = vmatpush1.bf16.msra.mxu0 %v2526
      %2546 = vmatprep.subr.bf16.mxu0 0
      %2547 = vmatpush1.bf16.msra.mxu0 %v2525
      %2548 = vmatprep.subr.bf16.mxu0 0
      %2549 = vmatpush2.bf16.msra.mxu0 0
      %2550 = vmatprep.subr.bf16.mxu0 0
      %2551 = vmatpush2.bf16.msra.mxu0 0
      %2552 = vmatprep.subr.bf16.mxu0 0
      %2553 = vmatpush2.bf16.msra.mxu0 0
      %2554 = vmatprep.subr.bf16.mxu0 0
      %2555 = vmatpush2.bf16.msra.mxu0 0
      %2556 = vmatprep.subr.bf16.mxu0 0
      %2557 = vmatpush2.bf16.msra.mxu0 0
      %2558 = vmatprep.subr.bf16.mxu0 0
      %2559 = vmatpush2.bf16.msra.mxu0 0
      %2560 = vmatprep.subr.bf16.mxu0 0
      %2561 = vmatpush2.bf16.msra.mxu0 0
      %2562 = vmatprep.subr.bf16.mxu0 0
      %2563 = vmatpush2.bf16.msra.mxu0 0
      %2564 = vmatprep.mubr.bf16.mxu0 0
      %2565 = vmatmul.mubr.bf16.gmra.mxu0 %v2530
      %v2566 = vpop.f32.mrf.mxu0
      %v2567 = vadd.f32 0.0, %v2566
      %v2568 = vpop.f32.mrf.mxu0
      %v2569 = vpop.f32.mrf.mxu0
      %v2570 = vpop.f32.mrf.mxu0
      %2571 = vdwg.mxu0
      %v2572 = vadd.f32 %v2510, %v2567
      %v2573 = vrot.slane %v2438, 1
      %vm2575 = vcmask 1046528
      %v2576 = vsel %vm2575, %v2573, 0.0
      %s2577 = scalar_lea.vmem %s53, 32
      %v2578 = vld [vmem:[%s2577] sm:$0xf]
      %v2579 = vld [vmem:[%s2577 + $0x4] sm:$0xf]
      %v2580 = vld [vmem:[%s2577 + $0x8] sm:$0xf]
      %v2581 = vld [vmem:[%s2577 + $0xc] sm:$0xf]
      %v2582 = vpack.c.bf16 %v2576, %v2576
      %v2587 = vunpack.c.l.b16 %v2578
      %v2588 = vunpack.c.l.b16 %v2579
      %v2589 = vunpack.c.l.b16 %v2580
      %v2590 = vunpack.c.l.b16 %v2581
      %v2591 = vpack.c.b16 %v2588, %v2587
      %v2592 = vpack.c.b16 %v2590, %v2589
      %v2596 = vsel %vm1097, %v2582, 0
      %2598 = vmatprep.subr.bf16.mxu0 0
      %2599 = vmatpush1.bf16.msra.mxu0 0
      %2600 = vmatprep.subr.bf16.mxu0 0
      %2601 = vmatpush1.bf16.msra.mxu0 0
      %2602 = vmatprep.subr.bf16.mxu0 0
      %2603 = vmatpush1.bf16.msra.mxu0 0
      %2604 = vmatprep.subr.bf16.mxu0 0
      %2605 = vmatpush1.bf16.msra.mxu0 0
      %2606 = vmatprep.subr.bf16.mxu0 0
      %2607 = vmatpush1.bf16.msra.mxu0 0
      %2608 = vmatprep.subr.bf16.mxu0 0
      %2609 = vmatpush1.bf16.msra.mxu0 0
      %2610 = vmatprep.subr.bf16.mxu0 0
      %2611 = vmatpush1.bf16.msra.mxu0 %v2592
      %2612 = vmatprep.subr.bf16.mxu0 0
      %2613 = vmatpush1.bf16.msra.mxu0 %v2591
      %2614 = vmatprep.subr.bf16.mxu0 0
      %2615 = vmatpush2.bf16.msra.mxu0 0
      %2616 = vmatprep.subr.bf16.mxu0 0
      %2617 = vmatpush2.bf16.msra.mxu0 0
      %2618 = vmatprep.subr.bf16.mxu0 0
      %2619 = vmatpush2.bf16.msra.mxu0 0
      %2620 = vmatprep.subr.bf16.mxu0 0
      %2621 = vmatpush2.bf16.msra.mxu0 0
      %2622 = vmatprep.subr.bf16.mxu0 0
      %2623 = vmatpush2.bf16.msra.mxu0 0
      %2624 = vmatprep.subr.bf16.mxu0 0
      %2625 = vmatpush2.bf16.msra.mxu0 0
      %2626 = vmatprep.subr.bf16.mxu0 0
      %2627 = vmatpush2.bf16.msra.mxu0 0
      %2628 = vmatprep.subr.bf16.mxu0 0
      %2629 = vmatpush2.bf16.msra.mxu0 0
      %2630 = vmatprep.mubr.bf16.mxu0 0
      %2631 = vmatmul.mubr.bf16.gmra.mxu0 %v2596
      %v2632 = vpop.f32.mrf.mxu0
      %v2633 = vadd.f32 0.0, %v2632
      %v2634 = vpop.f32.mrf.mxu0
      %v2635 = vpop.f32.mrf.mxu0
      %v2636 = vpop.f32.mrf.mxu0
      %2637 = vdwg.mxu0
      %v2638 = vadd.f32 %v2572, %v2633
      %v2639 = vmax.f32 %v2638, 0.0
      %v2640 = vld [vmem:[%s59] sm:$0x1]
      %v2642 = vrot.slane %v2639, 7
      %v2644 = vsel %vm1231, 0.0, %v2642
      %v2645 = vld [vmem:[%s57] sm:$0xf]
      %v2646 = vld [vmem:[%s57 + $0x4] sm:$0xf]
      %v2647 = vpack.c.bf16 %v2644, %v2644
      %v2650 = vunpack.c.l.b16 %v2645
      %v2651 = vunpack.c.l.b16 %v2646
      %v2652 = vpack.c.b16 %v2651, %v2650
      %v2655 = vsel %vm2332, %v2647, 0
      %2657 = vmatprep.subr.bf16.mxu0 0
      %2658 = vmatpush1.bf16.msra.mxu0 0
      %2659 = vmatprep.subr.bf16.mxu0 0
      %2660 = vmatpush1.bf16.msra.mxu0 0
      %2661 = vmatprep.subr.bf16.mxu0 0
      %2662 = vmatpush1.bf16.msra.mxu0 0
      %2663 = vmatprep.subr.bf16.mxu0 0
      %2664 = vmatpush1.bf16.msra.mxu0 0
      %2665 = vmatprep.subr.bf16.mxu0 0
      %2666 = vmatpush1.bf16.msra.mxu0 0
      %2667 = vmatprep.subr.bf16.mxu0 0
      %2668 = vmatpush1.bf16.msra.mxu0 0
      %2669 = vmatprep.subr.bf16.mxu0 0
      %2670 = vmatpush1.bf16.msra.mxu0 0
      %2671 = vmatprep.subr.bf16.mxu0 0
      %2672 = vmatpush1.bf16.msra.mxu0 %v2652
      %2673 = vmatprep.subr.bf16.mxu0 0
      %2674 = vmatpush2.bf16.msra.mxu0 0
      %2675 = vmatprep.subr.bf16.mxu0 0
      %2676 = vmatpush2.bf16.msra.mxu0 0
      %2677 = vmatprep.subr.bf16.mxu0 0
      %2678 = vmatpush2.bf16.msra.mxu0 0
      %2679 = vmatprep.subr.bf16.mxu0 0
      %2680 = vmatpush2.bf16.msra.mxu0 0
      %2681 = vmatprep.subr.bf16.mxu0 0
      %2682 = vmatpush2.bf16.msra.mxu0 0
      %2683 = vmatprep.subr.bf16.mxu0 0
      %2684 = vmatpush2.bf16.msra.mxu0 0
      %2685 = vmatprep.subr.bf16.mxu0 0
      %2686 = vmatpush2.bf16.msra.mxu0 0
      %2687 = vmatprep.subr.bf16.mxu0 0
      %2688 = vmatpush2.bf16.msra.mxu0 0
      %2689 = vmatprep.mubr.bf16.mxu0 0
      %2690 = vmatmul.mubr.bf16.gmra.mxu0 %v2655
      %v2691 = vpop.f32.mrf.mxu0
      %v2692 = vadd.f32 0.0, %v2691
      %v2693 = vpop.f32.mrf.mxu0
      %v2694 = vpop.f32.mrf.mxu0
      %v2695 = vpop.f32.mrf.mxu0
      %2696 = vdwg.mxu0
      %v2698 = vlaneseq
      %v2699 = vshrl.u32 %v2698, 7
      %v2700 = vsub.s32 0, %v2699
      %v2701 = vrot.slane %v2640, %v2700
      %v2703 = vadd.f32 %v2701, %v2692
      %s2704 = scalar_lea.vmem %s57, 8
      %v2705 = vld [vmem:[%s2704] sm:$0xf]
      %v2706 = vld [vmem:[%s2704 + $0x4] sm:$0xf]
      %v2707 = vpack.c.bf16 %v2639, %v2639
      %v2710 = vunpack.c.l.b16 %v2705
      %v2711 = vunpack.c.l.b16 %v2706
      %v2712 = vpack.c.b16 %v2711, %v2710
      %v2715 = vsel %vm2332, %v2707, 0
      %2717 = vmatprep.subr.bf16.mxu0 0
      %2718 = vmatpush1.bf16.msra.mxu0 0
      %2719 = vmatprep.subr.bf16.mxu0 0
      %2720 = vmatpush1.bf16.msra.mxu0 0
      %2721 = vmatprep.subr.bf16.mxu0 0
      %2722 = vmatpush1.bf16.msra.mxu0 0
      %2723 = vmatprep.subr.bf16.mxu0 0
      %2724 = vmatpush1.bf16.msra.mxu0 0
      %2725 = vmatprep.subr.bf16.mxu0 0
      %2726 = vmatpush1.bf16.msra.mxu0 0
      %2727 = vmatprep.subr.bf16.mxu0 0
      %2728 = vmatpush1.bf16.msra.mxu0 0
      %2729 = vmatprep.subr.bf16.mxu0 0
      %2730 = vmatpush1.bf16.msra.mxu0 0
      %2731 = vmatprep.subr.bf16.mxu0 0
      %2732 = vmatpush1.bf16.msra.mxu0 %v2712
      %2733 = vmatprep.subr.bf16.mxu0 0
      %2734 = vmatpush2.bf16.msra.mxu0 0
      %2735 = vmatprep.subr.bf16.mxu0 0
      %2736 = vmatpush2.bf16.msra.mxu0 0
      %2737 = vmatprep.subr.bf16.mxu0 0
      %2738 = vmatpush2.bf16.msra.mxu0 0
      %2739 = vmatprep.subr.bf16.mxu0 0
      %2740 = vmatpush2.bf16.msra.mxu0 0
      %2741 = vmatprep.subr.bf16.mxu0 0
      %2742 = vmatpush2.bf16.msra.mxu0 0
      %2743 = vmatprep.subr.bf16.mxu0 0
      %2744 = vmatpush2.bf16.msra.mxu0 0
      %2745 = vmatprep.subr.bf16.mxu0 0
      %2746 = vmatpush2.bf16.msra.mxu0 0
      %2747 = vmatprep.subr.bf16.mxu0 0
      %2748 = vmatpush2.bf16.msra.mxu0 0
      %2749 = vmatprep.mubr.bf16.mxu0 0
      %2750 = vmatmul.mubr.bf16.gmra.mxu0 %v2715
      %v2751 = vpop.f32.mrf.mxu0
      %v2752 = vadd.f32 0.0, %v2751
      %v2753 = vpop.f32.mrf.mxu0
      %v2754 = vpop.f32.mrf.mxu0
      %v2755 = vpop.f32.mrf.mxu0
      %2756 = vdwg.mxu0
      %v2757 = vadd.f32 %v2703, %v2752
      %v2758 = vrot.slane %v2639, 1
      %v2760 = vsel %vm2575, %v2758, 0.0
      %s2761 = scalar_lea.vmem %s57, 16
      %v2762 = vld [vmem:[%s2761] sm:$0xf]
      %v2763 = vld [vmem:[%s2761 + $0x4] sm:$0xf]
      %v2764 = vpack.c.bf16 %v2760, %v2760
      %v2767 = vunpack.c.l.b16 %v2762
      %v2768 = vunpack.c.l.b16 %v2763
      %v2769 = vpack.c.b16 %v2768, %v2767
      %v2772 = vsel %vm2332, %v2764, 0
      %2774 = vmatprep.subr.bf16.mxu0 0
      %2775 = vmatpush1.bf16.msra.mxu0 0
      %2776 = vmatprep.subr.bf16.mxu0 0
      %2777 = vmatpush1.bf16.msra.mxu0 0
      %2778 = vmatprep.subr.bf16.mxu0 0
      %2779 = vmatpush1.bf16.msra.mxu0 0
      %2780 = vmatprep.subr.bf16.mxu0 0
      %2781 = vmatpush1.bf16.msra.mxu0 0
      %2782 = vmatprep.subr.bf16.mxu0 0
      %2783 = vmatpush1.bf16.msra.mxu0 0
      %2784 = vmatprep.subr.bf16.mxu0 0
      %2785 = vmatpush1.bf16.msra.mxu0 0
      %2786 = vmatprep.subr.bf16.mxu0 0
      %2787 = vmatpush1.bf16.msra.mxu0 0
      %2788 = vmatprep.subr.bf16.mxu0 0
      %2789 = vmatpush1.bf16.msra.mxu0 %v2769
      %2790 = vmatprep.subr.bf16.mxu0 0
      %2791 = vmatpush2.bf16.msra.mxu0 0
      %2792 = vmatprep.subr.bf16.mxu0 0
      %2793 = vmatpush2.bf16.msra.mxu0 0
      %2794 = vmatprep.subr.bf16.mxu0 0
      %2795 = vmatpush2.bf16.msra.mxu0 0
      %2796 = vmatprep.subr.bf16.mxu0 0
      %2797 = vmatpush2.bf16.msra.mxu0 0
      %2798 = vmatprep.subr.bf16.mxu0 0
      %2799 = vmatpush2.bf16.msra.mxu0 0
      %2800 = vmatprep.subr.bf16.mxu0 0
      %2801 = vmatpush2.bf16.msra.mxu0 0
      %2802 = vmatprep.subr.bf16.mxu0 0
      %2803 = vmatpush2.bf16.msra.mxu0 0
      %2804 = vmatprep.subr.bf16.mxu0 0
      %2805 = vmatpush2.bf16.msra.mxu0 0
      %2806 = vmatprep.mubr.bf16.mxu0 0
      %2807 = vmatmul.mubr.bf16.gmra.mxu0 %v2772
      %v2808 = vpop.f32.mrf.mxu0
      %v2809 = vadd.f32 0.0, %v2808
      %v2810 = vpop.f32.mrf.mxu0
      %v2811 = vpop.f32.mrf.mxu0
      %v2812 = vpop.f32.mrf.mxu0
      %2813 = vdwg.mxu0
      %v2814 = vadd.f32 %v2757, %v2809
      %v2815 = vadd.f32 %v2814, %v2438
      %v2816 = vld [vmem:[%s61] sm:$0x1]
      %v2817 = vld [vmem:[%s63] sm:$0x1]
      %v2818 = vsel %vm1097, %v2815, 0.0
      %2819 = vadd.xlane.f32.xlu0 %v2818
      %v2820 = vpop.xlane.xlu0 %2819
      %v2821 = vmul.f32 %v2820, %v1771
      %v2822 = vsub.f32 %v2815, %v2821
      %v2823 = vmul.f32 %v2822, %v2822
      %v2824 = vsel %vm1097, %v2823, 0.0
      %2825 = vadd.xlane.f32.xlu0 %v2824
      %v2826 = vpop.xlane.xlu0 %2825
      %v2827 = vmul.f32 %v2826, %v1771
      %v2828 = vadd.f32 %v2827, 1e-05
      %v2829 = vrsqrt.pop %v2828
      %v2830 = vmul.f32 %v2822, %v2829
      %v2832 = vlaneseq
      %v2833 = vshrl.u32 %v2832, 7
      %v2834 = vsub.s32 0, %v2833
      %v2835 = vrot.slane %v2816, %v2834
      %v2837 = vmul.f32 %v2830, %v2835
      %v2839 = vlaneseq
      %v2840 = vshrl.u32 %v2839, 7
      %v2841 = vsub.s32 0, %v2840
      %v2842 = vrot.slane %v2817, %v2841
      %v2844 = vadd.f32 %v2837, %v2842
      %v2845 = vmul.f32 %v2844, %v2436
      %s2846 = scalar_lea.vmem %s41, 16
      %v2847 = vld [vmem:[%s2846] sm:$0xf]
      %v2848 = vld [vmem:[%s2846 + $0x4] sm:$0xf]
      %v2849 = vld [vmem:[%s2846 + $0x8] sm:$0xf]
      %v2850 = vld [vmem:[%s2846 + $0xc] sm:$0xf]
      %v2851 = vpack.c.bf16 %v2845, %v2845
      %s2852 = scalar_lea.vmem %s43, 1
      %v2853 = vld [vmem:[%s2852] sm:$0x1]
      %v2855 = vlaneseq
      %v2856 = vshrl.u32 %v2855, 7
      %v2857 = vsub.s32 0, %v2856
      %v2858 = vrot.slane %v2853, %v2857
      %v2864 = vunpack.c.l.b16 %v2847
      %v2865 = vunpack.c.l.b16 %v2848
      %v2866 = vunpack.c.l.b16 %v2849
      %v2867 = vunpack.c.l.b16 %v2850
      %v2868 = vpack.c.b16 %v2865, %v2864
      %v2869 = vpack.c.b16 %v2867, %v2866
      %v2873 = vsel %vm1097, %v2851, 0
      %2875 = vmatprep.subr.bf16.mxu0 0
      %2876 = vmatpush1.bf16.msra.mxu0 0
      %2877 = vmatprep.subr.bf16.mxu0 0
      %2878 = vmatpush1.bf16.msra.mxu0 0
      %2879 = vmatprep.subr.bf16.mxu0 0
      %2880 = vmatpush1.bf16.msra.mxu0 0
      %2881 = vmatprep.subr.bf16.mxu0 0
      %2882 = vmatpush1.bf16.msra.mxu0 0
      %2883 = vmatprep.subr.bf16.mxu0 0
      %2884 = vmatpush1.bf16.msra.mxu0 0
      %2885 = vmatprep.subr.bf16.mxu0 0
      %2886 = vmatpush1.bf16.msra.mxu0 0
      %2887 = vmatprep.subr.bf16.mxu0 0
      %2888 = vmatpush1.bf16.msra.mxu0 %v2869
      %2889 = vmatprep.subr.bf16.mxu0 0
      %2890 = vmatpush1.bf16.msra.mxu0 %v2868
      %2891 = vmatprep.subr.bf16.mxu0 0
      %2892 = vmatpush2.bf16.msra.mxu0 0
      %2893 = vmatprep.subr.bf16.mxu0 0
      %2894 = vmatpush2.bf16.msra.mxu0 0
      %2895 = vmatprep.subr.bf16.mxu0 0
      %2896 = vmatpush2.bf16.msra.mxu0 0
      %2897 = vmatprep.subr.bf16.mxu0 0
      %2898 = vmatpush2.bf16.msra.mxu0 0
      %2899 = vmatprep.subr.bf16.mxu0 0
      %2900 = vmatpush2.bf16.msra.mxu0 0
      %2901 = vmatprep.subr.bf16.mxu0 0
      %2902 = vmatpush2.bf16.msra.mxu0 0
      %2903 = vmatprep.subr.bf16.mxu0 0
      %2904 = vmatpush2.bf16.msra.mxu0 0
      %2905 = vmatprep.subr.bf16.mxu0 0
      %2906 = vmatpush2.bf16.msra.mxu0 0
      %2907 = vmatprep.mubr.bf16.mxu0 0
      %2908 = vmatmul.mubr.bf16.gmra.mxu0 %v2873
      %v2909 = vpop.f32.mrf.mxu0
      %v2910 = vadd.f32 %v2858, %v2909
      %v2911 = vpop.f32.mrf.mxu0
      %v2912 = vpop.f32.mrf.mxu0
      %v2913 = vpop.f32.mrf.mxu0
      %2914 = vdwg.mxu0
      %v2915 = vpack.c.bf16 %v2910, %v2910
      %2917 = vrot.lane.b32.xlu0 %v2915, 96
      %v2918 = vpop.permute.xlu0 %2917
      %v2920 = vsel %vm1867, %v2915, 0
      %v2923 = vsel %vm1867, %v2918, 0
      %2925 = vmatprep.subr.bf16.mxu0 0
      %2926 = vmatpush1.bf16.xpose.msra.mxu0 0
      %2927 = vmatprep.subr.bf16.mxu0 0
      %2928 = vmatpush1.bf16.xpose.msra.mxu0 0
      %2929 = vmatprep.subr.bf16.mxu0 0
      %2930 = vmatpush1.bf16.xpose.msra.mxu0 0
      %2931 = vmatprep.subr.bf16.mxu0 0
      %2932 = vmatpush1.bf16.xpose.msra.mxu0 0
      %2933 = vmatprep.subr.bf16.mxu0 0
      %2934 = vmatpush1.bf16.xpose.msra.mxu0 0
      %2935 = vmatprep.subr.bf16.mxu0 0
      %2936 = vmatpush1.bf16.xpose.msra.mxu0 0
      %2937 = vmatprep.subr.bf16.mxu0 0
      %2938 = vmatpush1.bf16.xpose.msra.mxu0 0
      %2939 = vmatprep.subr.bf16.mxu0 0
      %2940 = vmatpush1.bf16.xpose.msra.mxu0 %v2923
      %2941 = vmatprep.subr.bf16.mxu0 0
      %2942 = vmatpush2.bf16.xpose.msra.mxu0 0
      %2943 = vmatprep.subr.bf16.mxu0 0
      %2944 = vmatpush2.bf16.xpose.msra.mxu0 0
      %2945 = vmatprep.subr.bf16.mxu0 0
      %2946 = vmatpush2.bf16.xpose.msra.mxu0 0
      %2947 = vmatprep.subr.bf16.mxu0 0
      %2948 = vmatpush2.bf16.xpose.msra.mxu0 0
      %2949 = vmatprep.subr.bf16.mxu0 0
      %2950 = vmatpush2.bf16.xpose.msra.mxu0 0
      %2951 = vmatprep.subr.bf16.mxu0 0
      %2952 = vmatpush2.bf16.xpose.msra.mxu0 0
      %2953 = vmatprep.subr.bf16.mxu0 0
      %2954 = vmatpush2.bf16.xpose.msra.mxu0 0
      %2955 = vmatprep.subr.bf16.mxu0 0
      %2956 = vmatpush2.bf16.xpose.msra.mxu0 0
      %2957 = vmatprep.mubr.bf16.mxu0 0
      %2958 = vmatmul.mubr.bf16.gmra.mxu0 %v2920
      %v2959 = vpop.f32.mrf.mxu0
      %v2960 = vadd.f32 0.0, %v2959
      %v2961 = vpop.f32.mrf.mxu0
      %v2962 = vpop.f32.mrf.mxu0
      %v2963 = vpop.f32.mrf.mxu0
      %2964 = vdwg.mxu0
      %v2965 = vmul.f32 %v2960, 0.35355338
      %v2966 = vadd.f32 %v2965, %v1919
      %v2967 = vsel %vm1867, %v2966, -inf
      %2968 = vmax.xlane.f32.xlu0 %v2967
      %v2969 = vpop.xlane.xlu0 %2968
      %v2970 = vsub.f32 %v2966, %v2969
      %v2971 = vmul.f32 %v2970, 1.442695
      %v2972 = vpow.pop %v2971
      %v2973 = vsel %vm1867, %v2972, 0.0
      %2974 = vadd.xlane.f32.xlu0 %v2973
      %v2975 = vpop.xlane.xlu0 %2974
      %v2976 = vrcp.pop %v2975
      %v2977 = vmul.f32 %v2972, %v2976
      %v2978 = vpack.c.bf16 %v2977, %v2977
      %2979 = vrot.lane.b32.xlu0 %v2915, 64
      %v2980 = vpop.permute.xlu0 %2979
      %v2982 = vsel %vm1867, %v2978, 0
      %v2985 = vsel %vm1939, %v2980, 0
      %2987 = vmatprep.subr.bf16.mxu0 0
      %2988 = vmatpush1.bf16.msra.mxu0 0
      %2989 = vmatprep.subr.bf16.mxu0 0
      %2990 = vmatpush1.bf16.msra.mxu0 0
      %2991 = vmatprep.subr.bf16.mxu0 0
      %2992 = vmatpush1.bf16.msra.mxu0 0
      %2993 = vmatprep.subr.bf16.mxu0 0
      %2994 = vmatpush1.bf16.msra.mxu0 0
      %2995 = vmatprep.subr.bf16.mxu0 0
      %2996 = vmatpush1.bf16.msra.mxu0 0
      %2997 = vmatprep.subr.bf16.mxu0 0
      %2998 = vmatpush1.bf16.msra.mxu0 0
      %2999 = vmatprep.subr.bf16.mxu0 0
      %3000 = vmatpush1.bf16.msra.mxu0 0
      %3001 = vmatprep.subr.bf16.mxu0 0
      %3002 = vmatpush1.bf16.msra.mxu0 %v2985
      %3003 = vmatprep.subr.bf16.mxu0 0
      %3004 = vmatpush2.bf16.msra.mxu0 0
      %3005 = vmatprep.subr.bf16.mxu0 0
      %3006 = vmatpush2.bf16.msra.mxu0 0
      %3007 = vmatprep.subr.bf16.mxu0 0
      %3008 = vmatpush2.bf16.msra.mxu0 0
      %3009 = vmatprep.subr.bf16.mxu0 0
      %3010 = vmatpush2.bf16.msra.mxu0 0
      %3011 = vmatprep.subr.bf16.mxu0 0
      %3012 = vmatpush2.bf16.msra.mxu0 0
      %3013 = vmatprep.subr.bf16.mxu0 0
      %3014 = vmatpush2.bf16.msra.mxu0 0
      %3015 = vmatprep.subr.bf16.mxu0 0
      %3016 = vmatpush2.bf16.msra.mxu0 0
      %3017 = vmatprep.subr.bf16.mxu0 0
      %3018 = vmatpush2.bf16.msra.mxu0 0
      %3019 = vmatprep.mubr.bf16.mxu0 0
      %3020 = vmatmul.mubr.bf16.gmra.mxu0 %v2982
      %v3021 = vpop.f32.mrf.mxu0
      %v3022 = vadd.f32 0.0, %v3021
      %v3023 = vpop.f32.mrf.mxu0
      %v3024 = vpop.f32.mrf.mxu0
      %v3025 = vpop.f32.mrf.mxu0
      %3026 = vdwg.mxu0
      %3027 = vrot.lane.b32.xlu0 %v2915, 120
      %v3028 = vpop.permute.xlu0 %3027
      %3029 = vrot.lane.b32.xlu0 %v2915, 88
      %v3030 = vpop.permute.xlu0 %3029
      %v3032 = vsel %vm1867, %v3028, 0
      %v3035 = vsel %vm1867, %v3030, 0
      %3037 = vmatprep.subr.bf16.mxu0 0
      %3038 = vmatpush1.bf16.xpose.msra.mxu0 0
      %3039 = vmatprep.subr.bf16.mxu0 0
      %3040 = vmatpush1.bf16.xpose.msra.mxu0 0
      %3041 = vmatprep.subr.bf16.mxu0 0
      %3042 = vmatpush1.bf16.xpose.msra.mxu0 0
      %3043 = vmatprep.subr.bf16.mxu0 0
      %3044 = vmatpush1.bf16.xpose.msra.mxu0 0
      %3045 = vmatprep.subr.bf16.mxu0 0
      %3046 = vmatpush1.bf16.xpose.msra.mxu0 0
      %3047 = vmatprep.subr.bf16.mxu0 0
      %3048 = vmatpush1.bf16.xpose.msra.mxu0 0
      %3049 = vmatprep.subr.bf16.mxu0 0
      %3050 = vmatpush1.bf16.xpose.msra.mxu0 0
      %3051 = vmatprep.subr.bf16.mxu0 0
      %3052 = vmatpush1.bf16.xpose.msra.mxu0 %v3035
      %3053 = vmatprep.subr.bf16.mxu0 0
      %3054 = vmatpush2.bf16.xpose.msra.mxu0 0
      %3055 = vmatprep.subr.bf16.mxu0 0
      %3056 = vmatpush2.bf16.xpose.msra.mxu0 0
      %3057 = vmatprep.subr.bf16.mxu0 0
      %3058 = vmatpush2.bf16.xpose.msra.mxu0 0
      %3059 = vmatprep.subr.bf16.mxu0 0
      %3060 = vmatpush2.bf16.xpose.msra.mxu0 0
      %3061 = vmatprep.subr.bf16.mxu0 0
      %3062 = vmatpush2.bf16.xpose.msra.mxu0 0
      %3063 = vmatprep.subr.bf16.mxu0 0
      %3064 = vmatpush2.bf16.xpose.msra.mxu0 0
      %3065 = vmatprep.subr.bf16.mxu0 0
      %3066 = vmatpush2.bf16.xpose.msra.mxu0 0
      %3067 = vmatprep.subr.bf16.mxu0 0
      %3068 = vmatpush2.bf16.xpose.msra.mxu0 0
      %3069 = vmatprep.mubr.bf16.mxu0 0
      %3070 = vmatmul.mubr.bf16.gmra.mxu0 %v3032
      %v3071 = vpop.f32.mrf.mxu0
      %v3072 = vadd.f32 0.0, %v3071
      %v3073 = vpop.f32.mrf.mxu0
      %v3074 = vpop.f32.mrf.mxu0
      %v3075 = vpop.f32.mrf.mxu0
      %3076 = vdwg.mxu0
      %v3077 = vmul.f32 %v3072, 0.35355338
      %v3078 = vadd.f32 %v3077, %v1919
      %v3079 = vsel %vm1867, %v3078, -inf
      %3080 = vmax.xlane.f32.xlu0 %v3079
      %v3081 = vpop.xlane.xlu0 %3080
      %v3082 = vsub.f32 %v3078, %v3081
      %v3083 = vmul.f32 %v3082, 1.442695
      %v3084 = vpow.pop %v3083
      %v3085 = vsel %vm1867, %v3084, 0.0
      %3086 = vadd.xlane.f32.xlu0 %v3085
      %v3087 = vpop.xlane.xlu0 %3086
      %v3088 = vrcp.pop %v3087
      %v3089 = vmul.f32 %v3084, %v3088
      %v3090 = vpack.c.bf16 %v3089, %v3089
      %3091 = vrot.lane.b32.xlu0 %v2915, 56
      %v3092 = vpop.permute.xlu0 %3091
      %v3094 = vsel %vm1867, %v3090, 0
      %v3097 = vsel %vm1939, %v3092, 0
      %3099 = vmatprep.subr.bf16.mxu0 0
      %3100 = vmatpush1.bf16.msra.mxu0 0
      %3101 = vmatprep.subr.bf16.mxu0 0
      %3102 = vmatpush1.bf16.msra.mxu0 0
      %3103 = vmatprep.subr.bf16.mxu0 0
      %3104 = vmatpush1.bf16.msra.mxu0 0
      %3105 = vmatprep.subr.bf16.mxu0 0
      %3106 = vmatpush1.bf16.msra.mxu0 0
      %3107 = vmatprep.subr.bf16.mxu0 0
      %3108 = vmatpush1.bf16.msra.mxu0 0
      %3109 = vmatprep.subr.bf16.mxu0 0
      %3110 = vmatpush1.bf16.msra.mxu0 0
      %3111 = vmatprep.subr.bf16.mxu0 0
      %3112 = vmatpush1.bf16.msra.mxu0 0
      %3113 = vmatprep.subr.bf16.mxu0 0
      %3114 = vmatpush1.bf16.msra.mxu0 %v3097
      %3115 = vmatprep.subr.bf16.mxu0 0
      %3116 = vmatpush2.bf16.msra.mxu0 0
      %3117 = vmatprep.subr.bf16.mxu0 0
      %3118 = vmatpush2.bf16.msra.mxu0 0
      %3119 = vmatprep.subr.bf16.mxu0 0
      %3120 = vmatpush2.bf16.msra.mxu0 0
      %3121 = vmatprep.subr.bf16.mxu0 0
      %3122 = vmatpush2.bf16.msra.mxu0 0
      %3123 = vmatprep.subr.bf16.mxu0 0
      %3124 = vmatpush2.bf16.msra.mxu0 0
      %3125 = vmatprep.subr.bf16.mxu0 0
      %3126 = vmatpush2.bf16.msra.mxu0 0
      %3127 = vmatprep.subr.bf16.mxu0 0
      %3128 = vmatpush2.bf16.msra.mxu0 0
      %3129 = vmatprep.subr.bf16.mxu0 0
      %3130 = vmatpush2.bf16.msra.mxu0 0
      %3131 = vmatprep.mubr.bf16.mxu0 0
      %3132 = vmatmul.mubr.bf16.gmra.mxu0 %v3094
      %v3133 = vpop.f32.mrf.mxu0
      %v3134 = vadd.f32 0.0, %v3133
      %v3135 = vpop.f32.mrf.mxu0
      %v3136 = vpop.f32.mrf.mxu0
      %v3137 = vpop.f32.mrf.mxu0
      %3138 = vdwg.mxu0
      %3139 = vrot.lane.b32.xlu0 %v2915, 112
      %v3140 = vpop.permute.xlu0 %3139
      %3141 = vrot.lane.b32.xlu0 %v2915, 80
      %v3142 = vpop.permute.xlu0 %3141
      %v3144 = vsel %vm1867, %v3140, 0
      %v3147 = vsel %vm1867, %v3142, 0
      %3149 = vmatprep.subr.bf16.mxu0 0
      %3150 = vmatpush1.bf16.xpose.msra.mxu0 0
      %3151 = vmatprep.subr.bf16.mxu0 0
      %3152 = vmatpush1.bf16.xpose.msra.mxu0 0
      %3153 = vmatprep.subr.bf16.mxu0 0
      %3154 = vmatpush1.bf16.xpose.msra.mxu0 0
      %3155 = vmatprep.subr.bf16.mxu0 0
      %3156 = vmatpush1.bf16.xpose.msra.mxu0 0
      %3157 = vmatprep.subr.bf16.mxu0 0
      %3158 = vmatpush1.bf16.xpose.msra.mxu0 0
      %3159 = vmatprep.subr.bf16.mxu0 0
      %3160 = vmatpush1.bf16.xpose.msra.mxu0 0
      %3161 = vmatprep.subr.bf16.mxu0 0
      %3162 = vmatpush1.bf16.xpose.msra.mxu0 0
      %3163 = vmatprep.subr.bf16.mxu0 0
      %3164 = vmatpush1.bf16.xpose.msra.mxu0 %v3147
      %3165 = vmatprep.subr.bf16.mxu0 0
      %3166 = vmatpush2.bf16.xpose.msra.mxu0 0
      %3167 = vmatprep.subr.bf16.mxu0 0
      %3168 = vmatpush2.bf16.xpose.msra.mxu0 0
      %3169 = vmatprep.subr.bf16.mxu0 0
      %3170 = vmatpush2.bf16.xpose.msra.mxu0 0
      %3171 = vmatprep.subr.bf16.mxu0 0
      %3172 = vmatpush2.bf16.xpose.msra.mxu0 0
      %3173 = vmatprep.subr.bf16.mxu0 0
      %3174 = vmatpush2.bf16.xpose.msra.mxu0 0
      %3175 = vmatprep.subr.bf16.mxu0 0
      %3176 = vmatpush2.bf16.xpose.msra.mxu0 0
      %3177 = vmatprep.subr.bf16.mxu0 0
      %3178 = vmatpush2.bf16.xpose.msra.mxu0 0
      %3179 = vmatprep.subr.bf16.mxu0 0
      %3180 = vmatpush2.bf16.xpose.msra.mxu0 0
      %3181 = vmatprep.mubr.bf16.mxu0 0
      %3182 = vmatmul.mubr.bf16.gmra.mxu0 %v3144
      %v3183 = vpop.f32.mrf.mxu0
      %v3184 = vadd.f32 0.0, %v3183
      %v3185 = vpop.f32.mrf.mxu0
      %v3186 = vpop.f32.mrf.mxu0
      %v3187 = vpop.f32.mrf.mxu0
      %3188 = vdwg.mxu0
      %v3189 = vmul.f32 %v3184, 0.35355338
      %v3190 = vadd.f32 %v3189, %v1919
      %v3191 = vsel %vm1867, %v3190, -inf
      %3192 = vmax.xlane.f32.xlu0 %v3191
      %v3193 = vpop.xlane.xlu0 %3192
      %v3194 = vsub.f32 %v3190, %v3193
      %v3195 = vmul.f32 %v3194, 1.442695
      %v3196 = vpow.pop %v3195
      %v3197 = vsel %vm1867, %v3196, 0.0
      %3198 = vadd.xlane.f32.xlu0 %v3197
      %v3199 = vpop.xlane.xlu0 %3198
      %v3200 = vrcp.pop %v3199
      %v3201 = vmul.f32 %v3196, %v3200
      %v3202 = vpack.c.bf16 %v3201, %v3201
      %3203 = vrot.lane.b32.xlu0 %v2915, 48
      %v3204 = vpop.permute.xlu0 %3203
      %v3206 = vsel %vm1867, %v3202, 0
      %v3209 = vsel %vm1939, %v3204, 0
      %3211 = vmatprep.subr.bf16.mxu0 0
      %3212 = vmatpush1.bf16.msra.mxu0 0
      %3213 = vmatprep.subr.bf16.mxu0 0
      %3214 = vmatpush1.bf16.msra.mxu0 0
      %3215 = vmatprep.subr.bf16.mxu0 0
      %3216 = vmatpush1.bf16.msra.mxu0 0
      %3217 = vmatprep.subr.bf16.mxu0 0
      %3218 = vmatpush1.bf16.msra.mxu0 0
      %3219 = vmatprep.subr.bf16.mxu0 0
      %3220 = vmatpush1.bf16.msra.mxu0 0
      %3221 = vmatprep.subr.bf16.mxu0 0
      %3222 = vmatpush1.bf16.msra.mxu0 0
      %3223 = vmatprep.subr.bf16.mxu0 0
      %3224 = vmatpush1.bf16.msra.mxu0 0
      %3225 = vmatprep.subr.bf16.mxu0 0
      %3226 = vmatpush1.bf16.msra.mxu0 %v3209
      %3227 = vmatprep.subr.bf16.mxu0 0
      %3228 = vmatpush2.bf16.msra.mxu0 0
      %3229 = vmatprep.subr.bf16.mxu0 0
      %3230 = vmatpush2.bf16.msra.mxu0 0
      %3231 = vmatprep.subr.bf16.mxu0 0
      %3232 = vmatpush2.bf16.msra.mxu0 0
      %3233 = vmatprep.subr.bf16.mxu0 0
      %3234 = vmatpush2.bf16.msra.mxu0 0
      %3235 = vmatprep.subr.bf16.mxu0 0
      %3236 = vmatpush2.bf16.msra.mxu0 0
      %3237 = vmatprep.subr.bf16.mxu0 0
      %3238 = vmatpush2.bf16.msra.mxu0 0
      %3239 = vmatprep.subr.bf16.mxu0 0
      %3240 = vmatpush2.bf16.msra.mxu0 0
      %3241 = vmatprep.subr.bf16.mxu0 0
      %3242 = vmatpush2.bf16.msra.mxu0 0
      %3243 = vmatprep.mubr.bf16.mxu0 0
      %3244 = vmatmul.mubr.bf16.gmra.mxu0 %v3206
      %v3245 = vpop.f32.mrf.mxu0
      %v3246 = vadd.f32 0.0, %v3245
      %v3247 = vpop.f32.mrf.mxu0
      %v3248 = vpop.f32.mrf.mxu0
      %v3249 = vpop.f32.mrf.mxu0
      %3250 = vdwg.mxu0
      %3251 = vrot.lane.b32.xlu0 %v2915, 104
      %v3252 = vpop.permute.xlu0 %3251
      %3253 = vrot.lane.b32.xlu0 %v2915, 72
      %v3254 = vpop.permute.xlu0 %3253
      %v3256 = vsel %vm1867, %v3252, 0
      %v3259 = vsel %vm1867, %v3254, 0
      %3261 = vmatprep.subr.bf16.mxu0 0
      %3262 = vmatpush1.bf16.xpose.msra.mxu0 0
      %3263 = vmatprep.subr.bf16.mxu0 0
      %3264 = vmatpush1.bf16.xpose.msra.mxu0 0
      %3265 = vmatprep.subr.bf16.mxu0 0
      %3266 = vmatpush1.bf16.xpose.msra.mxu0 0
      %3267 = vmatprep.subr.bf16.mxu0 0
      %3268 = vmatpush1.bf16.xpose.msra.mxu0 0
      %3269 = vmatprep.subr.bf16.mxu0 0
      %3270 = vmatpush1.bf16.xpose.msra.mxu0 0
      %3271 = vmatprep.subr.bf16.mxu0 0
      %3272 = vmatpush1.bf16.xpose.msra.mxu0 0
      %3273 = vmatprep.subr.bf16.mxu0 0
      %3274 = vmatpush1.bf16.xpose.msra.mxu0 0
      %3275 = vmatprep.subr.bf16.mxu0 0
      %3276 = vmatpush1.bf16.xpose.msra.mxu0 %v3259
      %3277 = vmatprep.subr.bf16.mxu0 0
      %3278 = vmatpush2.bf16.xpose.msra.mxu0 0
      %3279 = vmatprep.subr.bf16.mxu0 0
      %3280 = vmatpush2.bf16.xpose.msra.mxu0 0
      %3281 = vmatprep.subr.bf16.mxu0 0
      %3282 = vmatpush2.bf16.xpose.msra.mxu0 0
      %3283 = vmatprep.subr.bf16.mxu0 0
      %3284 = vmatpush2.bf16.xpose.msra.mxu0 0
      %3285 = vmatprep.subr.bf16.mxu0 0
      %3286 = vmatpush2.bf16.xpose.msra.mxu0 0
      %3287 = vmatprep.subr.bf16.mxu0 0
      %3288 = vmatpush2.bf16.xpose.msra.mxu0 0
      %3289 = vmatprep.subr.bf16.mxu0 0
      %3290 = vmatpush2.bf16.xpose.msra.mxu0 0
      %3291 = vmatprep.subr.bf16.mxu0 0
      %3292 = vmatpush2.bf16.xpose.msra.mxu0 0
      %3293 = vmatprep.mubr.bf16.mxu0 0
      %3294 = vmatmul.mubr.bf16.gmra.mxu0 %v3256
      %v3295 = vpop.f32.mrf.mxu0
      %v3296 = vadd.f32 0.0, %v3295
      %v3297 = vpop.f32.mrf.mxu0
      %v3298 = vpop.f32.mrf.mxu0
      %v3299 = vpop.f32.mrf.mxu0
      %3300 = vdwg.mxu0
      %v3301 = vmul.f32 %v3296, 0.35355338
      %v3302 = vadd.f32 %v3301, %v1919
      %v3303 = vsel %vm1867, %v3302, -inf
      %3304 = vmax.xlane.f32.xlu0 %v3303
      %v3305 = vpop.xlane.xlu0 %3304
      %v3306 = vsub.f32 %v3302, %v3305
      %v3307 = vmul.f32 %v3306, 1.442695
      %v3308 = vpow.pop %v3307
      %v3309 = vsel %vm1867, %v3308, 0.0
      %3310 = vadd.xlane.f32.xlu0 %v3309
      %v3311 = vpop.xlane.xlu0 %3310
      %v3312 = vrcp.pop %v3311
      %v3313 = vmul.f32 %v3308, %v3312
      %v3314 = vpack.c.bf16 %v3313, %v3313
      %3315 = vrot.lane.b32.xlu0 %v2915, 40
      %v3316 = vpop.permute.xlu0 %3315
      %v3318 = vsel %vm1867, %v3314, 0
      %v3321 = vsel %vm1939, %v3316, 0
      %3323 = vmatprep.subr.bf16.mxu0 0
      %3324 = vmatpush1.bf16.msra.mxu0 0
      %3325 = vmatprep.subr.bf16.mxu0 0
      %3326 = vmatpush1.bf16.msra.mxu0 0
      %3327 = vmatprep.subr.bf16.mxu0 0
      %3328 = vmatpush1.bf16.msra.mxu0 0
      %3329 = vmatprep.subr.bf16.mxu0 0
      %3330 = vmatpush1.bf16.msra.mxu0 0
      %3331 = vmatprep.subr.bf16.mxu0 0
      %3332 = vmatpush1.bf16.msra.mxu0 0
      %3333 = vmatprep.subr.bf16.mxu0 0
      %3334 = vmatpush1.bf16.msra.mxu0 0
      %3335 = vmatprep.subr.bf16.mxu0 0
      %3336 = vmatpush1.bf16.msra.mxu0 0
      %3337 = vmatprep.subr.bf16.mxu0 0
      %3338 = vmatpush1.bf16.msra.mxu0 %v3321
      %3339 = vmatprep.subr.bf16.mxu0 0
      %3340 = vmatpush2.bf16.msra.mxu0 0
      %3341 = vmatprep.subr.bf16.mxu0 0
      %3342 = vmatpush2.bf16.msra.mxu0 0
      %3343 = vmatprep.subr.bf16.mxu0 0
      %3344 = vmatpush2.bf16.msra.mxu0 0
      %3345 = vmatprep.subr.bf16.mxu0 0
      %3346 = vmatpush2.bf16.msra.mxu0 0
      %3347 = vmatprep.subr.bf16.mxu0 0
      %3348 = vmatpush2.bf16.msra.mxu0 0
      %3349 = vmatprep.subr.bf16.mxu0 0
      %3350 = vmatpush2.bf16.msra.mxu0 0
      %3351 = vmatprep.subr.bf16.mxu0 0
      %3352 = vmatpush2.bf16.msra.mxu0 0
      %3353 = vmatprep.subr.bf16.mxu0 0
      %3354 = vmatpush2.bf16.msra.mxu0 0
      %3355 = vmatprep.mubr.bf16.mxu0 0
      %3356 = vmatmul.mubr.bf16.gmra.mxu0 %v3318
      %v3357 = vpop.f32.mrf.mxu0
      %v3358 = vadd.f32 0.0, %v3357
      %v3359 = vpop.f32.mrf.mxu0
      %v3360 = vpop.f32.mrf.mxu0
      %v3361 = vpop.f32.mrf.mxu0
      %3362 = vdwg.mxu0
      %3364 = vrot.lane.b32.xlu0 %v3134, 8
      %v3365 = vpop.permute.xlu0 %3364
      %3368 = vrot.lane.b32.xlu0 %v3246, 16
      %v3369 = vpop.permute.xlu0 %3368
      %3372 = vrot.lane.b32.xlu0 %v3358, 24
      %v3373 = vpop.permute.xlu0 %3372
      %v3375 = vsel %vm1867, %v3022, %v3365
      %v3376 = vsel %vm2332, %v3375, %v3369
      %v3377 = vsel %vm2334, %v3376, %v3373
      %s3378 = scalar_lea.vmem %s45, 16
      %v3379 = vld [vmem:[%s3378] sm:$0xf]
      %v3380 = vld [vmem:[%s3378 + $0x4] sm:$0xf]
      %v3381 = vld [vmem:[%s3378 + $0x8] sm:$0xf]
      %v3382 = vld [vmem:[%s3378 + $0xc] sm:$0xf]
      %v3383 = vpack.c.bf16 %v3377, %v3377
      %s3384 = scalar_lea.vmem %s47, 1
      %v3385 = vld [vmem:[%s3384] sm:$0x1]
      %v3387 = vlaneseq
      %v3388 = vshrl.u32 %v3387, 7
      %v3389 = vsub.s32 0, %v3388
      %v3390 = vrot.slane %v3385, %v3389
      %v3396 = vunpack.c.l.b16 %v3379
      %v3397 = vunpack.c.l.b16 %v3380
      %v3398 = vunpack.c.l.b16 %v3381
      %v3399 = vunpack.c.l.b16 %v3382
      %v3400 = vpack.c.b16 %v3397, %v3396
      %v3401 = vpack.c.b16 %v3399, %v3398
      %v3405 = vsel %vm1097, %v3383, 0
      %3407 = vmatprep.subr.bf16.mxu0 0
      %3408 = vmatpush1.bf16.msra.mxu0 0
      %3409 = vmatprep.subr.bf16.mxu0 0
      %3410 = vmatpush1.bf16.msra.mxu0 0
      %3411 = vmatprep.subr.bf16.mxu0 0
      %3412 = vmatpush1.bf16.msra.mxu0 0
      %3413 = vmatprep.subr.bf16.mxu0 0
      %3414 = vmatpush1.bf16.msra.mxu0 0
      %3415 = vmatprep.subr.bf16.mxu0 0
      %3416 = vmatpush1.bf16.msra.mxu0 0
      %3417 = vmatprep.subr.bf16.mxu0 0
      %3418 = vmatpush1.bf16.msra.mxu0 0
      %3419 = vmatprep.subr.bf16.mxu0 0
      %3420 = vmatpush1.bf16.msra.mxu0 %v3401
      %3421 = vmatprep.subr.bf16.mxu0 0
      %3422 = vmatpush1.bf16.msra.mxu0 %v3400
      %3423 = vmatprep.subr.bf16.mxu0 0
      %3424 = vmatpush2.bf16.msra.mxu0 0
      %3425 = vmatprep.subr.bf16.mxu0 0
      %3426 = vmatpush2.bf16.msra.mxu0 0
      %3427 = vmatprep.subr.bf16.mxu0 0
      %3428 = vmatpush2.bf16.msra.mxu0 0
      %3429 = vmatprep.subr.bf16.mxu0 0
      %3430 = vmatpush2.bf16.msra.mxu0 0
      %3431 = vmatprep.subr.bf16.mxu0 0
      %3432 = vmatpush2.bf16.msra.mxu0 0
      %3433 = vmatprep.subr.bf16.mxu0 0
      %3434 = vmatpush2.bf16.msra.mxu0 0
      %3435 = vmatprep.subr.bf16.mxu0 0
      %3436 = vmatpush2.bf16.msra.mxu0 0
      %3437 = vmatprep.subr.bf16.mxu0 0
      %3438 = vmatpush2.bf16.msra.mxu0 0
      %3439 = vmatprep.mubr.bf16.mxu0 0
      %3440 = vmatmul.mubr.bf16.gmra.mxu0 %v3405
      %v3441 = vpop.f32.mrf.mxu0
      %v3442 = vadd.f32 %v3390, %v3441
      %v3443 = vpop.f32.mrf.mxu0
      %v3444 = vpop.f32.mrf.mxu0
      %v3445 = vpop.f32.mrf.mxu0
      %3446 = vdwg.mxu0
      %v3447 = vadd.f32 %v3442, %v2845
      %s3448 = scalar_lea.vmem %s49, 1
      %v3449 = vld [vmem:[%s3448] sm:$0x1]
      %s3450 = scalar_lea.vmem %s51, 1
      %v3451 = vld [vmem:[%s3450] sm:$0x1]
      %v3452 = vsel %vm1097, %v3447, 0.0
      %3453 = vadd.xlane.f32.xlu0 %v3452
      %v3454 = vpop.xlane.xlu0 %3453
      %v3455 = vmul.f32 %v3454, %v1771
      %v3456 = vsub.f32 %v3447, %v3455
      %v3457 = vmul.f32 %v3456, %v3456
      %v3458 = vsel %vm1097, %v3457, 0.0
      %3459 = vadd.xlane.f32.xlu0 %v3458
      %v3460 = vpop.xlane.xlu0 %3459
      %v3461 = vmul.f32 %v3460, %v1771
      %v3462 = vadd.f32 %v3461, 1e-05
      %v3463 = vrsqrt.pop %v3462
      %v3464 = vmul.f32 %v3456, %v3463
      %v3466 = vlaneseq
      %v3467 = vshrl.u32 %v3466, 7
      %v3468 = vsub.s32 0, %v3467
      %v3469 = vrot.slane %v3449, %v3468
      %v3471 = vmul.f32 %v3464, %v3469
      %v3473 = vlaneseq
      %v3474 = vshrl.u32 %v3473, 7
      %v3475 = vsub.s32 0, %v3474
      %v3476 = vrot.slane %v3451, %v3475
      %v3478 = vadd.f32 %v3471, %v3476
      %v3479 = vmul.f32 %v3478, %v2436
      %s3480 = scalar_lea.vmem %s55, 1
      %v3481 = vld [vmem:[%s3480] sm:$0x1]
      %v3483 = vrot.slane %v3479, 7
      %v3485 = vsel %vm1231, 0.0, %v3483
      %s3486 = scalar_lea.vmem %s53, 48
      %v3487 = vld [vmem:[%s3486] sm:$0xf]
      %v3488 = vld [vmem:[%s3486 + $0x4] sm:$0xf]
      %v3489 = vld [vmem:[%s3486 + $0x8] sm:$0xf]
      %v3490 = vld [vmem:[%s3486 + $0xc] sm:$0xf]
      %v3491 = vpack.c.bf16 %v3485, %v3485
      %v3496 = vunpack.c.l.b16 %v3487
      %v3497 = vunpack.c.l.b16 %v3488
      %v3498 = vunpack.c.l.b16 %v3489
      %v3499 = vunpack.c.l.b16 %v3490
      %v3500 = vpack.c.b16 %v3497, %v3496
      %v3501 = vpack.c.b16 %v3499, %v3498
      %v3505 = vsel %vm1097, %v3491, 0
      %3507 = vmatprep.subr.bf16.mxu0 0
      %3508 = vmatpush1.bf16.msra.mxu0 0
      %3509 = vmatprep.subr.bf16.mxu0 0
      %3510 = vmatpush1.bf16.msra.mxu0 0
      %3511 = vmatprep.subr.bf16.mxu0 0
      %3512 = vmatpush1.bf16.msra.mxu0 0
      %3513 = vmatprep.subr.bf16.mxu0 0
      %3514 = vmatpush1.bf16.msra.mxu0 0
      %3515 = vmatprep.subr.bf16.mxu0 0
      %3516 = vmatpush1.bf16.msra.mxu0 0
      %3517 = vmatprep.subr.bf16.mxu0 0
      %3518 = vmatpush1.bf16.msra.mxu0 0
      %3519 = vmatprep.subr.bf16.mxu0 0
      %3520 = vmatpush1.bf16.msra.mxu0 %v3501
      %3521 = vmatprep.subr.bf16.mxu0 0
      %3522 = vmatpush1.bf16.msra.mxu0 %v3500
      %3523 = vmatprep.subr.bf16.mxu0 0
      %3524 = vmatpush2.bf16.msra.mxu0 0
      %3525 = vmatprep.subr.bf16.mxu0 0
      %3526 = vmatpush2.bf16.msra.mxu0 0
      %3527 = vmatprep.subr.bf16.mxu0 0
      %3528 = vmatpush2.bf16.msra.mxu0 0
      %3529 = vmatprep.subr.bf16.mxu0 0
      %3530 = vmatpush2.bf16.msra.mxu0 0
      %3531 = vmatprep.subr.bf16.mxu0 0
      %3532 = vmatpush2.bf16.msra.mxu0 0
      %3533 = vmatprep.subr.bf16.mxu0 0
      %3534 = vmatpush2.bf16.msra.mxu0 0
      %3535 = vmatprep.subr.bf16.mxu0 0
      %3536 = vmatpush2.bf16.msra.mxu0 0
      %3537 = vmatprep.subr.bf16.mxu0 0
      %3538 = vmatpush2.bf16.msra.mxu0 0
      %3539 = vmatprep.mubr.bf16.mxu0 0
      %3540 = vmatmul.mubr.bf16.gmra.mxu0 %v3505
      %v3541 = vpop.f32.mrf.mxu0
      %v3542 = vadd.f32 0.0, %v3541
      %v3543 = vpop.f32.mrf.mxu0
      %v3544 = vpop.f32.mrf.mxu0
      %v3545 = vpop.f32.mrf.mxu0
      %3546 = vdwg.mxu0
      %v3548 = vlaneseq
      %v3549 = vshrl.u32 %v3548, 7
      %v3550 = vsub.s32 0, %v3549
      %v3551 = vrot.slane %v3481, %v3550
      %v3553 = vadd.f32 %v3551, %v3542
      %s3554 = scalar_lea.vmem %s53, 64
      %v3555 = vld [vmem:[%s3554] sm:$0xf]
      %v3556 = vld [vmem:[%s3554 + $0x4] sm:$0xf]
      %v3557 = vld [vmem:[%s3554 + $0x8] sm:$0xf]
      %v3558 = vld [vmem:[%s3554 + $0xc] sm:$0xf]
      %v3559 = vpack.c.bf16 %v3479, %v3479
      %v3564 = vunpack.c.l.b16 %v3555
      %v3565 = vunpack.c.l.b16 %v3556
      %v3566 = vunpack.c.l.b16 %v3557
      %v3567 = vunpack.c.l.b16 %v3558
      %v3568 = vpack.c.b16 %v3565, %v3564
      %v3569 = vpack.c.b16 %v3567, %v3566
      %v3573 = vsel %vm1097, %v3559, 0
      %3575 = vmatprep.subr.bf16.mxu0 0
      %3576 = vmatpush1.bf16.msra.mxu0 0
      %3577 = vmatprep.subr.bf16.mxu0 0
      %3578 = vmatpush1.bf16.msra.mxu0 0
      %3579 = vmatprep.subr.bf16.mxu0 0
      %3580 = vmatpush1.bf16.msra.mxu0 0
      %3581 = vmatprep.subr.bf16.mxu0 0
      %3582 = vmatpush1.bf16.msra.mxu0 0
      %3583 = vmatprep.subr.bf16.mxu0 0
      %3584 = vmatpush1.bf16.msra.mxu0 0
      %3585 = vmatprep.subr.bf16.mxu0 0
      %3586 = vmatpush1.bf16.msra.mxu0 0
      %3587 = vmatprep.subr.bf16.mxu0 0
      %3588 = vmatpush1.bf16.msra.mxu0 %v3569
      %3589 = vmatprep.subr.bf16.mxu0 0
      %3590 = vmatpush1.bf16.msra.mxu0 %v3568
      %3591 = vmatprep.subr.bf16.mxu0 0
      %3592 = vmatpush2.bf16.msra.mxu0 0
      %3593 = vmatprep.subr.bf16.mxu0 0
      %3594 = vmatpush2.bf16.msra.mxu0 0
      %3595 = vmatprep.subr.bf16.mxu0 0
      %3596 = vmatpush2.bf16.msra.mxu0 0
      %3597 = vmatprep.subr.bf16.mxu0 0
      %3598 = vmatpush2.bf16.msra.mxu0 0
      %3599 = vmatprep.subr.bf16.mxu0 0
      %3600 = vmatpush2.bf16.msra.mxu0 0
      %3601 = vmatprep.subr.bf16.mxu0 0
      %3602 = vmatpush2.bf16.msra.mxu0 0
      %3603 = vmatprep.subr.bf16.mxu0 0
      %3604 = vmatpush2.bf16.msra.mxu0 0
      %3605 = vmatprep.subr.bf16.mxu0 0
      %3606 = vmatpush2.bf16.msra.mxu0 0
      %3607 = vmatprep.mubr.bf16.mxu0 0
      %3608 = vmatmul.mubr.bf16.gmra.mxu0 %v3573
      %v3609 = vpop.f32.mrf.mxu0
      %v3610 = vadd.f32 0.0, %v3609
      %v3611 = vpop.f32.mrf.mxu0
      %v3612 = vpop.f32.mrf.mxu0
      %v3613 = vpop.f32.mrf.mxu0
      %3614 = vdwg.mxu0
      %v3615 = vadd.f32 %v3553, %v3610
      %v3616 = vrot.slane %v3479, 1
      %v3618 = vsel %vm2575, %v3616, 0.0
      %s3619 = scalar_lea.vmem %s53, 80
      %v3620 = vld [vmem:[%s3619] sm:$0xf]
      %v3621 = vld [vmem:[%s3619 + $0x4] sm:$0xf]
      %v3622 = vld [vmem:[%s3619 + $0x8] sm:$0xf]
      %v3623 = vld [vmem:[%s3619 + $0xc] sm:$0xf]
      %v3624 = vpack.c.bf16 %v3618, %v3618
      %v3629 = vunpack.c.l.b16 %v3620
      %v3630 = vunpack.c.l.b16 %v3621
      %v3631 = vunpack.c.l.b16 %v3622
      %v3632 = vunpack.c.l.b16 %v3623
      %v3633 = vpack.c.b16 %v3630, %v3629
      %v3634 = vpack.c.b16 %v3632, %v3631
      %v3638 = vsel %vm1097, %v3624, 0
      %3640 = vmatprep.subr.bf16.mxu0 0
      %3641 = vmatpush1.bf16.msra.mxu0 0
      %3642 = vmatprep.subr.bf16.mxu0 0
      %3643 = vmatpush1.bf16.msra.mxu0 0
      %3644 = vmatprep.subr.bf16.mxu0 0
      %3645 = vmatpush1.bf16.msra.mxu0 0
      %3646 = vmatprep.subr.bf16.mxu0 0
      %3647 = vmatpush1.bf16.msra.mxu0 0
      %3648 = vmatprep.subr.bf16.mxu0 0
      %3649 = vmatpush1.bf16.msra.mxu0 0
      %3650 = vmatprep.subr.bf16.mxu0 0
      %3651 = vmatpush1.bf16.msra.mxu0 0
      %3652 = vmatprep.subr.bf16.mxu0 0
      %3653 = vmatpush1.bf16.msra.mxu0 %v3634
      %3654 = vmatprep.subr.bf16.mxu0 0
      %3655 = vmatpush1.bf16.msra.mxu0 %v3633
      %3656 = vmatprep.subr.bf16.mxu0 0
      %3657 = vmatpush2.bf16.msra.mxu0 0
      %3658 = vmatprep.subr.bf16.mxu0 0
      %3659 = vmatpush2.bf16.msra.mxu0 0
      %3660 = vmatprep.subr.bf16.mxu0 0
      %3661 = vmatpush2.bf16.msra.mxu0 0
      %3662 = vmatprep.subr.bf16.mxu0 0
      %3663 = vmatpush2.bf16.msra.mxu0 0
      %3664 = vmatprep.subr.bf16.mxu0 0
      %3665 = vmatpush2.bf16.msra.mxu0 0
      %3666 = vmatprep.subr.bf16.mxu0 0
      %3667 = vmatpush2.bf16.msra.mxu0 0
      %3668 = vmatprep.subr.bf16.mxu0 0
      %3669 = vmatpush2.bf16.msra.mxu0 0
      %3670 = vmatprep.subr.bf16.mxu0 0
      %3671 = vmatpush2.bf16.msra.mxu0 0
      %3672 = vmatprep.mubr.bf16.mxu0 0
      %3673 = vmatmul.mubr.bf16.gmra.mxu0 %v3638
      %v3674 = vpop.f32.mrf.mxu0
      %v3675 = vadd.f32 0.0, %v3674
      %v3676 = vpop.f32.mrf.mxu0
      %v3677 = vpop.f32.mrf.mxu0
      %v3678 = vpop.f32.mrf.mxu0
      %3679 = vdwg.mxu0
      %v3680 = vadd.f32 %v3615, %v3675
      %v3681 = vmax.f32 %v3680, 0.0
      %s3682 = scalar_lea.vmem %s59, 1
      %v3683 = vld [vmem:[%s3682] sm:$0x1]
      %v3685 = vrot.slane %v3681, 7
      %v3687 = vsel %vm1231, 0.0, %v3685
      %s3688 = scalar_lea.vmem %s57, 24
      %v3689 = vld [vmem:[%s3688] sm:$0xf]
      %v3690 = vld [vmem:[%s3688 + $0x4] sm:$0xf]
      %v3691 = vpack.c.bf16 %v3687, %v3687
      %v3694 = vunpack.c.l.b16 %v3689
      %v3695 = vunpack.c.l.b16 %v3690
      %v3696 = vpack.c.b16 %v3695, %v3694
      %v3699 = vsel %vm2332, %v3691, 0
      %3701 = vmatprep.subr.bf16.mxu0 0
      %3702 = vmatpush1.bf16.msra.mxu0 0
      %3703 = vmatprep.subr.bf16.mxu0 0
      %3704 = vmatpush1.bf16.msra.mxu0 0
      %3705 = vmatprep.subr.bf16.mxu0 0
      %3706 = vmatpush1.bf16.msra.mxu0 0
      %3707 = vmatprep.subr.bf16.mxu0 0
      %3708 = vmatpush1.bf16.msra.mxu0 0
      %3709 = vmatprep.subr.bf16.mxu0 0
      %3710 = vmatpush1.bf16.msra.mxu0 0
      %3711 = vmatprep.subr.bf16.mxu0 0
      %3712 = vmatpush1.bf16.msra.mxu0 0
      %3713 = vmatprep.subr.bf16.mxu0 0
      %3714 = vmatpush1.bf16.msra.mxu0 0
      %3715 = vmatprep.subr.bf16.mxu0 0
      %3716 = vmatpush1.bf16.msra.mxu0 %v3696
      %3717 = vmatprep.subr.bf16.mxu0 0
      %3718 = vmatpush2.bf16.msra.mxu0 0
      %3719 = vmatprep.subr.bf16.mxu0 0
      %3720 = vmatpush2.bf16.msra.mxu0 0
      %3721 = vmatprep.subr.bf16.mxu0 0
      %3722 = vmatpush2.bf16.msra.mxu0 0
      %3723 = vmatprep.subr.bf16.mxu0 0
      %3724 = vmatpush2.bf16.msra.mxu0 0
      %3725 = vmatprep.subr.bf16.mxu0 0
      %3726 = vmatpush2.bf16.msra.mxu0 0
      %3727 = vmatprep.subr.bf16.mxu0 0
      %3728 = vmatpush2.bf16.msra.mxu0 0
      %3729 = vmatprep.subr.bf16.mxu0 0
      %3730 = vmatpush2.bf16.msra.mxu0 0
      %3731 = vmatprep.subr.bf16.mxu0 0
      %3732 = vmatpush2.bf16.msra.mxu0 0
      %3733 = vmatprep.mubr.bf16.mxu0 0
      %3734 = vmatmul.mubr.bf16.gmra.mxu0 %v3699
      %v3735 = vpop.f32.mrf.mxu0
      %v3736 = vadd.f32 0.0, %v3735
      %v3737 = vpop.f32.mrf.mxu0
      %v3738 = vpop.f32.mrf.mxu0
      %v3739 = vpop.f32.mrf.mxu0
      %3740 = vdwg.mxu0
      %v3742 = vlaneseq
      %v3743 = vshrl.u32 %v3742, 7
      %v3744 = vsub.s32 0, %v3743
      %v3745 = vrot.slane %v3683, %v3744
      %v3747 = vadd.f32 %v3745, %v3736
      %s3748 = scalar_lea.vmem %s57, 32
      %v3749 = vld [vmem:[%s3748] sm:$0xf]
      %v3750 = vld [vmem:[%s3748 + $0x4] sm:$0xf]
      %v3751 = vpack.c.bf16 %v3681, %v3681
      %v3754 = vunpack.c.l.b16 %v3749
      %v3755 = vunpack.c.l.b16 %v3750
      %v3756 = vpack.c.b16 %v3755, %v3754
      %v3759 = vsel %vm2332, %v3751, 0
      %3761 = vmatprep.subr.bf16.mxu0 0
      %3762 = vmatpush1.bf16.msra.mxu0 0
      %3763 = vmatprep.subr.bf16.mxu0 0
      %3764 = vmatpush1.bf16.msra.mxu0 0
      %3765 = vmatprep.subr.bf16.mxu0 0
      %3766 = vmatpush1.bf16.msra.mxu0 0
      %3767 = vmatprep.subr.bf16.mxu0 0
      %3768 = vmatpush1.bf16.msra.mxu0 0
      %3769 = vmatprep.subr.bf16.mxu0 0
      %3770 = vmatpush1.bf16.msra.mxu0 0
      %3771 = vmatprep.subr.bf16.mxu0 0
      %3772 = vmatpush1.bf16.msra.mxu0 0
      %3773 = vmatprep.subr.bf16.mxu0 0
      %3774 = vmatpush1.bf16.msra.mxu0 0
      %3775 = vmatprep.subr.bf16.mxu0 0
      %3776 = vmatpush1.bf16.msra.mxu0 %v3756
      %3777 = vmatprep.subr.bf16.mxu0 0
      %3778 = vmatpush2.bf16.msra.mxu0 0
      %3779 = vmatprep.subr.bf16.mxu0 0
      %3780 = vmatpush2.bf16.msra.mxu0 0
      %3781 = vmatprep.subr.bf16.mxu0 0
      %3782 = vmatpush2.bf16.msra.mxu0 0
      %3783 = vmatprep.subr.bf16.mxu0 0
      %3784 = vmatpush2.bf16.msra.mxu0 0
      %3785 = vmatprep.subr.bf16.mxu0 0
      %3786 = vmatpush2.bf16.msra.mxu0 0
      %3787 = vmatprep.subr.bf16.mxu0 0
      %3788 = vmatpush2.bf16.msra.mxu0 0
      %3789 = vmatprep.subr.bf16.mxu0 0
      %3790 = vmatpush2.bf16.msra.mxu0 0
      %3791 = vmatprep.subr.bf16.mxu0 0
      %3792 = vmatpush2.bf16.msra.mxu0 0
      %3793 = vmatprep.mubr.bf16.mxu0 0
      %3794 = vmatmul.mubr.bf16.gmra.mxu0 %v3759
      %v3795 = vpop.f32.mrf.mxu0
      %v3796 = vadd.f32 0.0, %v3795
      %v3797 = vpop.f32.mrf.mxu0
      %v3798 = vpop.f32.mrf.mxu0
      %v3799 = vpop.f32.mrf.mxu0
      %3800 = vdwg.mxu0
      %v3801 = vadd.f32 %v3747, %v3796
      %v3802 = vrot.slane %v3681, 1
      %v3804 = vsel %vm2575, %v3802, 0.0
      %s3805 = scalar_lea.vmem %s57, 40
      %v3806 = vld [vmem:[%s3805] sm:$0xf]
      %v3807 = vld [vmem:[%s3805 + $0x4] sm:$0xf]
      %v3808 = vpack.c.bf16 %v3804, %v3804
      %v3811 = vunpack.c.l.b16 %v3806
      %v3812 = vunpack.c.l.b16 %v3807
      %v3813 = vpack.c.b16 %v3812, %v3811
      %v3816 = vsel %vm2332, %v3808, 0
      %3818 = vmatprep.subr.bf16.mxu0 0
      %3819 = vmatpush1.bf16.msra.mxu0 0
      %3820 = vmatprep.subr.bf16.mxu0 0
      %3821 = vmatpush1.bf16.msra.mxu0 0
      %3822 = vmatprep.subr.bf16.mxu0 0
      %3823 = vmatpush1.bf16.msra.mxu0 0
      %3824 = vmatprep.subr.bf16.mxu0 0
      %3825 = vmatpush1.bf16.msra.mxu0 0
      %3826 = vmatprep.subr.bf16.mxu0 0
      %3827 = vmatpush1.bf16.msra.mxu0 0
      %3828 = vmatprep.subr.bf16.mxu0 0
      %3829 = vmatpush1.bf16.msra.mxu0 0
      %3830 = vmatprep.subr.bf16.mxu0 0
      %3831 = vmatpush1.bf16.msra.mxu0 0
      %3832 = vmatprep.subr.bf16.mxu0 0
      %3833 = vmatpush1.bf16.msra.mxu0 %v3813
      %3834 = vmatprep.subr.bf16.mxu0 0
      %3835 = vmatpush2.bf16.msra.mxu0 0
      %3836 = vmatprep.subr.bf16.mxu0 0
      %3837 = vmatpush2.bf16.msra.mxu0 0
      %3838 = vmatprep.subr.bf16.mxu0 0
      %3839 = vmatpush2.bf16.msra.mxu0 0
      %3840 = vmatprep.subr.bf16.mxu0 0
      %3841 = vmatpush2.bf16.msra.mxu0 0
      %3842 = vmatprep.subr.bf16.mxu0 0
      %3843 = vmatpush2.bf16.msra.mxu0 0
      %3844 = vmatprep.subr.bf16.mxu0 0
      %3845 = vmatpush2.bf16.msra.mxu0 0
      %3846 = vmatprep.subr.bf16.mxu0 0
      %3847 = vmatpush2.bf16.msra.mxu0 0
      %3848 = vmatprep.subr.bf16.mxu0 0
      %3849 = vmatpush2.bf16.msra.mxu0 0
      %3850 = vmatprep.mubr.bf16.mxu0 0
      %3851 = vmatmul.mubr.bf16.gmra.mxu0 %v3816
      %v3852 = vpop.f32.mrf.mxu0
      %v3853 = vadd.f32 0.0, %v3852
      %v3854 = vpop.f32.mrf.mxu0
      %v3855 = vpop.f32.mrf.mxu0
      %v3856 = vpop.f32.mrf.mxu0
      %3857 = vdwg.mxu0
      %v3858 = vadd.f32 %v3801, %v3853
      %v3859 = vadd.f32 %v3858, %v3479
      %s3860 = scalar_lea.vmem %s61, 1
      %v3861 = vld [vmem:[%s3860] sm:$0x1]
      %s3862 = scalar_lea.vmem %s63, 1
      %v3863 = vld [vmem:[%s3862] sm:$0x1]
      %v3864 = vsel %vm1097, %v3859, 0.0
      %3865 = vadd.xlane.f32.xlu0 %v3864
      %v3866 = vpop.xlane.xlu0 %3865
      %v3867 = vmul.f32 %v3866, %v1771
      %v3868 = vsub.f32 %v3859, %v3867
      %v3869 = vmul.f32 %v3868, %v3868
      %v3870 = vsel %vm1097, %v3869, 0.0
      %3871 = vadd.xlane.f32.xlu0 %v3870
      %v3872 = vpop.xlane.xlu0 %3871
      %v3873 = vmul.f32 %v3872, %v1771
      %v3874 = vadd.f32 %v3873, 1e-05
      %v3875 = vrsqrt.pop %v3874
      %v3876 = vmul.f32 %v3868, %v3875
      %v3878 = vlaneseq
      %v3879 = vshrl.u32 %v3878, 7
      %v3880 = vsub.s32 0, %v3879
      %v3881 = vrot.slane %v3861, %v3880
      %v3883 = vmul.f32 %v3876, %v3881
      %v3885 = vlaneseq
      %v3886 = vshrl.u32 %v3885, 7
      %v3887 = vsub.s32 0, %v3886
      %v3888 = vrot.slane %v3863, %v3887
      %v3890 = vadd.f32 %v3883, %v3888
      %v3891 = vmul.f32 %v3890, %v2436
      %v3892 = vld [vmem:[%s65] sm:$0xf]
      %v3893 = vld [vmem:[%s65 + $0x4] sm:$0xf]
      %v3894 = vld [vmem:[%s65 + $0x8] sm:$0xf]
      %v3895 = vld [vmem:[%s65 + $0xc] sm:$0xf]
      %v3896 = vpack.c.bf16 %v3891, %v3891
      %v3897 = vld [vmem:[%s67] sm:$0x1]
      %v3899 = vlaneseq
      %v3900 = vshrl.u32 %v3899, 7
      %v3901 = vsub.s32 0, %v3900
      %v3902 = vrot.slane %v3897, %v3901
      %v3908 = vunpack.c.l.b16 %v3892
      %v3909 = vunpack.c.l.b16 %v3893
      %v3910 = vunpack.c.l.b16 %v3894
      %v3911 = vunpack.c.l.b16 %v3895
      %v3912 = vpack.c.b16 %v3909, %v3908
      %v3913 = vpack.c.b16 %v3911, %v3910
      %v3917 = vsel %vm1097, %v3896, 0
      %3919 = vmatprep.subr.bf16.mxu0 0
      %3920 = vmatpush1.bf16.msra.mxu0 0
      %3921 = vmatprep.subr.bf16.mxu0 0
      %3922 = vmatpush1.bf16.msra.mxu0 0
      %3923 = vmatprep.subr.bf16.mxu0 0
      %3924 = vmatpush1.bf16.msra.mxu0 0
      %3925 = vmatprep.subr.bf16.mxu0 0
      %3926 = vmatpush1.bf16.msra.mxu0 0
      %3927 = vmatprep.subr.bf16.mxu0 0
      %3928 = vmatpush1.bf16.msra.mxu0 0
      %3929 = vmatprep.subr.bf16.mxu0 0
      %3930 = vmatpush1.bf16.msra.mxu0 0
      %3931 = vmatprep.subr.bf16.mxu0 0
      %3932 = vmatpush1.bf16.msra.mxu0 %v3913
      %3933 = vmatprep.subr.bf16.mxu0 0
      %3934 = vmatpush1.bf16.msra.mxu0 %v3912
      %3935 = vmatprep.subr.bf16.mxu0 0
      %3936 = vmatpush2.bf16.msra.mxu0 0
      %3937 = vmatprep.subr.bf16.mxu0 0
      %3938 = vmatpush2.bf16.msra.mxu0 0
      %3939 = vmatprep.subr.bf16.mxu0 0
      %3940 = vmatpush2.bf16.msra.mxu0 0
      %3941 = vmatprep.subr.bf16.mxu0 0
      %3942 = vmatpush2.bf16.msra.mxu0 0
      %3943 = vmatprep.subr.bf16.mxu0 0
      %3944 = vmatpush2.bf16.msra.mxu0 0
      %3945 = vmatprep.subr.bf16.mxu0 0
      %3946 = vmatpush2.bf16.msra.mxu0 0
      %3947 = vmatprep.subr.bf16.mxu0 0
      %3948 = vmatpush2.bf16.msra.mxu0 0
      %3949 = vmatprep.subr.bf16.mxu0 0
      %3950 = vmatpush2.bf16.msra.mxu0 0
      %3951 = vmatprep.mubr.bf16.mxu0 0
      %3952 = vmatmul.mubr.bf16.gmra.mxu0 %v3917
      %v3953 = vpop.f32.mrf.mxu0
      %v3954 = vadd.f32 %v3902, %v3953
      %v3955 = vpop.f32.mrf.mxu0
      %v3956 = vpop.f32.mrf.mxu0
      %v3957 = vpop.f32.mrf.mxu0
      %3958 = vdwg.mxu0
      %vm3959 = vcmask 31744
      %3960 = vst.msk [vmem:[%s1068] sm:$0xff] %vm3959, %v3954
      %p3961 = scmp.lt.s32.totalorder %s80, 1
      %s3962 = scalar_select %p3961, %s80, 1
      %s3963 = smul.addr %s3962, 8
      %s3964 = scalar_lea.vmem %s69, %s3963
      // Predicated region
      $region157: #{_lambda_.1} parent=155 // pred_check
        %p3965 = pneg %p827
      $region158: #{_lambda_.1} parent=155 // pred_check_branch
        %3967 = sbr.rel (%p3965) target = $region160
      $region159: #{_lambda_.1} parent=155 // pred_region
        _
      $region160: #{_lambda_.1} parent=155 // pred_fallthru
        _
    $region156: #{_lambda_.1} parent=5 // pred_fallthru
      _
    %p3968 = scmp.le.s32.totalorder 2, %s75
    // Predicated region
    $region161: #{_lambda_.1} parent=5 // pred_check
      %p3969 = pneg %p3968
    $region162: #{_lambda_.1} parent=5 // pred_check_branch
      %3971 = sbr.rel (%p3969) target = $region164
    $region163: #{_lambda_.1} parent=5 // pred_region
      %s3972 = ssub.s32 %s75, 2
      // Predicated region
      $region165: #{_lambda_.1} parent=163 // pred_check
        %p3973 = pneg %p833
      $region166: #{_lambda_.1} parent=163 // pred_check_branch
        %3975 = sbr.rel (%p3973) target = $region168
      $region167: #{_lambda_.1} parent=163 // pred_region
        %p3976 = scmp.lt.s32.totalorder %s81, 1
        %s3977 = scalar_select %p3976, %s81, 1
        %s3978 = smul.addr %s3977, 8
        %s3979 = scalar_lea.vmem %s69, %s3978
      $region168: #{_lambda_.1} parent=163 // pred_fallthru
        _
    $region164: #{_lambda_.1} parent=5 // pred_fallthru
      _
  $region6: #{_lambda_.1} parent=0 // loop_footer
    %s79 = sadd.s32 1, %s75
  $region7: #{_lambda_.1} parent=0 // loop_footer_branch
    %74 = sbr.rel target = $region3
  $region8: #{_lambda_.1} parent=0 // loop_exit
    _

</llo_original>
